<compile_context>
chip_gen: v7x
topology: tpu7x:2x2x1
jax: 0.10.0
libtpu: 0.0.40
codegen_flags: <defaults>
</compile_context>

<pallas_src>
import functools

import numpy as np
import jax
import jax.numpy as jnp
from jax.experimental import pallas as pl
from jax.experimental.pallas import tpu as pltpu


def _round_up(x, m):
    return ((x + m - 1) // m) * m


# ----------------------------------------------------------------------------
# Fully fused kernel: conv3x3(pad=1)+bias+ReLU+masked-GAP for both modalities,
# per-modality projection, masked fusion and classifier — one grid step.
# ----------------------------------------------------------------------------
def _madpe_fwd_kernel(rad_ref, his_ref, mask_ref, convw_ref, convb_ref,
                      gmask_ref, projw_ref, projb_ref, clswr_ref, clswh_ref,
                      clsb_ref, o_ref, acc_ref, *, n_dot, wp):
    # rad_ref/his_ref: (Cin, P)          bf16  padded image, channel-major,
    #                                          batch folded into the lane axis
    # mask_ref:        (2, B)            f32   modality-present flags
    # convw_ref:       (2, 9, Cout, Cin) bf16  conv taps, t = ky*3 + kx
    # convb_ref:       (2, Cout, 1)      f32
    # gmask_ref:       (n_dot, B)        f32   block-diag masked-mean weights
    # projw_ref:       (2, D, Cout)      bf16
    # projb_ref:       (2, D, 1)         f32
    # clswr/clswh_ref: (K, D)            bf16  classifier weights per modality
    # clsb_ref:        (K, 1)            f32
    # o_ref:           (K, B)            f32   logits (transposed)
    # acc_ref:         (Cout, n_dot)     f32   conv accumulator scratch
    masks = mask_ref[...]                                        # (2, B)

    def modality_embedding(x_ref, m):
        x = x_ref[...]                                           # (Cin, P) bf16
        # conv3x3 as 9 shifted accumulating MXU dots into a VMEM f32 scratch;
        # no im2col expansion and no feature-map HBM writeback.
        for t in range(9):                                       # static unroll
            s = (t // 3) * wp + (t % 3)
            tap = jnp.dot(convw_ref[m, t], x[:, s:s + n_dot],
                          preferred_element_type=jnp.float32)    # (Cout, n_dot)
            if t == 0:
                acc_ref[...] = tap
            else:
                acc_ref[...] += tap
        y = jnp.maximum(acc_ref[...] + convb_ref[m], 0.0)        # (Cout, n_dot)
        # Masked GAP as one f32 MXU dot: gmask zeroes pad / out-of-window /
        # cross-image columns and folds in 1/(H*W).
        g = jnp.dot(y, gmask_ref[...],
                    preferred_element_type=jnp.float32)          # (Cout, B)
        # Per-modality projection + ReLU, then zero missing modalities.
        e = jnp.dot(projw_ref[m], g.astype(jnp.bfloat16),
                    preferred_element_type=jnp.float32) + projb_ref[m]
        return jnp.maximum(e, 0.0) * masks[m:m + 1, :]           # (D, B)

    e_rad = modality_embedding(rad_ref, 0)
    e_his = modality_embedding(his_ref, 1)

    # Fused classifier: two (K, D) dots summed (no concat / relayout).
    logits = (jnp.dot(clswr_ref[...], e_rad.astype(jnp.bfloat16),
                      preferred_element_type=jnp.float32)
              + jnp.dot(clswh_ref[...], e_his.astype(jnp.bfloat16),
                        preferred_element_type=jnp.float32)
              + clsb_ref[...])
    o_ref[...] = logits.astype(o_ref.dtype)


def madpe_forward_fused(rad_flat, his_flat, masks, conv_w, conv_b, gmask,
                        proj_w, proj_b, cls_w_rad, cls_w_his, cls_b,
                        *, wp, n_dot):
    cin, p_cols = rad_flat.shape
    n_mod, _, cout, _ = conv_w.shape
    d = proj_w.shape[1]
    k = cls_w_rad.shape[0]
    n_batch = masks.shape[1]

    kernel = functools.partial(_madpe_fwd_kernel, n_dot=n_dot, wp=wp)

    flops = 2 * n_mod * (9 * cout * cin * n_dot      # conv
                         + cout * n_dot * n_batch    # masked GAP
                         + d * cout * n_batch        # projection
                         + k * d * n_batch)          # classifier
    bytes_accessed = (2 * rad_flat.size * 2 + conv_w.size * 2 + proj_w.size * 2
                      + 2 * cls_w_rad.size * 2
                      + (conv_b.size + proj_b.size + cls_b.size + masks.size
                         + gmask.size + k * n_batch) * 4)

    return pl.pallas_call(
        kernel,
        out_shape=jax.ShapeDtypeStruct((k, n_batch), jnp.float32),
        grid=(1,),
        in_specs=[
            pl.BlockSpec((cin, p_cols), lambda i: (0, 0)),
            pl.BlockSpec((cin, p_cols), lambda i: (0, 0)),
            pl.BlockSpec((n_mod, n_batch), lambda i: (0, 0)),
            pl.BlockSpec((n_mod, 9, cout, cin), lambda i: (0, 0, 0, 0)),
            pl.BlockSpec((n_mod, cout, 1), lambda i: (0, 0, 0)),
            pl.BlockSpec((n_dot, n_batch), lambda i: (0, 0)),
            pl.BlockSpec((n_mod, d, cout), lambda i: (0, 0, 0)),
            pl.BlockSpec((n_mod, d, 1), lambda i: (0, 0, 0)),
            pl.BlockSpec((k, d), lambda i: (0, 0)),
            pl.BlockSpec((k, d), lambda i: (0, 0)),
            pl.BlockSpec((k, 1), lambda i: (0, 0)),
        ],
        out_specs=pl.BlockSpec((k, n_batch), lambda i: (0, 0)),
        scratch_shapes=[pltpu.VMEM((cout, n_dot), jnp.float32)],
        compiler_params=pltpu.CompilerParams(
            dimension_semantics=("arbitrary",)),
        cost_estimate=pl.CostEstimate(flops=flops, transcendentals=0,
                                      bytes_accessed=bytes_accessed),
    )(rad_flat, his_flat, masks, conv_w, conv_b, gmask,
      proj_w, proj_b, cls_w_rad, cls_w_his, cls_b)


# ----------------------------------------------------------------------------
# MADPENet (JAX version)
# ----------------------------------------------------------------------------
class MADPENetJAX:
    def __init__(self, key, cin=4, cmid=8, hidden=32, num_classes=3):
        ks = jax.random.split(key, 8)
        s = 0.1
        self.backbone_layers = ["layer1"]
        self.cin, self.cmid, self.hidden, self.num_classes = cin, cmid, hidden, num_classes

        # "Natural" (PyTorch-layout) parameters, kept f32 for the reference path.
        self.params = {
            "rad_conv_w":   s * jax.random.normal(ks[0], (3, 3, cin, cmid), jnp.float32),
            "rad_conv_b":   s * jax.random.normal(ks[1], (cmid,), jnp.float32),
            "histo_conv_w": s * jax.random.normal(ks[2], (3, 3, cin, cmid), jnp.float32),
            "histo_conv_b": s * jax.random.normal(ks[3], (cmid,), jnp.float32),
            "w_rad":   s * jax.random.normal(ks[4], (cmid, hidden), jnp.float32),
            "b_rad":   jnp.zeros((hidden,), jnp.float32),
            "w_histo": s * jax.random.normal(ks[5], (cmid, hidden), jnp.float32),
            "b_histo": jnp.zeros((hidden,), jnp.float32),
            "w_cls_rad":   s * jax.random.normal(ks[6], (hidden, num_classes), jnp.float32),
            "w_cls_histo": s * jax.random.normal(ks[7], (hidden, num_classes), jnp.float32),
            "b_cls": jnp.zeros((num_classes,), jnp.float32),
        }
        p = self.params

        # Kernel-layout parameters (prepared once host-side): stacked per
        # modality, channel-major, MXU operands pre-cast to bf16.
        self.conv_w = jnp.stack(
            [jnp.transpose(p["rad_conv_w"], (0, 1, 3, 2)).reshape(9, cmid, cin),
             jnp.transpose(p["histo_conv_w"], (0, 1, 3, 2)).reshape(9, cmid, cin)],
            axis=0).astype(jnp.bfloat16)                               # (2, 9, Cout, Cin)
        self.conv_b = jnp.stack([p["rad_conv_b"], p["histo_conv_b"]],
                                axis=0).reshape(2, cmid, 1)            # (2, Cout, 1)
        self.proj_w = jnp.stack([p["w_rad"].T, p["w_histo"].T],
                                axis=0).astype(jnp.bfloat16)           # (2, D, Cout)
        self.proj_b = jnp.stack([p["b_rad"], p["b_histo"]],
                                axis=0).reshape(2, hidden, 1)          # (2, D, 1)
        self.cls_w_rad = p["w_cls_rad"].T.astype(jnp.bfloat16)         # (K, D)
        self.cls_w_his = p["w_cls_histo"].T.astype(jnp.bfloat16)       # (K, D)
        self.cls_b = p["b_cls"].reshape(num_classes, 1)                # (K, 1)

    def forward(self, rad_vols, histo_vols, modality_flag,
                output_layers=("classification",)):
        B, cin, H, W = rad_vols.shape
        Hp, Wp = H + 2, W + 2
        n_dot = B * Hp * Wp                       # conv matmul N (batch folded in)
        shift_max = 2 * Wp + 2                    # largest tap shift
        p_cols = _round_up(n_dot + shift_max, 128)

        def prep(x):
            # bf16 cast FIRST (halves copy/DMA bytes), channel-major, zero-pad
            # the spatial border, fold batch into the lane axis, lane-pad so
            # every shifted conv slice stays in bounds.
            xc = jnp.transpose(x.astype(jnp.bfloat16), (1, 0, 2, 3))   # (Cin,B,H,W)
            xp = jnp.pad(xc, ((0, 0), (0, 0), (1, 1), (1, 1)))         # (Cin,B,Hp,Wp)
            flat = xp.reshape(cin, n_dot)
            return jnp.pad(flat, ((0, 0), (0, p_cols - n_dot)))        # (Cin, P)

        rad_flat = prep(rad_vols)
        his_flat = prep(histo_vols)

        # Masked-mean weights: block-diagonal (n_dot, B); selects the H*W valid
        # window-base positions inside each image's Hp*Wp slab, scales by
        # 1/(H*W), zero on padded rows/cols and across image boundaries.
        pos = np.arange(Hp * Wp)
        valid = ((pos // Wp) < H) & ((pos % Wp) < W)
        gm = np.zeros((B, Hp * Wp, B), np.float32)
        for b in range(B):
            gm[b, valid, b] = 1.0 / (H * W)
        gmask = jnp.asarray(gm.reshape(n_dot, B))

        masks = jnp.transpose(modality_flag.astype(jnp.float32))       # (2, B)

        logits_t = madpe_forward_fused(
            rad_flat, his_flat, masks, self.conv_w, self.conv_b, gmask,
            self.proj_w, self.proj_b, self.cls_w_rad, self.cls_w_his, self.cls_b,
            wp=Wp, n_dot=n_dot)                                        # (K, B)
        return {"classification": jnp.transpose(logits_t)}             # (B, K)


# ----------------------------------------------------------------------------
# Pure-JAX reference (f32) for a sanity check of the fused Pallas path.
# ----------------------------------------------------------------------------
def _reference_forward(params, rad_vols, histo_vols, modality_flag):
    def conv_relu_gap_ref(x, w, b):
        y = jax.lax.conv_general_dilated(
            x, jnp.transpose(w, (3, 2, 0, 1)), window_strides=(1, 1),
            padding=((1, 1), (1, 1)),
            dimension_numbers=("NCHW", "OIHW", "NCHW"))
        y = jnp.maximum(y + b.reshape(1, -1, 1, 1), 0.0)
        return jnp.mean(y, axis=(2, 3))                                # (B, Cout)

    rg = conv_relu_gap_ref(rad_vols, params["rad_conv_w"], params["rad_conv_b"])
    hg = conv_relu_gap_ref(histo_vols, params["histo_conv_w"], params["histo_conv_b"])
    re = jnp.maximum(rg @ params["w_rad"] + params["b_rad"], 0.0) * modality_flag[:, 0:1]
    he = jnp.maximum(hg @ params["w_histo"] + params["b_histo"], 0.0) * modality_flag[:, 1:2]
    return re @ params["w_cls_rad"] + he @ params["w_cls_histo"] + params["b_cls"]


# ----------------------------------------------------------------------------
# Main
# ----------------------------------------------------------------------------
if __name__ == "__main__":
    key = jax.random.PRNGKey(0)
    k_model, k_rad, k_histo = jax.random.split(key, 3)

    B, C, H, W = 2, 4, 16, 16
    rad_vols = jax.random.normal(k_rad, (B, C, H, W), jnp.float32)      # NCHW
    histo_vols = jax.random.normal(k_histo, (B, C, H, W), jnp.float32)  # NCHW
    # sample 0 has both modalities; sample 1 has rad only
    modality_flag = jnp.array([[1.0, 1.0], [1.0, 0.0]], jnp.float32)

    model = MADPENetJAX(k_model, cin=C, cmid=8, hidden=32, num_classes=3)

    # jit the wrapper so the cast/transpose/pad prep fuses into one XLA pass.
    fwd = jax.jit(lambda r, h, m: model.forward(r, h, m)["classification"])
    logits = jax.block_until_ready(fwd(rad_vols, histo_vols, modality_flag))
    assert logits.shape == (B, 3)

    ref = jax.block_until_ready(
        _reference_forward(model.params, rad_vols, histo_vols, modality_flag))
    np.testing.assert_allclose(np.asarray(logits), np.asarray(ref), atol=1e-2, rtol=0)

    print("KERNEL_OK")
</pallas_src>

<mosaic_0001>
module attributes {stable_mosaic.version = 11 : i64} {
  func.func @_madpe_fwd_kernel(%arg0: i32, %arg1: memref<4x768xbf16, #tpu.memory_space<vmem>>, %arg2: memref<4x768xbf16, #tpu.memory_space<vmem>>, %arg3: memref<2x2xf32, #tpu.memory_space<vmem>>, %arg4: memref<2x9x8x4xbf16, #tpu.memory_space<vmem>>, %arg5: memref<2x8x1xf32, #tpu.memory_space<vmem>>, %arg6: memref<648x2xf32, #tpu.memory_space<vmem>>, %arg7: memref<2x32x8xbf16, #tpu.memory_space<vmem>>, %arg8: memref<2x32x1xf32, #tpu.memory_space<vmem>>, %arg9: memref<3x32xbf16, #tpu.memory_space<vmem>>, %arg10: memref<3x32xbf16, #tpu.memory_space<vmem>>, %arg11: memref<3x1xf32, #tpu.memory_space<vmem>>, %arg12: memref<3x2xf32, #tpu.memory_space<vmem>>, %arg13: memref<8x648xf32, #tpu.memory_space<vmem>>) attributes {dimension_semantics = [#tpu.dimension_semantics<arbitrary>], iteration_bounds = array<i64: 1>, scalar_prefetch = 0 : i64, scratch_operands = 1 : i64, tpu.core_type = #tpu.core_type<tc>, window_params = [{pipeline_mode = #tpu.pipeline_mode<synchronous>, transform_indices = @transform_0, window_bounds = array<i64: 4, 768>}, {pipeline_mode = #tpu.pipeline_mode<synchronous>, transform_indices = @transform_1, window_bounds = array<i64: 4, 768>}, {pipeline_mode = #tpu.pipeline_mode<synchronous>, transform_indices = @transform_2, window_bounds = array<i64: 2, 2>}, {pipeline_mode = #tpu.pipeline_mode<synchronous>, transform_indices = @transform_3, window_bounds = array<i64: 2, 9, 8, 4>}, {pipeline_mode = #tpu.pipeline_mode<synchronous>, transform_indices = @transform_4, window_bounds = array<i64: 2, 8, 1>}, {pipeline_mode = #tpu.pipeline_mode<synchronous>, transform_indices = @transform_5, window_bounds = array<i64: 648, 2>}, {pipeline_mode = #tpu.pipeline_mode<synchronous>, transform_indices = @transform_6, window_bounds = array<i64: 2, 32, 8>}, {pipeline_mode = #tpu.pipeline_mode<synchronous>, transform_indices = @transform_7, window_bounds = array<i64: 2, 32, 1>}, {pipeline_mode = #tpu.pipeline_mode<synchronous>, transform_indices = @transform_8, window_bounds = array<i64: 3, 32>}, {pipeline_mode = #tpu.pipeline_mode<synchronous>, transform_indices = @transform_9, window_bounds = array<i64: 3, 32>}, {pipeline_mode = #tpu.pipeline_mode<synchronous>, transform_indices = @transform_10, window_bounds = array<i64: 3, 1>}, {pipeline_mode = #tpu.pipeline_mode<synchronous>, transform_indices = @transform_11, window_bounds = array<i64: 3, 2>}]} {
    %c0 = arith.constant 0 : index
    %c0_0 = arith.constant 0 : index
    %0 = vector.load %arg3[%c0, %c0_0] : memref<2x2xf32, #tpu.memory_space<vmem>>, vector<2x2xf32>
    %c0_1 = arith.constant 0 : index
    %c0_2 = arith.constant 0 : index
    %1 = vector.load %arg1[%c0_1, %c0_2] : memref<4x768xbf16, #tpu.memory_space<vmem>>, vector<4x768xbf16>
    %c0_3 = arith.constant 0 : index
    %c0_4 = arith.constant 0 : index
    %c0_5 = arith.constant 0 : index
    %c0_6 = arith.constant 0 : index
    %2 = vector.load %arg4[%c0_3, %c0_4, %c0_5, %c0_6] : memref<2x9x8x4xbf16, #tpu.memory_space<vmem>>, vector<1x1x8x4xbf16>
    %3 = vector.shape_cast %2 : vector<1x1x8x4xbf16> to vector<8x4xbf16>
    %4 = vector.extract_strided_slice %1 {offsets = [0, 0], sizes = [4, 648], strides = [1, 1]} : vector<4x768xbf16> to vector<4x648xbf16>
    %cst = arith.constant dense<0.000000e+00> : vector<8x648xf32>
    %5 = tpu.matmul %3, %4, %cst {dimension_numbers = #tpu.dot_dimension_numbers<[1], [0], [0], [1], [0, 0, 1, 1], [], []>} : vector<8x4xbf16>, vector<4x648xbf16>, vector<8x648xf32> -> vector<8x648xf32>
    %c0_7 = arith.constant 0 : index
    %c0_8 = arith.constant 0 : index
    %6 = vector.load %arg13[%c0_7, %c0_8] : memref<8x648xf32, #tpu.memory_space<vmem>>, vector<8x648xf32>
    tpu.vector_store %arg13[%c0_7, %c0_8], %5 {strides = array<i32>} : memref<8x648xf32, #tpu.memory_space<vmem>>, vector<8x648xf32>,
    %c0_9 = arith.constant 0 : index
    %c1 = arith.constant 1 : index
    %c0_10 = arith.constant 0 : index
    %c0_11 = arith.constant 0 : index
    %7 = vector.load %arg4[%c0_9, %c1, %c0_10, %c0_11] : memref<2x9x8x4xbf16, #tpu.memory_space<vmem>>, vector<1x1x8x4xbf16>
    %8 = vector.shape_cast %7 : vector<1x1x8x4xbf16> to vector<8x4xbf16>
    %9 = vector.extract_strided_slice %1 {offsets = [0, 1], sizes = [4, 648], strides = [1, 1]} : vector<4x768xbf16> to vector<4x648xbf16>
    %cst_12 = arith.constant dense<0.000000e+00> : vector<8x648xf32>
    %10 = tpu.matmul %8, %9, %cst_12 {dimension_numbers = #tpu.dot_dimension_numbers<[1], [0], [0], [1], [0, 0, 1, 1], [], []>} : vector<8x4xbf16>, vector<4x648xbf16>, vector<8x648xf32> -> vector<8x648xf32>
    %c0_13 = arith.constant 0 : index
    %c0_14 = arith.constant 0 : index
    %11 = vector.load %arg13[%c0_13, %c0_14] : memref<8x648xf32, #tpu.memory_space<vmem>>, vector<8x648xf32>
    %12 = arith.addf %11, %10 : vector<8x648xf32>
    %c0_15 = arith.constant 0 : index
    %c0_16 = arith.constant 0 : index
    %13 = vector.load %arg13[%c0_15, %c0_16] : memref<8x648xf32, #tpu.memory_space<vmem>>, vector<8x648xf32>
    tpu.vector_store %arg13[%c0_15, %c0_16], %12 {strides = array<i32>} : memref<8x648xf32, #tpu.memory_space<vmem>>, vector<8x648xf32>,
    %c0_17 = arith.constant 0 : index
    %c2 = arith.constant 2 : index
    %c0_18 = arith.constant 0 : index
    %c0_19 = arith.constant 0 : index
    %14 = vector.load %arg4[%c0_17, %c2, %c0_18, %c0_19] : memref<2x9x8x4xbf16, #tpu.memory_space<vmem>>, vector<1x1x8x4xbf16>
    %15 = vector.shape_cast %14 : vector<1x1x8x4xbf16> to vector<8x4xbf16>
    %16 = vector.extract_strided_slice %1 {offsets = [0, 2], sizes = [4, 648], strides = [1, 1]} : vector<4x768xbf16> to vector<4x648xbf16>
    %cst_20 = arith.constant dense<0.000000e+00> : vector<8x648xf32>
    %17 = tpu.matmul %15, %16, %cst_20 {dimension_numbers = #tpu.dot_dimension_numbers<[1], [0], [0], [1], [0, 0, 1, 1], [], []>} : vector<8x4xbf16>, vector<4x648xbf16>, vector<8x648xf32> -> vector<8x648xf32>
    %c0_21 = arith.constant 0 : index
    %c0_22 = arith.constant 0 : index
    %18 = vector.load %arg13[%c0_21, %c0_22] : memref<8x648xf32, #tpu.memory_space<vmem>>, vector<8x648xf32>
    %19 = arith.addf %18, %17 : vector<8x648xf32>
    %c0_23 = arith.constant 0 : index
    %c0_24 = arith.constant 0 : index
    %20 = vector.load %arg13[%c0_23, %c0_24] : memref<8x648xf32, #tpu.memory_space<vmem>>, vector<8x648xf32>
    tpu.vector_store %arg13[%c0_23, %c0_24], %19 {strides = array<i32>} : memref<8x648xf32, #tpu.memory_space<vmem>>, vector<8x648xf32>,
    %c0_25 = arith.constant 0 : index
    %c3 = arith.constant 3 : index
    %c0_26 = arith.constant 0 : index
    %c0_27 = arith.constant 0 : index
    %21 = vector.load %arg4[%c0_25, %c3, %c0_26, %c0_27] : memref<2x9x8x4xbf16, #tpu.memory_space<vmem>>, vector<1x1x8x4xbf16>
    %22 = vector.shape_cast %21 : vector<1x1x8x4xbf16> to vector<8x4xbf16>
    %23 = vector.extract_strided_slice %1 {offsets = [0, 18], sizes = [4, 648], strides = [1, 1]} : vector<4x768xbf16> to vector<4x648xbf16>
    %cst_28 = arith.constant dense<0.000000e+00> : vector<8x648xf32>
    %24 = tpu.matmul %22, %23, %cst_28 {dimension_numbers = #tpu.dot_dimension_numbers<[1], [0], [0], [1], [0, 0, 1, 1], [], []>} : vector<8x4xbf16>, vector<4x648xbf16>, vector<8x648xf32> -> vector<8x648xf32>
    %c0_29 = arith.constant 0 : index
    %c0_30 = arith.constant 0 : index
    %25 = vector.load %arg13[%c0_29, %c0_30] : memref<8x648xf32, #tpu.memory_space<vmem>>, vector<8x648xf32>
    %26 = arith.addf %25, %24 : vector<8x648xf32>
    %c0_31 = arith.constant 0 : index
    %c0_32 = arith.constant 0 : index
    %27 = vector.load %arg13[%c0_31, %c0_32] : memref<8x648xf32, #tpu.memory_space<vmem>>, vector<8x648xf32>
    tpu.vector_store %arg13[%c0_31, %c0_32], %26 {strides = array<i32>} : memref<8x648xf32, #tpu.memory_space<vmem>>, vector<8x648xf32>,
    %c0_33 = arith.constant 0 : index
    %c4 = arith.constant 4 : index
    %c0_34 = arith.constant 0 : index
    %c0_35 = arith.constant 0 : index
    %28 = vector.load %arg4[%c0_33, %c4, %c0_34, %c0_35] : memref<2x9x8x4xbf16, #tpu.memory_space<vmem>>, vector<1x1x8x4xbf16>
    %29 = vector.shape_cast %28 : vector<1x1x8x4xbf16> to vector<8x4xbf16>
    %30 = vector.extract_strided_slice %1 {offsets = [0, 19], sizes = [4, 648], strides = [1, 1]} : vector<4x768xbf16> to vector<4x648xbf16>
    %cst_36 = arith.constant dense<0.000000e+00> : vector<8x648xf32>
    %31 = tpu.matmul %29, %30, %cst_36 {dimension_numbers = #tpu.dot_dimension_numbers<[1], [0], [0], [1], [0, 0, 1, 1], [], []>} : vector<8x4xbf16>, vector<4x648xbf16>, vector<8x648xf32> -> vector<8x648xf32>
    %c0_37 = arith.constant 0 : index
    %c0_38 = arith.constant 0 : index
    %32 = vector.load %arg13[%c0_37, %c0_38] : memref<8x648xf32, #tpu.memory_space<vmem>>, vector<8x648xf32>
    %33 = arith.addf %32, %31 : vector<8x648xf32>
    %c0_39 = arith.constant 0 : index
    %c0_40 = arith.constant 0 : index
    %34 = vector.load %arg13[%c0_39, %c0_40] : memref<8x648xf32, #tpu.memory_space<vmem>>, vector<8x648xf32>
    tpu.vector_store %arg13[%c0_39, %c0_40], %33 {strides = array<i32>} : memref<8x648xf32, #tpu.memory_space<vmem>>, vector<8x648xf32>,
    %c0_41 = arith.constant 0 : index
    %c5 = arith.constant 5 : index
    %c0_42 = arith.constant 0 : index
    %c0_43 = arith.constant 0 : index
    %35 = vector.load %arg4[%c0_41, %c5, %c0_42, %c0_43] : memref<2x9x8x4xbf16, #tpu.memory_space<vmem>>, vector<1x1x8x4xbf16>
    %36 = vector.shape_cast %35 : vector<1x1x8x4xbf16> to vector<8x4xbf16>
    %37 = vector.extract_strided_slice %1 {offsets = [0, 20], sizes = [4, 648], strides = [1, 1]} : vector<4x768xbf16> to vector<4x648xbf16>
    %cst_44 = arith.constant dense<0.000000e+00> : vector<8x648xf32>
    %38 = tpu.matmul %36, %37, %cst_44 {dimension_numbers = #tpu.dot_dimension_numbers<[1], [0], [0], [1], [0, 0, 1, 1], [], []>} : vector<8x4xbf16>, vector<4x648xbf16>, vector<8x648xf32> -> vector<8x648xf32>
    %c0_45 = arith.constant 0 : index
    %c0_46 = arith.constant 0 : index
    %39 = vector.load %arg13[%c0_45, %c0_46] : memref<8x648xf32, #tpu.memory_space<vmem>>, vector<8x648xf32>
    %40 = arith.addf %39, %38 : vector<8x648xf32>
    %c0_47 = arith.constant 0 : index
    %c0_48 = arith.constant 0 : index
    %41 = vector.load %arg13[%c0_47, %c0_48] : memref<8x648xf32, #tpu.memory_space<vmem>>, vector<8x648xf32>
    tpu.vector_store %arg13[%c0_47, %c0_48], %40 {strides = array<i32>} : memref<8x648xf32, #tpu.memory_space<vmem>>, vector<8x648xf32>,
    %c0_49 = arith.constant 0 : index
    %c6 = arith.constant 6 : index
    %c0_50 = arith.constant 0 : index
    %c0_51 = arith.constant 0 : index
    %42 = vector.load %arg4[%c0_49, %c6, %c0_50, %c0_51] : memref<2x9x8x4xbf16, #tpu.memory_space<vmem>>, vector<1x1x8x4xbf16>
    %43 = vector.shape_cast %42 : vector<1x1x8x4xbf16> to vector<8x4xbf16>
    %44 = vector.extract_strided_slice %1 {offsets = [0, 36], sizes = [4, 648], strides = [1, 1]} : vector<4x768xbf16> to vector<4x648xbf16>
    %cst_52 = arith.constant dense<0.000000e+00> : vector<8x648xf32>
    %45 = tpu.matmul %43, %44, %cst_52 {dimension_numbers = #tpu.dot_dimension_numbers<[1], [0], [0], [1], [0, 0, 1, 1], [], []>} : vector<8x4xbf16>, vector<4x648xbf16>, vector<8x648xf32> -> vector<8x648xf32>
    %c0_53 = arith.constant 0 : index
    %c0_54 = arith.constant 0 : index
    %46 = vector.load %arg13[%c0_53, %c0_54] : memref<8x648xf32, #tpu.memory_space<vmem>>, vector<8x648xf32>
    %47 = arith.addf %46, %45 : vector<8x648xf32>
    %c0_55 = arith.constant 0 : index
    %c0_56 = arith.constant 0 : index
    %48 = vector.load %arg13[%c0_55, %c0_56] : memref<8x648xf32, #tpu.memory_space<vmem>>, vector<8x648xf32>
    tpu.vector_store %arg13[%c0_55, %c0_56], %47 {strides = array<i32>} : memref<8x648xf32, #tpu.memory_space<vmem>>, vector<8x648xf32>,
    %c0_57 = arith.constant 0 : index
    %c7 = arith.constant 7 : index
    %c0_58 = arith.constant 0 : index
    %c0_59 = arith.constant 0 : index
    %49 = vector.load %arg4[%c0_57, %c7, %c0_58, %c0_59] : memref<2x9x8x4xbf16, #tpu.memory_space<vmem>>, vector<1x1x8x4xbf16>
    %50 = vector.shape_cast %49 : vector<1x1x8x4xbf16> to vector<8x4xbf16>
    %51 = vector.extract_strided_slice %1 {offsets = [0, 37], sizes = [4, 648], strides = [1, 1]} : vector<4x768xbf16> to vector<4x648xbf16>
    %cst_60 = arith.constant dense<0.000000e+00> : vector<8x648xf32>
    %52 = tpu.matmul %50, %51, %cst_60 {dimension_numbers = #tpu.dot_dimension_numbers<[1], [0], [0], [1], [0, 0, 1, 1], [], []>} : vector<8x4xbf16>, vector<4x648xbf16>, vector<8x648xf32> -> vector<8x648xf32>
    %c0_61 = arith.constant 0 : index
    %c0_62 = arith.constant 0 : index
    %53 = vector.load %arg13[%c0_61, %c0_62] : memref<8x648xf32, #tpu.memory_space<vmem>>, vector<8x648xf32>
    %54 = arith.addf %53, %52 : vector<8x648xf32>
    %c0_63 = arith.constant 0 : index
    %c0_64 = arith.constant 0 : index
    %55 = vector.load %arg13[%c0_63, %c0_64] : memref<8x648xf32, #tpu.memory_space<vmem>>, vector<8x648xf32>
    tpu.vector_store %arg13[%c0_63, %c0_64], %54 {strides = array<i32>} : memref<8x648xf32, #tpu.memory_space<vmem>>, vector<8x648xf32>,
    %c0_65 = arith.constant 0 : index
    %c8 = arith.constant 8 : index
    %c0_66 = arith.constant 0 : index
    %c0_67 = arith.constant 0 : index
    %56 = vector.load %arg4[%c0_65, %c8, %c0_66, %c0_67] : memref<2x9x8x4xbf16, #tpu.memory_space<vmem>>, vector<1x1x8x4xbf16>
    %57 = vector.shape_cast %56 : vector<1x1x8x4xbf16> to vector<8x4xbf16>
    %58 = vector.extract_strided_slice %1 {offsets = [0, 38], sizes = [4, 648], strides = [1, 1]} : vector<4x768xbf16> to vector<4x648xbf16>
    %cst_68 = arith.constant dense<0.000000e+00> : vector<8x648xf32>
    %59 = tpu.matmul %57, %58, %cst_68 {dimension_numbers = #tpu.dot_dimension_numbers<[1], [0], [0], [1], [0, 0, 1, 1], [], []>} : vector<8x4xbf16>, vector<4x648xbf16>, vector<8x648xf32> -> vector<8x648xf32>
    %c0_69 = arith.constant 0 : index
    %c0_70 = arith.constant 0 : index
    %60 = vector.load %arg13[%c0_69, %c0_70] : memref<8x648xf32, #tpu.memory_space<vmem>>, vector<8x648xf32>
    %61 = arith.addf %60, %59 : vector<8x648xf32>
    %c0_71 = arith.constant 0 : index
    %c0_72 = arith.constant 0 : index
    %62 = vector.load %arg13[%c0_71, %c0_72] : memref<8x648xf32, #tpu.memory_space<vmem>>, vector<8x648xf32>
    tpu.vector_store %arg13[%c0_71, %c0_72], %61 {strides = array<i32>} : memref<8x648xf32, #tpu.memory_space<vmem>>, vector<8x648xf32>,
    %c0_73 = arith.constant 0 : index
    %c0_74 = arith.constant 0 : index
    %63 = vector.load %arg13[%c0_73, %c0_74] : memref<8x648xf32, #tpu.memory_space<vmem>>, vector<8x648xf32>
    %c0_75 = arith.constant 0 : index
    %c0_76 = arith.constant 0 : index
    %c0_77 = arith.constant 0 : index
    %64 = vector.load %arg5[%c0_75, %c0_76, %c0_77] : memref<2x8x1xf32, #tpu.memory_space<vmem>>, vector<1x8x1xf32>
    %65 = vector.shape_cast %64 : vector<1x8x1xf32> to vector<8x1xf32>
    %66 = vector.broadcast %65 : vector<8x1xf32> to vector<8x648xf32>
    %67 = arith.addf %63, %66 : vector<8x648xf32>
    %cst_78 = arith.constant 0.000000e+00 : f32
    %68 = vector.broadcast %cst_78 : f32 to vector<8x648xf32>
    %69 = arith.maximumf %67, %68 : vector<8x648xf32>
    %c0_79 = arith.constant 0 : index
    %c0_80 = arith.constant 0 : index
    %70 = vector.load %arg6[%c0_79, %c0_80] : memref<648x2xf32, #tpu.memory_space<vmem>>, vector<648x2xf32>
    %cst_81 = arith.constant dense<0.000000e+00> : vector<8x2xf32>
    %71 = tpu.matmul %69, %70, %cst_81 {dimension_numbers = #tpu.dot_dimension_numbers<[1], [0], [0], [1], [0, 0, 1, 1], [], []>} : vector<8x648xf32>, vector<648x2xf32>, vector<8x2xf32> -> vector<8x2xf32>
    %c0_82 = arith.constant 0 : index
    %c0_83 = arith.constant 0 : index
    %c0_84 = arith.constant 0 : index
    %72 = vector.load %arg7[%c0_82, %c0_83, %c0_84] : memref<2x32x8xbf16, #tpu.memory_space<vmem>>, vector<1x32x8xbf16>
    %73 = vector.shape_cast %72 : vector<1x32x8xbf16> to vector<32x8xbf16>
    %74 = arith.truncf %71 : vector<8x2xf32> to vector<8x2xbf16>
    %cst_85 = arith.constant dense<0.000000e+00> : vector<32x2xf32>
    %75 = tpu.matmul %73, %74, %cst_85 {dimension_numbers = #tpu.dot_dimension_numbers<[1], [0], [0], [1], [0, 0, 1, 1], [], []>} : vector<32x8xbf16>, vector<8x2xbf16>, vector<32x2xf32> -> vector<32x2xf32>
    %c0_86 = arith.constant 0 : index
    %c0_87 = arith.constant 0 : index
    %c0_88 = arith.constant 0 : index
    %76 = vector.load %arg8[%c0_86, %c0_87, %c0_88] : memref<2x32x1xf32, #tpu.memory_space<vmem>>, vector<1x32x1xf32>
    %77 = vector.shape_cast %76 : vector<1x32x1xf32> to vector<32x1xf32>
    %78 = vector.broadcast %77 : vector<32x1xf32> to vector<32x2xf32>
    %79 = arith.addf %75, %78 : vector<32x2xf32>
    %cst_89 = arith.constant 0.000000e+00 : f32
    %80 = vector.broadcast %cst_89 : f32 to vector<32x2xf32>
    %81 = arith.maximumf %79, %80 : vector<32x2xf32>
    %82 = vector.extract_strided_slice %0 {offsets = [0, 0], sizes = [1, 2], strides = [1, 1]} : vector<2x2xf32> to vector<1x2xf32>
    %83 = vector.broadcast %82 : vector<1x2xf32> to vector<32x2xf32>
    %84 = arith.mulf %81, %83 : vector<32x2xf32>
    %c0_90 = arith.constant 0 : index
    %c0_91 = arith.constant 0 : index
    %85 = vector.load %arg2[%c0_90, %c0_91] : memref<4x768xbf16, #tpu.memory_space<vmem>>, vector<4x768xbf16>
    %c1_92 = arith.constant 1 : index
    %c0_93 = arith.constant 0 : index
    %c0_94 = arith.constant 0 : index
    %c0_95 = arith.constant 0 : index
    %86 = vector.load %arg4[%c1_92, %c0_93, %c0_94, %c0_95] : memref<2x9x8x4xbf16, #tpu.memory_space<vmem>>, vector<1x1x8x4xbf16>
    %87 = vector.shape_cast %86 : vector<1x1x8x4xbf16> to vector<8x4xbf16>
    %88 = vector.extract_strided_slice %85 {offsets = [0, 0], sizes = [4, 648], strides = [1, 1]} : vector<4x768xbf16> to vector<4x648xbf16>
    %cst_96 = arith.constant dense<0.000000e+00> : vector<8x648xf32>
    %89 = tpu.matmul %87, %88, %cst_96 {dimension_numbers = #tpu.dot_dimension_numbers<[1], [0], [0], [1], [0, 0, 1, 1], [], []>} : vector<8x4xbf16>, vector<4x648xbf16>, vector<8x648xf32> -> vector<8x648xf32>
    %c0_97 = arith.constant 0 : index
    %c0_98 = arith.constant 0 : index
    %90 = vector.load %arg13[%c0_97, %c0_98] : memref<8x648xf32, #tpu.memory_space<vmem>>, vector<8x648xf32>
    tpu.vector_store %arg13[%c0_97, %c0_98], %89 {strides = array<i32>} : memref<8x648xf32, #tpu.memory_space<vmem>>, vector<8x648xf32>,
    %c1_99 = arith.constant 1 : index
    %c1_100 = arith.constant 1 : index
    %c0_101 = arith.constant 0 : index
    %c0_102 = arith.constant 0 : index
    %91 = vector.load %arg4[%c1_99, %c1_100, %c0_101, %c0_102] : memref<2x9x8x4xbf16, #tpu.memory_space<vmem>>, vector<1x1x8x4xbf16>
    %92 = vector.shape_cast %91 : vector<1x1x8x4xbf16> to vector<8x4xbf16>
    %93 = vector.extract_strided_slice %85 {offsets = [0, 1], sizes = [4, 648], strides = [1, 1]} : vector<4x768xbf16> to vector<4x648xbf16>
    %cst_103 = arith.constant dense<0.000000e+00> : vector<8x648xf32>
    %94 = tpu.matmul %92, %93, %cst_103 {dimension_numbers = #tpu.dot_dimension_numbers<[1], [0], [0], [1], [0, 0, 1, 1], [], []>} : vector<8x4xbf16>, vector<4x648xbf16>, vector<8x648xf32> -> vector<8x648xf32>
    %c0_104 = arith.constant 0 : index
    %c0_105 = arith.constant 0 : index
    %95 = vector.load %arg13[%c0_104, %c0_105] : memref<8x648xf32, #tpu.memory_space<vmem>>, vector<8x648xf32>
    %96 = arith.addf %95, %94 : vector<8x648xf32>
    %c0_106 = arith.constant 0 : index
    %c0_107 = arith.constant 0 : index
    %97 = vector.load %arg13[%c0_106, %c0_107] : memref<8x648xf32, #tpu.memory_space<vmem>>, vector<8x648xf32>
    tpu.vector_store %arg13[%c0_106, %c0_107], %96 {strides = array<i32>} : memref<8x648xf32, #tpu.memory_space<vmem>>, vector<8x648xf32>,
    %c1_108 = arith.constant 1 : index
    %c2_109 = arith.constant 2 : index
    %c0_110 = arith.constant 0 : index
    %c0_111 = arith.constant 0 : index
    %98 = vector.load %arg4[%c1_108, %c2_109, %c0_110, %c0_111] : memref<2x9x8x4xbf16, #tpu.memory_space<vmem>>, vector<1x1x8x4xbf16>
    %99 = vector.shape_cast %98 : vector<1x1x8x4xbf16> to vector<8x4xbf16>
    %100 = vector.extract_strided_slice %85 {offsets = [0, 2], sizes = [4, 648], strides = [1, 1]} : vector<4x768xbf16> to vector<4x648xbf16>
    %cst_112 = arith.constant dense<0.000000e+00> : vector<8x648xf32>
    %101 = tpu.matmul %99, %100, %cst_112 {dimension_numbers = #tpu.dot_dimension_numbers<[1], [0], [0], [1], [0, 0, 1, 1], [], []>} : vector<8x4xbf16>, vector<4x648xbf16>, vector<8x648xf32> -> vector<8x648xf32>
    %c0_113 = arith.constant 0 : index
    %c0_114 = arith.constant 0 : index
    %102 = vector.load %arg13[%c0_113, %c0_114] : memref<8x648xf32, #tpu.memory_space<vmem>>, vector<8x648xf32>
    %103 = arith.addf %102, %101 : vector<8x648xf32>
    %c0_115 = arith.constant 0 : index
    %c0_116 = arith.constant 0 : index
    %104 = vector.load %arg13[%c0_115, %c0_116] : memref<8x648xf32, #tpu.memory_space<vmem>>, vector<8x648xf32>
    tpu.vector_store %arg13[%c0_115, %c0_116], %103 {strides = array<i32>} : memref<8x648xf32, #tpu.memory_space<vmem>>, vector<8x648xf32>,
    %c1_117 = arith.constant 1 : index
    %c3_118 = arith.constant 3 : index
    %c0_119 = arith.constant 0 : index
    %c0_120 = arith.constant 0 : index
    %105 = vector.load %arg4[%c1_117, %c3_118, %c0_119, %c0_120] : memref<2x9x8x4xbf16, #tpu.memory_space<vmem>>, vector<1x1x8x4xbf16>
    %106 = vector.shape_cast %105 : vector<1x1x8x4xbf16> to vector<8x4xbf16>
    %107 = vector.extract_strided_slice %85 {offsets = [0, 18], sizes = [4, 648], strides = [1, 1]} : vector<4x768xbf16> to vector<4x648xbf16>
    %cst_121 = arith.constant dense<0.000000e+00> : vector<8x648xf32>
    %108 = tpu.matmul %106, %107, %cst_121 {dimension_numbers = #tpu.dot_dimension_numbers<[1], [0], [0], [1], [0, 0, 1, 1], [], []>} : vector<8x4xbf16>, vector<4x648xbf16>, vector<8x648xf32> -> vector<8x648xf32>
    %c0_122 = arith.constant 0 : index
    %c0_123 = arith.constant 0 : index
    %109 = vector.load %arg13[%c0_122, %c0_123] : memref<8x648xf32, #tpu.memory_space<vmem>>, vector<8x648xf32>
    %110 = arith.addf %109, %108 : vector<8x648xf32>
    %c0_124 = arith.constant 0 : index
    %c0_125 = arith.constant 0 : index
    %111 = vector.load %arg13[%c0_124, %c0_125] : memref<8x648xf32, #tpu.memory_space<vmem>>, vector<8x648xf32>
    tpu.vector_store %arg13[%c0_124, %c0_125], %110 {strides = array<i32>} : memref<8x648xf32, #tpu.memory_space<vmem>>, vector<8x648xf32>,
    %c1_126 = arith.constant 1 : index
    %c4_127 = arith.constant 4 : index
    %c0_128 = arith.constant 0 : index
    %c0_129 = arith.constant 0 : index
    %112 = vector.load %arg4[%c1_126, %c4_127, %c0_128, %c0_129] : memref<2x9x8x4xbf16, #tpu.memory_space<vmem>>, vector<1x1x8x4xbf16>
    %113 = vector.shape_cast %112 : vector<1x1x8x4xbf16> to vector<8x4xbf16>
    %114 = vector.extract_strided_slice %85 {offsets = [0, 19], sizes = [4, 648], strides = [1, 1]} : vector<4x768xbf16> to vector<4x648xbf16>
    %cst_130 = arith.constant dense<0.000000e+00> : vector<8x648xf32>
    %115 = tpu.matmul %113, %114, %cst_130 {dimension_numbers = #tpu.dot_dimension_numbers<[1], [0], [0], [1], [0, 0, 1, 1], [], []>} : vector<8x4xbf16>, vector<4x648xbf16>, vector<8x648xf32> -> vector<8x648xf32>
    %c0_131 = arith.constant 0 : index
    %c0_132 = arith.constant 0 : index
    %116 = vector.load %arg13[%c0_131, %c0_132] : memref<8x648xf32, #tpu.memory_space<vmem>>, vector<8x648xf32>
    %117 = arith.addf %116, %115 : vector<8x648xf32>
    %c0_133 = arith.constant 0 : index
    %c0_134 = arith.constant 0 : index
    %118 = vector.load %arg13[%c0_133, %c0_134] : memref<8x648xf32, #tpu.memory_space<vmem>>, vector<8x648xf32>
    tpu.vector_store %arg13[%c0_133, %c0_134], %117 {strides = array<i32>} : memref<8x648xf32, #tpu.memory_space<vmem>>, vector<8x648xf32>,
    %c1_135 = arith.constant 1 : index
    %c5_136 = arith.constant 5 : index
    %c0_137 = arith.constant 0 : index
    %c0_138 = arith.constant 0 : index
    %119 = vector.load %arg4[%c1_135, %c5_136, %c0_137, %c0_138] : memref<2x9x8x4xbf16, #tpu.memory_space<vmem>>, vector<1x1x8x4xbf16>
    %120 = vector.shape_cast %119 : vector<1x1x8x4xbf16> to vector<8x4xbf16>
    %121 = vector.extract_strided_slice %85 {offsets = [0, 20], sizes = [4, 648], strides = [1, 1]} : vector<4x768xbf16> to vector<4x648xbf16>
    %cst_139 = arith.constant dense<0.000000e+00> : vector<8x648xf32>
    %122 = tpu.matmul %120, %121, %cst_139 {dimension_numbers = #tpu.dot_dimension_numbers<[1], [0], [0], [1], [0, 0, 1, 1], [], []>} : vector<8x4xbf16>, vector<4x648xbf16>, vector<8x648xf32> -> vector<8x648xf32>
    %c0_140 = arith.constant 0 : index
    %c0_141 = arith.constant 0 : index
    %123 = vector.load %arg13[%c0_140, %c0_141] : memref<8x648xf32, #tpu.memory_space<vmem>>, vector<8x648xf32>
    %124 = arith.addf %123, %122 : vector<8x648xf32>
    %c0_142 = arith.constant 0 : index
    %c0_143 = arith.constant 0 : index
    %125 = vector.load %arg13[%c0_142, %c0_143] : memref<8x648xf32, #tpu.memory_space<vmem>>, vector<8x648xf32>
    tpu.vector_store %arg13[%c0_142, %c0_143], %124 {strides = array<i32>} : memref<8x648xf32, #tpu.memory_space<vmem>>, vector<8x648xf32>,
    %c1_144 = arith.constant 1 : index
    %c6_145 = arith.constant 6 : index
    %c0_146 = arith.constant 0 : index
    %c0_147 = arith.constant 0 : index
    %126 = vector.load %arg4[%c1_144, %c6_145, %c0_146, %c0_147] : memref<2x9x8x4xbf16, #tpu.memory_space<vmem>>, vector<1x1x8x4xbf16>
    %127 = vector.shape_cast %126 : vector<1x1x8x4xbf16> to vector<8x4xbf16>
    %128 = vector.extract_strided_slice %85 {offsets = [0, 36], sizes = [4, 648], strides = [1, 1]} : vector<4x768xbf16> to vector<4x648xbf16>
    %cst_148 = arith.constant dense<0.000000e+00> : vector<8x648xf32>
    %129 = tpu.matmul %127, %128, %cst_148 {dimension_numbers = #tpu.dot_dimension_numbers<[1], [0], [0], [1], [0, 0, 1, 1], [], []>} : vector<8x4xbf16>, vector<4x648xbf16>, vector<8x648xf32> -> vector<8x648xf32>
    %c0_149 = arith.constant 0 : index
    %c0_150 = arith.constant 0 : index
    %130 = vector.load %arg13[%c0_149, %c0_150] : memref<8x648xf32, #tpu.memory_space<vmem>>, vector<8x648xf32>
    %131 = arith.addf %130, %129 : vector<8x648xf32>
    %c0_151 = arith.constant 0 : index
    %c0_152 = arith.constant 0 : index
    %132 = vector.load %arg13[%c0_151, %c0_152] : memref<8x648xf32, #tpu.memory_space<vmem>>, vector<8x648xf32>
    tpu.vector_store %arg13[%c0_151, %c0_152], %131 {strides = array<i32>} : memref<8x648xf32, #tpu.memory_space<vmem>>, vector<8x648xf32>,
    %c1_153 = arith.constant 1 : index
    %c7_154 = arith.constant 7 : index
    %c0_155 = arith.constant 0 : index
    %c0_156 = arith.constant 0 : index
    %133 = vector.load %arg4[%c1_153, %c7_154, %c0_155, %c0_156] : memref<2x9x8x4xbf16, #tpu.memory_space<vmem>>, vector<1x1x8x4xbf16>
    %134 = vector.shape_cast %133 : vector<1x1x8x4xbf16> to vector<8x4xbf16>
    %135 = vector.extract_strided_slice %85 {offsets = [0, 37], sizes = [4, 648], strides = [1, 1]} : vector<4x768xbf16> to vector<4x648xbf16>
    %cst_157 = arith.constant dense<0.000000e+00> : vector<8x648xf32>
    %136 = tpu.matmul %134, %135, %cst_157 {dimension_numbers = #tpu.dot_dimension_numbers<[1], [0], [0], [1], [0, 0, 1, 1], [], []>} : vector<8x4xbf16>, vector<4x648xbf16>, vector<8x648xf32> -> vector<8x648xf32>
    %c0_158 = arith.constant 0 : index
    %c0_159 = arith.constant 0 : index
    %137 = vector.load %arg13[%c0_158, %c0_159] : memref<8x648xf32, #tpu.memory_space<vmem>>, vector<8x648xf32>
    %138 = arith.addf %137, %136 : vector<8x648xf32>
    %c0_160 = arith.constant 0 : index
    %c0_161 = arith.constant 0 : index
    %139 = vector.load %arg13[%c0_160, %c0_161] : memref<8x648xf32, #tpu.memory_space<vmem>>, vector<8x648xf32>
    tpu.vector_store %arg13[%c0_160, %c0_161], %138 {strides = array<i32>} : memref<8x648xf32, #tpu.memory_space<vmem>>, vector<8x648xf32>,
    %c1_162 = arith.constant 1 : index
    %c8_163 = arith.constant 8 : index
    %c0_164 = arith.constant 0 : index
    %c0_165 = arith.constant 0 : index
    %140 = vector.load %arg4[%c1_162, %c8_163, %c0_164, %c0_165] : memref<2x9x8x4xbf16, #tpu.memory_space<vmem>>, vector<1x1x8x4xbf16>
    %141 = vector.shape_cast %140 : vector<1x1x8x4xbf16> to vector<8x4xbf16>
    %142 = vector.extract_strided_slice %85 {offsets = [0, 38], sizes = [4, 648], strides = [1, 1]} : vector<4x768xbf16> to vector<4x648xbf16>
    %cst_166 = arith.constant dense<0.000000e+00> : vector<8x648xf32>
    %143 = tpu.matmul %141, %142, %cst_166 {dimension_numbers = #tpu.dot_dimension_numbers<[1], [0], [0], [1], [0, 0, 1, 1], [], []>} : vector<8x4xbf16>, vector<4x648xbf16>, vector<8x648xf32> -> vector<8x648xf32>
    %c0_167 = arith.constant 0 : index
    %c0_168 = arith.constant 0 : index
    %144 = vector.load %arg13[%c0_167, %c0_168] : memref<8x648xf32, #tpu.memory_space<vmem>>, vector<8x648xf32>
    %145 = arith.addf %144, %143 : vector<8x648xf32>
    %c0_169 = arith.constant 0 : index
    %c0_170 = arith.constant 0 : index
    %146 = vector.load %arg13[%c0_169, %c0_170] : memref<8x648xf32, #tpu.memory_space<vmem>>, vector<8x648xf32>
    tpu.vector_store %arg13[%c0_169, %c0_170], %145 {strides = array<i32>} : memref<8x648xf32, #tpu.memory_space<vmem>>, vector<8x648xf32>,
    %c0_171 = arith.constant 0 : index
    %c0_172 = arith.constant 0 : index
    %147 = vector.load %arg13[%c0_171, %c0_172] : memref<8x648xf32, #tpu.memory_space<vmem>>, vector<8x648xf32>
    %c1_173 = arith.constant 1 : index
    %c0_174 = arith.constant 0 : index
    %c0_175 = arith.constant 0 : index
    %148 = vector.load %arg5[%c1_173, %c0_174, %c0_175] : memref<2x8x1xf32, #tpu.memory_space<vmem>>, vector<1x8x1xf32>
    %149 = vector.shape_cast %148 : vector<1x8x1xf32> to vector<8x1xf32>
    %150 = vector.broadcast %149 : vector<8x1xf32> to vector<8x648xf32>
    %151 = arith.addf %147, %150 : vector<8x648xf32>
    %cst_176 = arith.constant 0.000000e+00 : f32
    %152 = vector.broadcast %cst_176 : f32 to vector<8x648xf32>
    %153 = arith.maximumf %151, %152 : vector<8x648xf32>
    %c0_177 = arith.constant 0 : index
    %c0_178 = arith.constant 0 : index
    %154 = vector.load %arg6[%c0_177, %c0_178] : memref<648x2xf32, #tpu.memory_space<vmem>>, vector<648x2xf32>
    %cst_179 = arith.constant dense<0.000000e+00> : vector<8x2xf32>
    %155 = tpu.matmul %153, %154, %cst_179 {dimension_numbers = #tpu.dot_dimension_numbers<[1], [0], [0], [1], [0, 0, 1, 1], [], []>} : vector<8x648xf32>, vector<648x2xf32>, vector<8x2xf32> -> vector<8x2xf32>
    %c1_180 = arith.constant 1 : index
    %c0_181 = arith.constant 0 : index
    %c0_182 = arith.constant 0 : index
    %156 = vector.load %arg7[%c1_180, %c0_181, %c0_182] : memref<2x32x8xbf16, #tpu.memory_space<vmem>>, vector<1x32x8xbf16>
    %157 = vector.shape_cast %156 : vector<1x32x8xbf16> to vector<32x8xbf16>
    %158 = arith.truncf %155 : vector<8x2xf32> to vector<8x2xbf16>
    %cst_183 = arith.constant dense<0.000000e+00> : vector<32x2xf32>
    %159 = tpu.matmul %157, %158, %cst_183 {dimension_numbers = #tpu.dot_dimension_numbers<[1], [0], [0], [1], [0, 0, 1, 1], [], []>} : vector<32x8xbf16>, vector<8x2xbf16>, vector<32x2xf32> -> vector<32x2xf32>
    %c1_184 = arith.constant 1 : index
    %c0_185 = arith.constant 0 : index
    %c0_186 = arith.constant 0 : index
    %160 = vector.load %arg8[%c1_184, %c0_185, %c0_186] : memref<2x32x1xf32, #tpu.memory_space<vmem>>, vector<1x32x1xf32>
    %161 = vector.shape_cast %160 : vector<1x32x1xf32> to vector<32x1xf32>
    %162 = vector.broadcast %161 : vector<32x1xf32> to vector<32x2xf32>
    %163 = arith.addf %159, %162 : vector<32x2xf32>
    %cst_187 = arith.constant 0.000000e+00 : f32
    %164 = vector.broadcast %cst_187 : f32 to vector<32x2xf32>
    %165 = arith.maximumf %163, %164 : vector<32x2xf32>
    %166 = vector.extract_strided_slice %0 {offsets = [1, 0], sizes = [1, 2], strides = [1, 1]} : vector<2x2xf32> to vector<1x2xf32>
    %167 = vector.broadcast %166 : vector<1x2xf32> to vector<32x2xf32>
    %168 = arith.mulf %165, %167 : vector<32x2xf32>
    %c0_188 = arith.constant 0 : index
    %c0_189 = arith.constant 0 : index
    %169 = vector.load %arg9[%c0_188, %c0_189] : memref<3x32xbf16, #tpu.memory_space<vmem>>, vector<3x32xbf16>
    %170 = arith.truncf %84 : vector<32x2xf32> to vector<32x2xbf16>
    %cst_190 = arith.constant dense<0.000000e+00> : vector<3x2xf32>
    %171 = tpu.matmul %169, %170, %cst_190 {dimension_numbers = #tpu.dot_dimension_numbers<[1], [0], [0], [1], [0, 0, 1, 1], [], []>} : vector<3x32xbf16>, vector<32x2xbf16>, vector<3x2xf32> -> vector<3x2xf32>
    %c0_191 = arith.constant 0 : index
    %c0_192 = arith.constant 0 : index
    %172 = vector.load %arg10[%c0_191, %c0_192] : memref<3x32xbf16, #tpu.memory_space<vmem>>, vector<3x32xbf16>
    %173 = arith.truncf %168 : vector<32x2xf32> to vector<32x2xbf16>
    %cst_193 = arith.constant dense<0.000000e+00> : vector<3x2xf32>
    %174 = tpu.matmul %172, %173, %cst_193 {dimension_numbers = #tpu.dot_dimension_numbers<[1], [0], [0], [1], [0, 0, 1, 1], [], []>} : vector<3x32xbf16>, vector<32x2xbf16>, vector<3x2xf32> -> vector<3x2xf32>
    %175 = arith.addf %171, %174 : vector<3x2xf32>
    %c0_194 = arith.constant 0 : index
    %c0_195 = arith.constant 0 : index
    %176 = vector.load %arg11[%c0_194, %c0_195] : memref<3x1xf32, #tpu.memory_space<vmem>>, vector<3x1xf32>
    %177 = vector.broadcast %176 : vector<3x1xf32> to vector<3x2xf32>
    %178 = arith.addf %175, %177 : vector<3x2xf32>
    %c0_196 = arith.constant 0 : index
    %c0_197 = arith.constant 0 : index
    %179 = vector.load %arg12[%c0_196, %c0_197] : memref<3x2xf32, #tpu.memory_space<vmem>>, vector<3x2xf32>
    tpu.vector_store %arg12[%c0_196, %c0_197], %178 {strides = array<i32>} : memref<3x2xf32, #tpu.memory_space<vmem>>, vector<3x2xf32>,
    return
  }
  func.func @transform_0(%arg0: i32) -> (i32, i32) {
    %c0_i32 = arith.constant 0 : i32
    %c0_i32_0 = arith.constant 0 : i32
    %c0_i32_1 = arith.constant 0 : i32
    return %c0_i32, %c0_i32_0 : i32, i32
  }
  func.func @transform_1(%arg0: i32) -> (i32, i32) {
    %c0_i32 = arith.constant 0 : i32
    %c0_i32_0 = arith.constant 0 : i32
    %c0_i32_1 = arith.constant 0 : i32
    return %c0_i32, %c0_i32_0 : i32, i32
  }
  func.func @transform_2(%arg0: i32) -> (i32, i32) {
    %c0_i32 = arith.constant 0 : i32
    %c0_i32_0 = arith.constant 0 : i32
    %c0_i32_1 = arith.constant 0 : i32
    return %c0_i32, %c0_i32_0 : i32, i32
  }
  func.func @transform_3(%arg0: i32) -> (i32, i32, i32, i32) {
    %c0_i32 = arith.constant 0 : i32
    %c0_i32_0 = arith.constant 0 : i32
    %c0_i32_1 = arith.constant 0 : i32
    %c0_i32_2 = arith.constant 0 : i32
    %c0_i32_3 = arith.constant 0 : i32
    return %c0_i32, %c0_i32_0, %c0_i32_1, %c0_i32_2 : i32, i32, i32, i32
  }
  func.func @transform_4(%arg0: i32) -> (i32, i32, i32) {
    %c0_i32 = arith.constant 0 : i32
    %c0_i32_0 = arith.constant 0 : i32
    %c0_i32_1 = arith.constant 0 : i32
    %c0_i32_2 = arith.constant 0 : i32
    return %c0_i32, %c0_i32_0, %c0_i32_1 : i32, i32, i32
  }
  func.func @transform_5(%arg0: i32) -> (i32, i32) {
    %c0_i32 = arith.constant 0 : i32
    %c0_i32_0 = arith.constant 0 : i32
    %c0_i32_1 = arith.constant 0 : i32
    return %c0_i32, %c0_i32_0 : i32, i32
  }
  func.func @transform_6(%arg0: i32) -> (i32, i32, i32) {
    %c0_i32 = arith.constant 0 : i32
    %c0_i32_0 = arith.constant 0 : i32
    %c0_i32_1 = arith.constant 0 : i32
    %c0_i32_2 = arith.constant 0 : i32
    return %c0_i32, %c0_i32_0, %c0_i32_1 : i32, i32, i32
  }
  func.func @transform_7(%arg0: i32) -> (i32, i32, i32) {
    %c0_i32 = arith.constant 0 : i32
    %c0_i32_0 = arith.constant 0 : i32
    %c0_i32_1 = arith.constant 0 : i32
    %c0_i32_2 = arith.constant 0 : i32
    return %c0_i32, %c0_i32_0, %c0_i32_1 : i32, i32, i32
  }
  func.func @transform_8(%arg0: i32) -> (i32, i32) {
    %c0_i32 = arith.constant 0 : i32
    %c0_i32_0 = arith.constant 0 : i32
    %c0_i32_1 = arith.constant 0 : i32
    return %c0_i32, %c0_i32_0 : i32, i32
  }
  func.func @transform_9(%arg0: i32) -> (i32, i32) {
    %c0_i32 = arith.constant 0 : i32
    %c0_i32_0 = arith.constant 0 : i32
    %c0_i32_1 = arith.constant 0 : i32
    return %c0_i32, %c0_i32_0 : i32, i32
  }
  func.func @transform_10(%arg0: i32) -> (i32, i32) {
    %c0_i32 = arith.constant 0 : i32
    %c0_i32_0 = arith.constant 0 : i32
    %c0_i32_1 = arith.constant 0 : i32
    return %c0_i32, %c0_i32_0 : i32, i32
  }
  func.func @transform_11(%arg0: i32) -> (i32, i32) {
    %c0_i32 = arith.constant 0 : i32
    %c0_i32_0 = arith.constant 0 : i32
    %c0_i32_1 = arith.constant 0 : i32
    return %c0_i32, %c0_i32_0 : i32, i32
  }
}

</mosaic_0001>

<llo_original>
// kernel: _lambda_.1
$region0: #{_lambda_.1}
  #allocation0 [shape = 'u32[]', space=smem, size = 0x4, offset = 0x4, fixed_abs, tag = 'smem constant byte address 0x4 - core index']
  #allocation1 [shape = 'u32[144,128]{1,0:T(1,128)}', space=vmem, size = 0x12000, scoped, tag = 'internal scratch']
  #allocation2 [shape = 'f32[8,648]{1,0:T(8,128)}', space=vmem, size = 0x6000, scoped, tag = 'scratch operand']
  %s0 = inlined_call_operand.vmem [shape: bf16[4,768], index: 0, kind: input, shape index: {}]
  %s1 = inlined_call_operand.vmem [shape: bf16[4,768], index: 1, kind: input, shape index: {}]
  %s2 = inlined_call_operand.vmem [shape: f32[2,2], index: 2, kind: input, shape index: {}]
  %s3 = inlined_call_operand.vmem [shape: bf16[2,9,8,4], index: 3, kind: input, shape index: {}]
  %s4 = inlined_call_operand.vmem [shape: f32[2,8,1], index: 4, kind: input, shape index: {}]
  %s5 = inlined_call_operand.vmem [shape: f32[648,2], index: 5, kind: input, shape index: {}]
  %s6 = inlined_call_operand.vmem [shape: bf16[2,32,8], index: 6, kind: input, shape index: {}]
  %s7 = inlined_call_operand.vmem [shape: f32[2,32,1], index: 7, kind: input, shape index: {}]
  %s8 = inlined_call_operand.vmem [shape: bf16[3,32], index: 8, kind: input, shape index: {}]
  %s9 = inlined_call_operand.vmem [shape: bf16[3,32], index: 9, kind: input, shape index: {}]
  %s10 = inlined_call_operand.vmem [shape: f32[3,1], index: 10, kind: input, shape index: {}]
  %s11 = inlined_call_operand.vmem [shape: f32[3,2], index: 11, kind: output, shape index: {}]
  %s12 = sld [smem:[#allocation0]]
  $region54: #{_lambda_.1} parent=0
    _
  %s14 = ssub.s32 1, %s12
  %s15 = scalar_select 0, %s14, %s12
  // Predicated region
  $region2: #{_lambda_.1} parent=0 // pred_check
    _
  $region3: #{_lambda_.1} parent=0 // pred_check_branch
    %17 = sbr.rel (0) target = $region5
  $region4: #{_lambda_.1} parent=0 // pred_region
    _
  $region5: #{_lambda_.1} parent=0 // pred_fallthru
    _
  // Predicated region
  $region6: #{_lambda_.1} parent=0 // pred_check
    _
  $region7: #{_lambda_.1} parent=0 // pred_check_branch
    %19 = sbr.rel (0) target = $region9
  $region8: #{_lambda_.1} parent=0 // pred_region
    _
  $region9: #{_lambda_.1} parent=0 // pred_fallthru
    _
  // Predicated region
  $region10: #{_lambda_.1} parent=0 // pred_check
    _
  $region11: #{_lambda_.1} parent=0 // pred_check_branch
    %21 = sbr.rel (0) target = $region13
  $region12: #{_lambda_.1} parent=0 // pred_region
    _
  $region13: #{_lambda_.1} parent=0 // pred_fallthru
    _
  // Predicated region
  $region14: #{_lambda_.1} parent=0 // pred_check
    _
  $region15: #{_lambda_.1} parent=0 // pred_check_branch
    %23 = sbr.rel (0) target = $region17
  $region16: #{_lambda_.1} parent=0 // pred_region
    _
  $region17: #{_lambda_.1} parent=0 // pred_fallthru
    _
  // Predicated region
  $region18: #{_lambda_.1} parent=0 // pred_check
    _
  $region19: #{_lambda_.1} parent=0 // pred_check_branch
    %25 = sbr.rel (0) target = $region21
  $region20: #{_lambda_.1} parent=0 // pred_region
    _
  $region21: #{_lambda_.1} parent=0 // pred_fallthru
    _
  // Predicated region
  $region22: #{_lambda_.1} parent=0 // pred_check
    _
  $region23: #{_lambda_.1} parent=0 // pred_check_branch
    %27 = sbr.rel (0) target = $region25
  $region24: #{_lambda_.1} parent=0 // pred_region
    _
  $region25: #{_lambda_.1} parent=0 // pred_fallthru
    _
  // Predicated region
  $region26: #{_lambda_.1} parent=0 // pred_check
    _
  $region27: #{_lambda_.1} parent=0 // pred_check_branch
    %29 = sbr.rel (0) target = $region29
  $region28: #{_lambda_.1} parent=0 // pred_region
    _
  $region29: #{_lambda_.1} parent=0 // pred_fallthru
    _
  // Predicated region
  $region30: #{_lambda_.1} parent=0 // pred_check
    _
  $region31: #{_lambda_.1} parent=0 // pred_check_branch
    %31 = sbr.rel (0) target = $region33
  $region32: #{_lambda_.1} parent=0 // pred_region
    _
  $region33: #{_lambda_.1} parent=0 // pred_fallthru
    _
  // Predicated region
  $region34: #{_lambda_.1} parent=0 // pred_check
    _
  $region35: #{_lambda_.1} parent=0 // pred_check_branch
    %33 = sbr.rel (0) target = $region37
  $region36: #{_lambda_.1} parent=0 // pred_region
    _
  $region37: #{_lambda_.1} parent=0 // pred_fallthru
    _
  // Predicated region
  $region38: #{_lambda_.1} parent=0 // pred_check
    _
  $region39: #{_lambda_.1} parent=0 // pred_check_branch
    %35 = sbr.rel (0) target = $region41
  $region40: #{_lambda_.1} parent=0 // pred_region
    _
  $region41: #{_lambda_.1} parent=0 // pred_fallthru
    _
  // Predicated region
  $region42: #{_lambda_.1} parent=0 // pred_check
    _
  $region43: #{_lambda_.1} parent=0 // pred_check_branch
    %37 = sbr.rel (0) target = $region45
  $region44: #{_lambda_.1} parent=0 // pred_region
    _
  $region45: #{_lambda_.1} parent=0 // pred_fallthru
    _
  %v39 = vld [vmem:[%s2] sm:$0x3]
  %v40 = vld [vmem:[%s0] sm:$0xff]
  %v41 = vld [vmem:[%s0 + $0x8] sm:$0xf]
  %v42 = vld [vmem:[%s3] sm:$0xf]
  %v45 = vcombine.high %v40, %v40
  %v47 = vunpack.c.l.s4 1983009808
  %v48 = vunpack.c.0.s8 %v47
  %v49 = vlaneseq
  %v50 = vshrl.u32 %v49, 7
  %v51 = vsub.s32 %v48, %v50
  %v52 = vrot.slane %v40, %v51
  %v54 = vunpack.c.l.s4 1983009808
  %v55 = vunpack.c.0.s8 %v54
  %v56 = vlaneseq
  %v57 = vshrl.u32 %v56, 7
  %v58 = vsub.s32 %v55, %v57
  %v59 = vrot.slane %v45, %v58
  %v60 = vcombine.high %v52, %v52
  %v61 = vcombine.high %v59, %v59
  %v63 = vunpack.c.l.s4 1983009808
  %v64 = vunpack.c.0.s8 %v63
  %v65 = vlaneseq
  %v66 = vshrl.u32 %v65, 7
  %v67 = vsub.s32 %v64, %v66
  %v68 = vrot.slane %v41, %v67
  %v69 = vcombine.high %v68, %v68
  %vm70 = vcmask 31744
  %v72 = vsel %vm70, %v42, 0
  %vm74 = vcmask 1041408
  %v76 = vsel %vm74, %v52, 0
  %v79 = vsel %vm74, %v60, 0
  %v82 = vsel %vm74, %v59, 0
  %v85 = vsel %vm74, %v61, 0
  %v88 = vsel %vm74, %v68, 0
  %v91 = vsel %vm74, %v69, 0
  %93 = vmatprep.subr.bf16.mxu0 %v79
  %94 = vmatpush1.bf16.msra.mxu0 %v76
  %95 = vmatprep.subr.bf16.mxu0 0
  %96 = vmatpush1.bf16.msra.mxu0 0
  %97 = vmatprep.subr.bf16.mxu0 0
  %98 = vmatpush1.bf16.msra.mxu0 0
  %99 = vmatprep.subr.bf16.mxu0 0
  %100 = vmatpush1.bf16.msra.mxu0 0
  %101 = vmatprep.subr.bf16.mxu0 0
  %102 = vmatpush1.bf16.msra.mxu0 0
  %103 = vmatprep.subr.bf16.mxu0 0
  %104 = vmatpush1.bf16.msra.mxu0 0
  %105 = vmatprep.subr.bf16.mxu0 0
  %106 = vmatpush1.bf16.msra.mxu0 0
  %107 = vmatprep.subr.bf16.mxu0 0
  %108 = vmatpush1.bf16.msra.mxu0 0
  %109 = vmatprep.subr.bf16.mxu0 0
  %110 = vmatpush1.bf16.msra.mxu0 0
  %111 = vmatprep.subr.bf16.mxu0 0
  %112 = vmatpush1.bf16.msra.mxu0 0
  %113 = vmatprep.subr.bf16.mxu0 0
  %114 = vmatpush1.bf16.msra.mxu0 0
  %115 = vmatprep.subr.bf16.mxu0 0
  %116 = vmatpush1.bf16.msra.mxu0 0
  %117 = vmatprep.subr.bf16.mxu0 0
  %118 = vmatpush1.bf16.msra.mxu0 0
  %119 = vmatprep.subr.bf16.mxu0 0
  %120 = vmatpush1.bf16.msra.mxu0 0
  %121 = vmatprep.subr.bf16.mxu0 0
  %122 = vmatpush1.bf16.msra.mxu0 0
  %123 = vmatprep.subr.bf16.mxu0 0
  %124 = vmatpush1.bf16.msra.mxu0 0
  %125 = vmatprep.mubr.bf16.mxu0 0
  %126 = vmatmul.mubr.bf16.gmra.mrb[0].mxu0 %v72
  %v127 = vpop.f32.mrb[0].mxu0
  %v128 = vadd.f32 0.0, %v127
  %v129 = vpop.f32.mrb[0].mxu0
  %v130 = vadd.f32 0.0, %v129
  %v131 = vpop.f32.mrb[0].mxu0
  %v132 = vpop.f32.mrb[0].mxu0
  %133 = vdwg.mxu0
  %134 = vmatprep.subr.bf16.mxu0 %v85
  %135 = vmatpush1.bf16.msra.mxu0 %v82
  %136 = vmatprep.subr.bf16.mxu0 0
  %137 = vmatpush1.bf16.msra.mxu0 0
  %138 = vmatprep.subr.bf16.mxu0 0
  %139 = vmatpush1.bf16.msra.mxu0 0
  %140 = vmatprep.subr.bf16.mxu0 0
  %141 = vmatpush1.bf16.msra.mxu0 0
  %142 = vmatprep.subr.bf16.mxu0 0
  %143 = vmatpush1.bf16.msra.mxu0 0
  %144 = vmatprep.subr.bf16.mxu0 0
  %145 = vmatpush1.bf16.msra.mxu0 0
  %146 = vmatprep.subr.bf16.mxu0 0
  %147 = vmatpush1.bf16.msra.mxu0 0
  %148 = vmatprep.subr.bf16.mxu0 0
  %149 = vmatpush1.bf16.msra.mxu0 0
  %150 = vmatprep.subr.bf16.mxu0 0
  %151 = vmatpush1.bf16.msra.mxu0 0
  %152 = vmatprep.subr.bf16.mxu0 0
  %153 = vmatpush1.bf16.msra.mxu0 0
  %154 = vmatprep.subr.bf16.mxu0 0
  %155 = vmatpush1.bf16.msra.mxu0 0
  %156 = vmatprep.subr.bf16.mxu0 0
  %157 = vmatpush1.bf16.msra.mxu0 0
  %158 = vmatprep.subr.bf16.mxu0 0
  %159 = vmatpush1.bf16.msra.mxu0 0
  %160 = vmatprep.subr.bf16.mxu0 0
  %161 = vmatpush1.bf16.msra.mxu0 0
  %162 = vmatprep.subr.bf16.mxu0 0
  %163 = vmatpush1.bf16.msra.mxu0 0
  %164 = vmatprep.subr.bf16.mxu0 0
  %165 = vmatpush1.bf16.msra.mxu0 0
  %166 = vmatprep.mubr.bf16.mxu0 0
  %167 = vmatmul.mubr.bf16.gmra.mrb[0].mxu0 %v72
  %v168 = vpop.f32.mrb[0].mxu0
  %v169 = vadd.f32 0.0, %v168
  %v170 = vpop.f32.mrb[0].mxu0
  %v171 = vadd.f32 0.0, %v170
  %v172 = vpop.f32.mrb[0].mxu0
  %v173 = vpop.f32.mrb[0].mxu0
  %174 = vdwg.mxu0
  %175 = vmatprep.subr.bf16.mxu0 %v91
  %176 = vmatpush1.bf16.msra.mxu0 %v88
  %177 = vmatprep.subr.bf16.mxu0 0
  %178 = vmatpush1.bf16.msra.mxu0 0
  %179 = vmatprep.subr.bf16.mxu0 0
  %180 = vmatpush1.bf16.msra.mxu0 0
  %181 = vmatprep.subr.bf16.mxu0 0
  %182 = vmatpush1.bf16.msra.mxu0 0
  %183 = vmatprep.subr.bf16.mxu0 0
  %184 = vmatpush1.bf16.msra.mxu0 0
  %185 = vmatprep.subr.bf16.mxu0 0
  %186 = vmatpush1.bf16.msra.mxu0 0
  %187 = vmatprep.subr.bf16.mxu0 0
  %188 = vmatpush1.bf16.msra.mxu0 0
  %189 = vmatprep.subr.bf16.mxu0 0
  %190 = vmatpush1.bf16.msra.mxu0 0
  %191 = vmatprep.subr.bf16.mxu0 0
  %192 = vmatpush1.bf16.msra.mxu0 0
  %193 = vmatprep.subr.bf16.mxu0 0
  %194 = vmatpush1.bf16.msra.mxu0 0
  %195 = vmatprep.subr.bf16.mxu0 0
  %196 = vmatpush1.bf16.msra.mxu0 0
  %197 = vmatprep.subr.bf16.mxu0 0
  %198 = vmatpush1.bf16.msra.mxu0 0
  %199 = vmatprep.subr.bf16.mxu0 0
  %200 = vmatpush1.bf16.msra.mxu0 0
  %201 = vmatprep.subr.bf16.mxu0 0
  %202 = vmatpush1.bf16.msra.mxu0 0
  %203 = vmatprep.subr.bf16.mxu0 0
  %204 = vmatpush1.bf16.msra.mxu0 0
  %205 = vmatprep.subr.bf16.mxu0 0
  %206 = vmatpush1.bf16.msra.mxu0 0
  %207 = vmatprep.mubr.bf16.mxu0 0
  %208 = vmatmul.mubr.bf16.gmra.mrb[0].mxu0 %v72
  %v209 = vpop.f32.mrb[0].mxu0
  %v210 = vadd.f32 0.0, %v209
  %v211 = vpop.f32.mrb[0].mxu0
  %v212 = vadd.f32 0.0, %v211
  %v213 = vpop.f32.mrb[0].mxu0
  %v214 = vpop.f32.mrb[0].mxu0
  %215 = vdwg.mxu0
  %216 = vst [vmem:[#allocation2] sm:$0xff] %v128
  %217 = vst [vmem:[#allocation2 + $0x8] sm:$0xff] %v130
  %218 = vst [vmem:[#allocation2 + $0x10] sm:$0xff] %v169
  %219 = vst [vmem:[#allocation2 + $0x18] sm:$0xff] %v171
  %220 = vst [vmem:[#allocation2 + $0x20] sm:$0xff] %v210
  %vm221 = vcmask 64512
  %222 = vst.msk [vmem:[#allocation2 + $0x28] sm:$0xff] %vm221, %v212
  %s223 = scalar_lea.vmem %s3, 4
  %v224 = vld [vmem:[%s223] sm:$0xf]
  %225 = vrot.lane.b32.xlu0 %v52, 127
  %v226 = vpop.permute.xlu0 %225
  %227 = vrot.lane.b32.xlu0 %v60, 127
  %v228 = vpop.permute.xlu0 %227
  %229 = vrot.lane.b32.xlu0 %v59, 127
  %v230 = vpop.permute.xlu0 %229
  %231 = vrot.lane.b32.xlu0 %v61, 127
  %v232 = vpop.permute.xlu0 %231
  %233 = vrot.lane.b32.xlu0 %v68, 127
  %v234 = vpop.permute.xlu0 %233
  %235 = vrot.lane.b32.xlu0 %v69, 127
  %v236 = vpop.permute.xlu0 %235
  %vm237 = vcmask 1039360
  %v238 = vsel %vm237, %v226, %v228
  %v239 = vsel %vm237, %v228, %v230
  %v240 = vsel %vm237, %v230, %v232
  %v241 = vsel %vm237, %v232, %v234
  %v242 = vsel %vm237, %v234, %v236
  %v244 = vsel %vm70, %v224, 0
  %v247 = vsel %vm74, %v238, 0
  %v250 = vsel %vm74, %v239, 0
  %v253 = vsel %vm74, %v240, 0
  %v256 = vsel %vm74, %v241, 0
  %v259 = vsel %vm74, %v242, 0
  %v262 = vsel %vm74, %v236, 0
  %264 = vmatprep.subr.bf16.mxu0 %v250
  %265 = vmatpush1.bf16.msra.mxu0 %v247
  %266 = vmatprep.subr.bf16.mxu0 0
  %267 = vmatpush1.bf16.msra.mxu0 0
  %268 = vmatprep.subr.bf16.mxu0 0
  %269 = vmatpush1.bf16.msra.mxu0 0
  %270 = vmatprep.subr.bf16.mxu0 0
  %271 = vmatpush1.bf16.msra.mxu0 0
  %272 = vmatprep.subr.bf16.mxu0 0
  %273 = vmatpush1.bf16.msra.mxu0 0
  %274 = vmatprep.subr.bf16.mxu0 0
  %275 = vmatpush1.bf16.msra.mxu0 0
  %276 = vmatprep.subr.bf16.mxu0 0
  %277 = vmatpush1.bf16.msra.mxu0 0
  %278 = vmatprep.subr.bf16.mxu0 0
  %279 = vmatpush1.bf16.msra.mxu0 0
  %280 = vmatprep.subr.bf16.mxu0 0
  %281 = vmatpush1.bf16.msra.mxu0 0
  %282 = vmatprep.subr.bf16.mxu0 0
  %283 = vmatpush1.bf16.msra.mxu0 0
  %284 = vmatprep.subr.bf16.mxu0 0
  %285 = vmatpush1.bf16.msra.mxu0 0
  %286 = vmatprep.subr.bf16.mxu0 0
  %287 = vmatpush1.bf16.msra.mxu0 0
  %288 = vmatprep.subr.bf16.mxu0 0
  %289 = vmatpush1.bf16.msra.mxu0 0
  %290 = vmatprep.subr.bf16.mxu0 0
  %291 = vmatpush1.bf16.msra.mxu0 0
  %292 = vmatprep.subr.bf16.mxu0 0
  %293 = vmatpush1.bf16.msra.mxu0 0
  %294 = vmatprep.subr.bf16.mxu0 0
  %295 = vmatpush1.bf16.msra.mxu0 0
  %296 = vmatprep.mubr.bf16.mxu0 0
  %297 = vmatmul.mubr.bf16.gmra.mrb[0].mxu0 %v244
  %v298 = vpop.f32.mrb[0].mxu0
  %v299 = vadd.f32 0.0, %v298
  %v300 = vpop.f32.mrb[0].mxu0
  %v301 = vadd.f32 0.0, %v300
  %v302 = vpop.f32.mrb[0].mxu0
  %v303 = vpop.f32.mrb[0].mxu0
  %304 = vdwg.mxu0
  %305 = vmatprep.subr.bf16.mxu0 %v256
  %306 = vmatpush1.bf16.msra.mxu0 %v253
  %307 = vmatprep.subr.bf16.mxu0 0
  %308 = vmatpush1.bf16.msra.mxu0 0
  %309 = vmatprep.subr.bf16.mxu0 0
  %310 = vmatpush1.bf16.msra.mxu0 0
  %311 = vmatprep.subr.bf16.mxu0 0
  %312 = vmatpush1.bf16.msra.mxu0 0
  %313 = vmatprep.subr.bf16.mxu0 0
  %314 = vmatpush1.bf16.msra.mxu0 0
  %315 = vmatprep.subr.bf16.mxu0 0
  %316 = vmatpush1.bf16.msra.mxu0 0
  %317 = vmatprep.subr.bf16.mxu0 0
  %318 = vmatpush1.bf16.msra.mxu0 0
  %319 = vmatprep.subr.bf16.mxu0 0
  %320 = vmatpush1.bf16.msra.mxu0 0
  %321 = vmatprep.subr.bf16.mxu0 0
  %322 = vmatpush1.bf16.msra.mxu0 0
  %323 = vmatprep.subr.bf16.mxu0 0
  %324 = vmatpush1.bf16.msra.mxu0 0
  %325 = vmatprep.subr.bf16.mxu0 0
  %326 = vmatpush1.bf16.msra.mxu0 0
  %327 = vmatprep.subr.bf16.mxu0 0
  %328 = vmatpush1.bf16.msra.mxu0 0
  %329 = vmatprep.subr.bf16.mxu0 0
  %330 = vmatpush1.bf16.msra.mxu0 0
  %331 = vmatprep.subr.bf16.mxu0 0
  %332 = vmatpush1.bf16.msra.mxu0 0
  %333 = vmatprep.subr.bf16.mxu0 0
  %334 = vmatpush1.bf16.msra.mxu0 0
  %335 = vmatprep.subr.bf16.mxu0 0
  %336 = vmatpush1.bf16.msra.mxu0 0
  %337 = vmatprep.mubr.bf16.mxu0 0
  %338 = vmatmul.mubr.bf16.gmra.mrb[0].mxu0 %v244
  %v339 = vpop.f32.mrb[0].mxu0
  %v340 = vadd.f32 0.0, %v339
  %v341 = vpop.f32.mrb[0].mxu0
  %v342 = vadd.f32 0.0, %v341
  %v343 = vpop.f32.mrb[0].mxu0
  %v344 = vpop.f32.mrb[0].mxu0
  %345 = vdwg.mxu0
  %346 = vmatprep.subr.bf16.mxu0 %v262
  %347 = vmatpush1.bf16.msra.mxu0 %v259
  %348 = vmatprep.subr.bf16.mxu0 0
  %349 = vmatpush1.bf16.msra.mxu0 0
  %350 = vmatprep.subr.bf16.mxu0 0
  %351 = vmatpush1.bf16.msra.mxu0 0
  %352 = vmatprep.subr.bf16.mxu0 0
  %353 = vmatpush1.bf16.msra.mxu0 0
  %354 = vmatprep.subr.bf16.mxu0 0
  %355 = vmatpush1.bf16.msra.mxu0 0
  %356 = vmatprep.subr.bf16.mxu0 0
  %357 = vmatpush1.bf16.msra.mxu0 0
  %358 = vmatprep.subr.bf16.mxu0 0
  %359 = vmatpush1.bf16.msra.mxu0 0
  %360 = vmatprep.subr.bf16.mxu0 0
  %361 = vmatpush1.bf16.msra.mxu0 0
  %362 = vmatprep.subr.bf16.mxu0 0
  %363 = vmatpush1.bf16.msra.mxu0 0
  %364 = vmatprep.subr.bf16.mxu0 0
  %365 = vmatpush1.bf16.msra.mxu0 0
  %366 = vmatprep.subr.bf16.mxu0 0
  %367 = vmatpush1.bf16.msra.mxu0 0
  %368 = vmatprep.subr.bf16.mxu0 0
  %369 = vmatpush1.bf16.msra.mxu0 0
  %370 = vmatprep.subr.bf16.mxu0 0
  %371 = vmatpush1.bf16.msra.mxu0 0
  %372 = vmatprep.subr.bf16.mxu0 0
  %373 = vmatpush1.bf16.msra.mxu0 0
  %374 = vmatprep.subr.bf16.mxu0 0
  %375 = vmatpush1.bf16.msra.mxu0 0
  %376 = vmatprep.subr.bf16.mxu0 0
  %377 = vmatpush1.bf16.msra.mxu0 0
  %378 = vmatprep.mubr.bf16.mxu0 0
  %379 = vmatmul.mubr.bf16.gmra.mrb[0].mxu0 %v244
  %v380 = vpop.f32.mrb[0].mxu0
  %v381 = vadd.f32 0.0, %v380
  %v382 = vpop.f32.mrb[0].mxu0
  %v383 = vadd.f32 0.0, %v382
  %v384 = vpop.f32.mrb[0].mxu0
  %v385 = vpop.f32.mrb[0].mxu0
  %386 = vdwg.mxu0
  %v387 = vld [vmem:[#allocation2] sm:$0xff]
  %v388 = vld [vmem:[#allocation2 + $0x8] sm:$0xff]
  %v389 = vld [vmem:[#allocation2 + $0x10] sm:$0xff]
  %v390 = vld [vmem:[#allocation2 + $0x18] sm:$0xff]
  %v391 = vld [vmem:[#allocation2 + $0x20] sm:$0xff]
  %v392 = vld [vmem:[#allocation2 + $0x28] sm:$0xff]
  %v393 = vadd.f32 %v387, %v299
  %v394 = vadd.f32 %v388, %v301
  %v395 = vadd.f32 %v389, %v340
  %v396 = vadd.f32 %v390, %v342
  %v397 = vadd.f32 %v391, %v381
  %v398 = vadd.f32 %v392, %v383
  %399 = vst [vmem:[#allocation2] sm:$0xff] %v393
  %400 = vst [vmem:[#allocation2 + $0x8] sm:$0xff] %v394
  %401 = vst [vmem:[#allocation2 + $0x10] sm:$0xff] %v395
  %402 = vst [vmem:[#allocation2 + $0x18] sm:$0xff] %v396
  %403 = vst [vmem:[#allocation2 + $0x20] sm:$0xff] %v397
  %404 = vst.msk [vmem:[#allocation2 + $0x28] sm:$0xff] %vm221, %v398
  %s405 = scalar_lea.vmem %s3, 8
  %v406 = vld [vmem:[%s405] sm:$0xf]
  %407 = vrot.lane.b32.xlu0 %v52, 126
  %v408 = vpop.permute.xlu0 %407
  %409 = vrot.lane.b32.xlu0 %v60, 126
  %v410 = vpop.permute.xlu0 %409
  %411 = vrot.lane.b32.xlu0 %v59, 126
  %v412 = vpop.permute.xlu0 %411
  %413 = vrot.lane.b32.xlu0 %v61, 126
  %v414 = vpop.permute.xlu0 %413
  %415 = vrot.lane.b32.xlu0 %v68, 126
  %v416 = vpop.permute.xlu0 %415
  %417 = vrot.lane.b32.xlu0 %v69, 126
  %v418 = vpop.permute.xlu0 %417
  %vm419 = vcmask 1031168
  %v420 = vsel %vm419, %v408, %v410
  %v421 = vsel %vm419, %v410, %v412
  %v422 = vsel %vm419, %v412, %v414
  %v423 = vsel %vm419, %v414, %v416
  %v424 = vsel %vm419, %v416, %v418
  %v426 = vsel %vm70, %v406, 0
  %v429 = vsel %vm74, %v420, 0
  %v432 = vsel %vm74, %v421, 0
  %v435 = vsel %vm74, %v422, 0
  %v438 = vsel %vm74, %v423, 0
  %v441 = vsel %vm74, %v424, 0
  %v444 = vsel %vm74, %v418, 0
  %446 = vmatprep.subr.bf16.mxu0 %v432
  %447 = vmatpush1.bf16.msra.mxu0 %v429
  %448 = vmatprep.subr.bf16.mxu0 0
  %449 = vmatpush1.bf16.msra.mxu0 0
  %450 = vmatprep.subr.bf16.mxu0 0
  %451 = vmatpush1.bf16.msra.mxu0 0
  %452 = vmatprep.subr.bf16.mxu0 0
  %453 = vmatpush1.bf16.msra.mxu0 0
  %454 = vmatprep.subr.bf16.mxu0 0
  %455 = vmatpush1.bf16.msra.mxu0 0
  %456 = vmatprep.subr.bf16.mxu0 0
  %457 = vmatpush1.bf16.msra.mxu0 0
  %458 = vmatprep.subr.bf16.mxu0 0
  %459 = vmatpush1.bf16.msra.mxu0 0
  %460 = vmatprep.subr.bf16.mxu0 0
  %461 = vmatpush1.bf16.msra.mxu0 0
  %462 = vmatprep.subr.bf16.mxu0 0
  %463 = vmatpush1.bf16.msra.mxu0 0
  %464 = vmatprep.subr.bf16.mxu0 0
  %465 = vmatpush1.bf16.msra.mxu0 0
  %466 = vmatprep.subr.bf16.mxu0 0
  %467 = vmatpush1.bf16.msra.mxu0 0
  %468 = vmatprep.subr.bf16.mxu0 0
  %469 = vmatpush1.bf16.msra.mxu0 0
  %470 = vmatprep.subr.bf16.mxu0 0
  %471 = vmatpush1.bf16.msra.mxu0 0
  %472 = vmatprep.subr.bf16.mxu0 0
  %473 = vmatpush1.bf16.msra.mxu0 0
  %474 = vmatprep.subr.bf16.mxu0 0
  %475 = vmatpush1.bf16.msra.mxu0 0
  %476 = vmatprep.subr.bf16.mxu0 0
  %477 = vmatpush1.bf16.msra.mxu0 0
  %478 = vmatprep.mubr.bf16.mxu0 0
  %479 = vmatmul.mubr.bf16.gmra.mrb[0].mxu0 %v426
  %v480 = vpop.f32.mrb[0].mxu0
  %v481 = vadd.f32 0.0, %v480
  %v482 = vpop.f32.mrb[0].mxu0
  %v483 = vadd.f32 0.0, %v482
  %v484 = vpop.f32.mrb[0].mxu0
  %v485 = vpop.f32.mrb[0].mxu0
  %486 = vdwg.mxu0
  %487 = vmatprep.subr.bf16.mxu0 %v438
  %488 = vmatpush1.bf16.msra.mxu0 %v435
  %489 = vmatprep.subr.bf16.mxu0 0
  %490 = vmatpush1.bf16.msra.mxu0 0
  %491 = vmatprep.subr.bf16.mxu0 0
  %492 = vmatpush1.bf16.msra.mxu0 0
  %493 = vmatprep.subr.bf16.mxu0 0
  %494 = vmatpush1.bf16.msra.mxu0 0
  %495 = vmatprep.subr.bf16.mxu0 0
  %496 = vmatpush1.bf16.msra.mxu0 0
  %497 = vmatprep.subr.bf16.mxu0 0
  %498 = vmatpush1.bf16.msra.mxu0 0
  %499 = vmatprep.subr.bf16.mxu0 0
  %500 = vmatpush1.bf16.msra.mxu0 0
  %501 = vmatprep.subr.bf16.mxu0 0
  %502 = vmatpush1.bf16.msra.mxu0 0
  %503 = vmatprep.subr.bf16.mxu0 0
  %504 = vmatpush1.bf16.msra.mxu0 0
  %505 = vmatprep.subr.bf16.mxu0 0
  %506 = vmatpush1.bf16.msra.mxu0 0
  %507 = vmatprep.subr.bf16.mxu0 0
  %508 = vmatpush1.bf16.msra.mxu0 0
  %509 = vmatprep.subr.bf16.mxu0 0
  %510 = vmatpush1.bf16.msra.mxu0 0
  %511 = vmatprep.subr.bf16.mxu0 0
  %512 = vmatpush1.bf16.msra.mxu0 0
  %513 = vmatprep.subr.bf16.mxu0 0
  %514 = vmatpush1.bf16.msra.mxu0 0
  %515 = vmatprep.subr.bf16.mxu0 0
  %516 = vmatpush1.bf16.msra.mxu0 0
  %517 = vmatprep.subr.bf16.mxu0 0
  %518 = vmatpush1.bf16.msra.mxu0 0
  %519 = vmatprep.mubr.bf16.mxu0 0
  %520 = vmatmul.mubr.bf16.gmra.mrb[0].mxu0 %v426
  %v521 = vpop.f32.mrb[0].mxu0
  %v522 = vadd.f32 0.0, %v521
  %v523 = vpop.f32.mrb[0].mxu0
  %v524 = vadd.f32 0.0, %v523
  %v525 = vpop.f32.mrb[0].mxu0
  %v526 = vpop.f32.mrb[0].mxu0
  %527 = vdwg.mxu0
  %528 = vmatprep.subr.bf16.mxu0 %v444
  %529 = vmatpush1.bf16.msra.mxu0 %v441
  %530 = vmatprep.subr.bf16.mxu0 0
  %531 = vmatpush1.bf16.msra.mxu0 0
  %532 = vmatprep.subr.bf16.mxu0 0
  %533 = vmatpush1.bf16.msra.mxu0 0
  %534 = vmatprep.subr.bf16.mxu0 0
  %535 = vmatpush1.bf16.msra.mxu0 0
  %536 = vmatprep.subr.bf16.mxu0 0
  %537 = vmatpush1.bf16.msra.mxu0 0
  %538 = vmatprep.subr.bf16.mxu0 0
  %539 = vmatpush1.bf16.msra.mxu0 0
  %540 = vmatprep.subr.bf16.mxu0 0
  %541 = vmatpush1.bf16.msra.mxu0 0
  %542 = vmatprep.subr.bf16.mxu0 0
  %543 = vmatpush1.bf16.msra.mxu0 0
  %544 = vmatprep.subr.bf16.mxu0 0
  %545 = vmatpush1.bf16.msra.mxu0 0
  %546 = vmatprep.subr.bf16.mxu0 0
  %547 = vmatpush1.bf16.msra.mxu0 0
  %548 = vmatprep.subr.bf16.mxu0 0
  %549 = vmatpush1.bf16.msra.mxu0 0
  %550 = vmatprep.subr.bf16.mxu0 0
  %551 = vmatpush1.bf16.msra.mxu0 0
  %552 = vmatprep.subr.bf16.mxu0 0
  %553 = vmatpush1.bf16.msra.mxu0 0
  %554 = vmatprep.subr.bf16.mxu0 0
  %555 = vmatpush1.bf16.msra.mxu0 0
  %556 = vmatprep.subr.bf16.mxu0 0
  %557 = vmatpush1.bf16.msra.mxu0 0
  %558 = vmatprep.subr.bf16.mxu0 0
  %559 = vmatpush1.bf16.msra.mxu0 0
  %560 = vmatprep.mubr.bf16.mxu0 0
  %561 = vmatmul.mubr.bf16.gmra.mrb[0].mxu0 %v426
  %v562 = vpop.f32.mrb[0].mxu0
  %v563 = vadd.f32 0.0, %v562
  %v564 = vpop.f32.mrb[0].mxu0
  %v565 = vadd.f32 0.0, %v564
  %v566 = vpop.f32.mrb[0].mxu0
  %v567 = vpop.f32.mrb[0].mxu0
  %568 = vdwg.mxu0
  %v569 = vld [vmem:[#allocation2] sm:$0xff]
  %v570 = vld [vmem:[#allocation2 + $0x8] sm:$0xff]
  %v571 = vld [vmem:[#allocation2 + $0x10] sm:$0xff]
  %v572 = vld [vmem:[#allocation2 + $0x18] sm:$0xff]
  %v573 = vld [vmem:[#allocation2 + $0x20] sm:$0xff]
  %v574 = vld [vmem:[#allocation2 + $0x28] sm:$0xff]
  %v575 = vadd.f32 %v569, %v481
  %v576 = vadd.f32 %v570, %v483
  %v577 = vadd.f32 %v571, %v522
  %v578 = vadd.f32 %v572, %v524
  %v579 = vadd.f32 %v573, %v563
  %v580 = vadd.f32 %v574, %v565
  %581 = vst [vmem:[#allocation2] sm:$0xff] %v575
  %582 = vst [vmem:[#allocation2 + $0x8] sm:$0xff] %v576
  %583 = vst [vmem:[#allocation2 + $0x10] sm:$0xff] %v577
  %584 = vst [vmem:[#allocation2 + $0x18] sm:$0xff] %v578
  %585 = vst [vmem:[#allocation2 + $0x20] sm:$0xff] %v579
  %586 = vst.msk [vmem:[#allocation2 + $0x28] sm:$0xff] %vm221, %v580
  %s587 = scalar_lea.vmem %s3, 12
  %v588 = vld [vmem:[%s587] sm:$0xf]
  %589 = vrot.lane.b32.xlu0 %v52, 110
  %v590 = vpop.permute.xlu0 %589
  %591 = vrot.lane.b32.xlu0 %v60, 110
  %v592 = vpop.permute.xlu0 %591
  %593 = vrot.lane.b32.xlu0 %v59, 110
  %v594 = vpop.permute.xlu0 %593
  %595 = vrot.lane.b32.xlu0 %v61, 110
  %v596 = vpop.permute.xlu0 %595
  %597 = vrot.lane.b32.xlu0 %v68, 110
  %v598 = vpop.permute.xlu0 %597
  %599 = vrot.lane.b32.xlu0 %v69, 110
  %v600 = vpop.permute.xlu0 %599
  %vm601 = vcmask 900096
  %v602 = vsel %vm601, %v590, %v592
  %v603 = vsel %vm601, %v592, %v594
  %v604 = vsel %vm601, %v594, %v596
  %v605 = vsel %vm601, %v596, %v598
  %v606 = vsel %vm601, %v598, %v600
  %v608 = vsel %vm70, %v588, 0
  %v611 = vsel %vm74, %v602, 0
  %v614 = vsel %vm74, %v603, 0
  %v617 = vsel %vm74, %v604, 0
  %v620 = vsel %vm74, %v605, 0
  %v623 = vsel %vm74, %v606, 0
  %v626 = vsel %vm74, %v600, 0
  %628 = vmatprep.subr.bf16.mxu0 %v614
  %629 = vmatpush1.bf16.msra.mxu0 %v611
  %630 = vmatprep.subr.bf16.mxu0 0
  %631 = vmatpush1.bf16.msra.mxu0 0
  %632 = vmatprep.subr.bf16.mxu0 0
  %633 = vmatpush1.bf16.msra.mxu0 0
  %634 = vmatprep.subr.bf16.mxu0 0
  %635 = vmatpush1.bf16.msra.mxu0 0
  %636 = vmatprep.subr.bf16.mxu0 0
  %637 = vmatpush1.bf16.msra.mxu0 0
  %638 = vmatprep.subr.bf16.mxu0 0
  %639 = vmatpush1.bf16.msra.mxu0 0
  %640 = vmatprep.subr.bf16.mxu0 0
  %641 = vmatpush1.bf16.msra.mxu0 0
  %642 = vmatprep.subr.bf16.mxu0 0
  %643 = vmatpush1.bf16.msra.mxu0 0
  %644 = vmatprep.subr.bf16.mxu0 0
  %645 = vmatpush1.bf16.msra.mxu0 0
  %646 = vmatprep.subr.bf16.mxu0 0
  %647 = vmatpush1.bf16.msra.mxu0 0
  %648 = vmatprep.subr.bf16.mxu0 0
  %649 = vmatpush1.bf16.msra.mxu0 0
  %650 = vmatprep.subr.bf16.mxu0 0
  %651 = vmatpush1.bf16.msra.mxu0 0
  %652 = vmatprep.subr.bf16.mxu0 0
  %653 = vmatpush1.bf16.msra.mxu0 0
  %654 = vmatprep.subr.bf16.mxu0 0
  %655 = vmatpush1.bf16.msra.mxu0 0
  %656 = vmatprep.subr.bf16.mxu0 0
  %657 = vmatpush1.bf16.msra.mxu0 0
  %658 = vmatprep.subr.bf16.mxu0 0
  %659 = vmatpush1.bf16.msra.mxu0 0
  %660 = vmatprep.mubr.bf16.mxu0 0
  %661 = vmatmul.mubr.bf16.gmra.mrb[0].mxu0 %v608
  %v662 = vpop.f32.mrb[0].mxu0
  %v663 = vadd.f32 0.0, %v662
  %v664 = vpop.f32.mrb[0].mxu0
  %v665 = vadd.f32 0.0, %v664
  %v666 = vpop.f32.mrb[0].mxu0
  %v667 = vpop.f32.mrb[0].mxu0
  %668 = vdwg.mxu0
  %669 = vmatprep.subr.bf16.mxu0 %v620
  %670 = vmatpush1.bf16.msra.mxu0 %v617
  %671 = vmatprep.subr.bf16.mxu0 0
  %672 = vmatpush1.bf16.msra.mxu0 0
  %673 = vmatprep.subr.bf16.mxu0 0
  %674 = vmatpush1.bf16.msra.mxu0 0
  %675 = vmatprep.subr.bf16.mxu0 0
  %676 = vmatpush1.bf16.msra.mxu0 0
  %677 = vmatprep.subr.bf16.mxu0 0
  %678 = vmatpush1.bf16.msra.mxu0 0
  %679 = vmatprep.subr.bf16.mxu0 0
  %680 = vmatpush1.bf16.msra.mxu0 0
  %681 = vmatprep.subr.bf16.mxu0 0
  %682 = vmatpush1.bf16.msra.mxu0 0
  %683 = vmatprep.subr.bf16.mxu0 0
  %684 = vmatpush1.bf16.msra.mxu0 0
  %685 = vmatprep.subr.bf16.mxu0 0
  %686 = vmatpush1.bf16.msra.mxu0 0
  %687 = vmatprep.subr.bf16.mxu0 0
  %688 = vmatpush1.bf16.msra.mxu0 0
  %689 = vmatprep.subr.bf16.mxu0 0
  %690 = vmatpush1.bf16.msra.mxu0 0
  %691 = vmatprep.subr.bf16.mxu0 0
  %692 = vmatpush1.bf16.msra.mxu0 0
  %693 = vmatprep.subr.bf16.mxu0 0
  %694 = vmatpush1.bf16.msra.mxu0 0
  %695 = vmatprep.subr.bf16.mxu0 0
  %696 = vmatpush1.bf16.msra.mxu0 0
  %697 = vmatprep.subr.bf16.mxu0 0
  %698 = vmatpush1.bf16.msra.mxu0 0
  %699 = vmatprep.subr.bf16.mxu0 0
  %700 = vmatpush1.bf16.msra.mxu0 0
  %701 = vmatprep.mubr.bf16.mxu0 0
  %702 = vmatmul.mubr.bf16.gmra.mrb[0].mxu0 %v608
  %v703 = vpop.f32.mrb[0].mxu0
  %v704 = vadd.f32 0.0, %v703
  %v705 = vpop.f32.mrb[0].mxu0
  %v706 = vadd.f32 0.0, %v705
  %v707 = vpop.f32.mrb[0].mxu0
  %v708 = vpop.f32.mrb[0].mxu0
  %709 = vdwg.mxu0
  %710 = vmatprep.subr.bf16.mxu0 %v626
  %711 = vmatpush1.bf16.msra.mxu0 %v623
  %712 = vmatprep.subr.bf16.mxu0 0
  %713 = vmatpush1.bf16.msra.mxu0 0
  %714 = vmatprep.subr.bf16.mxu0 0
  %715 = vmatpush1.bf16.msra.mxu0 0
  %716 = vmatprep.subr.bf16.mxu0 0
  %717 = vmatpush1.bf16.msra.mxu0 0
  %718 = vmatprep.subr.bf16.mxu0 0
  %719 = vmatpush1.bf16.msra.mxu0 0
  %720 = vmatprep.subr.bf16.mxu0 0
  %721 = vmatpush1.bf16.msra.mxu0 0
  %722 = vmatprep.subr.bf16.mxu0 0
  %723 = vmatpush1.bf16.msra.mxu0 0
  %724 = vmatprep.subr.bf16.mxu0 0
  %725 = vmatpush1.bf16.msra.mxu0 0
  %726 = vmatprep.subr.bf16.mxu0 0
  %727 = vmatpush1.bf16.msra.mxu0 0
  %728 = vmatprep.subr.bf16.mxu0 0
  %729 = vmatpush1.bf16.msra.mxu0 0
  %730 = vmatprep.subr.bf16.mxu0 0
  %731 = vmatpush1.bf16.msra.mxu0 0
  %732 = vmatprep.subr.bf16.mxu0 0
  %733 = vmatpush1.bf16.msra.mxu0 0
  %734 = vmatprep.subr.bf16.mxu0 0
  %735 = vmatpush1.bf16.msra.mxu0 0
  %736 = vmatprep.subr.bf16.mxu0 0
  %737 = vmatpush1.bf16.msra.mxu0 0
  %738 = vmatprep.subr.bf16.mxu0 0
  %739 = vmatpush1.bf16.msra.mxu0 0
  %740 = vmatprep.subr.bf16.mxu0 0
  %741 = vmatpush1.bf16.msra.mxu0 0
  %742 = vmatprep.mubr.bf16.mxu0 0
  %743 = vmatmul.mubr.bf16.gmra.mrb[0].mxu0 %v608
  %v744 = vpop.f32.mrb[0].mxu0
  %v745 = vadd.f32 0.0, %v744
  %v746 = vpop.f32.mrb[0].mxu0
  %v747 = vadd.f32 0.0, %v746
  %v748 = vpop.f32.mrb[0].mxu0
  %v749 = vpop.f32.mrb[0].mxu0
  %750 = vdwg.mxu0
  %v751 = vld [vmem:[#allocation2] sm:$0xff]
  %v752 = vld [vmem:[#allocation2 + $0x8] sm:$0xff]
  %v753 = vld [vmem:[#allocation2 + $0x10] sm:$0xff]
  %v754 = vld [vmem:[#allocation2 + $0x18] sm:$0xff]
  %v755 = vld [vmem:[#allocation2 + $0x20] sm:$0xff]
  %v756 = vld [vmem:[#allocation2 + $0x28] sm:$0xff]
  %v757 = vadd.f32 %v751, %v663
  %v758 = vadd.f32 %v752, %v665
  %v759 = vadd.f32 %v753, %v704
  %v760 = vadd.f32 %v754, %v706
  %v761 = vadd.f32 %v755, %v745
  %v762 = vadd.f32 %v756, %v747
  %763 = vst [vmem:[#allocation2] sm:$0xff] %v757
  %764 = vst [vmem:[#allocation2 + $0x8] sm:$0xff] %v758
  %765 = vst [vmem:[#allocation2 + $0x10] sm:$0xff] %v759
  %766 = vst [vmem:[#allocation2 + $0x18] sm:$0xff] %v760
  %767 = vst [vmem:[#allocation2 + $0x20] sm:$0xff] %v761
  %768 = vst.msk [vmem:[#allocation2 + $0x28] sm:$0xff] %vm221, %v762
  %s769 = scalar_lea.vmem %s3, 16
  %v770 = vld [vmem:[%s769] sm:$0xf]
  %771 = vrot.lane.b32.xlu0 %v52, 109
  %v772 = vpop.permute.xlu0 %771
  %773 = vrot.lane.b32.xlu0 %v60, 109
  %v774 = vpop.permute.xlu0 %773
  %775 = vrot.lane.b32.xlu0 %v59, 109
  %v776 = vpop.permute.xlu0 %775
  %777 = vrot.lane.b32.xlu0 %v61, 109
  %v778 = vpop.permute.xlu0 %777
  %779 = vrot.lane.b32.xlu0 %v68, 109
  %v780 = vpop.permute.xlu0 %779
  %781 = vrot.lane.b32.xlu0 %v69, 109
  %v782 = vpop.permute.xlu0 %781
  %vm783 = vcmask 891904
  %v784 = vsel %vm783, %v772, %v774
  %v785 = vsel %vm783, %v774, %v776
  %v786 = vsel %vm783, %v776, %v778
  %v787 = vsel %vm783, %v778, %v780
  %v788 = vsel %vm783, %v780, %v782
  %v790 = vsel %vm70, %v770, 0
  %v793 = vsel %vm74, %v784, 0
  %v796 = vsel %vm74, %v785, 0
  %v799 = vsel %vm74, %v786, 0
  %v802 = vsel %vm74, %v787, 0
  %v805 = vsel %vm74, %v788, 0
  %v808 = vsel %vm74, %v782, 0
  %810 = vmatprep.subr.bf16.mxu0 %v796
  %811 = vmatpush1.bf16.msra.mxu0 %v793
  %812 = vmatprep.subr.bf16.mxu0 0
  %813 = vmatpush1.bf16.msra.mxu0 0
  %814 = vmatprep.subr.bf16.mxu0 0
  %815 = vmatpush1.bf16.msra.mxu0 0
  %816 = vmatprep.subr.bf16.mxu0 0
  %817 = vmatpush1.bf16.msra.mxu0 0
  %818 = vmatprep.subr.bf16.mxu0 0
  %819 = vmatpush1.bf16.msra.mxu0 0
  %820 = vmatprep.subr.bf16.mxu0 0
  %821 = vmatpush1.bf16.msra.mxu0 0
  %822 = vmatprep.subr.bf16.mxu0 0
  %823 = vmatpush1.bf16.msra.mxu0 0
  %824 = vmatprep.subr.bf16.mxu0 0
  %825 = vmatpush1.bf16.msra.mxu0 0
  %826 = vmatprep.subr.bf16.mxu0 0
  %827 = vmatpush1.bf16.msra.mxu0 0
  %828 = vmatprep.subr.bf16.mxu0 0
  %829 = vmatpush1.bf16.msra.mxu0 0
  %830 = vmatprep.subr.bf16.mxu0 0
  %831 = vmatpush1.bf16.msra.mxu0 0
  %832 = vmatprep.subr.bf16.mxu0 0
  %833 = vmatpush1.bf16.msra.mxu0 0
  %834 = vmatprep.subr.bf16.mxu0 0
  %835 = vmatpush1.bf16.msra.mxu0 0
  %836 = vmatprep.subr.bf16.mxu0 0
  %837 = vmatpush1.bf16.msra.mxu0 0
  %838 = vmatprep.subr.bf16.mxu0 0
  %839 = vmatpush1.bf16.msra.mxu0 0
  %840 = vmatprep.subr.bf16.mxu0 0
  %841 = vmatpush1.bf16.msra.mxu0 0
  %842 = vmatprep.mubr.bf16.mxu0 0
  %843 = vmatmul.mubr.bf16.gmra.mrb[0].mxu0 %v790
  %v844 = vpop.f32.mrb[0].mxu0
  %v845 = vadd.f32 0.0, %v844
  %v846 = vpop.f32.mrb[0].mxu0
  %v847 = vadd.f32 0.0, %v846
  %v848 = vpop.f32.mrb[0].mxu0
  %v849 = vpop.f32.mrb[0].mxu0
  %850 = vdwg.mxu0
  %851 = vmatprep.subr.bf16.mxu0 %v802
  %852 = vmatpush1.bf16.msra.mxu0 %v799
  %853 = vmatprep.subr.bf16.mxu0 0
  %854 = vmatpush1.bf16.msra.mxu0 0
  %855 = vmatprep.subr.bf16.mxu0 0
  %856 = vmatpush1.bf16.msra.mxu0 0
  %857 = vmatprep.subr.bf16.mxu0 0
  %858 = vmatpush1.bf16.msra.mxu0 0
  %859 = vmatprep.subr.bf16.mxu0 0
  %860 = vmatpush1.bf16.msra.mxu0 0
  %861 = vmatprep.subr.bf16.mxu0 0
  %862 = vmatpush1.bf16.msra.mxu0 0
  %863 = vmatprep.subr.bf16.mxu0 0
  %864 = vmatpush1.bf16.msra.mxu0 0
  %865 = vmatprep.subr.bf16.mxu0 0
  %866 = vmatpush1.bf16.msra.mxu0 0
  %867 = vmatprep.subr.bf16.mxu0 0
  %868 = vmatpush1.bf16.msra.mxu0 0
  %869 = vmatprep.subr.bf16.mxu0 0
  %870 = vmatpush1.bf16.msra.mxu0 0
  %871 = vmatprep.subr.bf16.mxu0 0
  %872 = vmatpush1.bf16.msra.mxu0 0
  %873 = vmatprep.subr.bf16.mxu0 0
  %874 = vmatpush1.bf16.msra.mxu0 0
  %875 = vmatprep.subr.bf16.mxu0 0
  %876 = vmatpush1.bf16.msra.mxu0 0
  %877 = vmatprep.subr.bf16.mxu0 0
  %878 = vmatpush1.bf16.msra.mxu0 0
  %879 = vmatprep.subr.bf16.mxu0 0
  %880 = vmatpush1.bf16.msra.mxu0 0
  %881 = vmatprep.subr.bf16.mxu0 0
  %882 = vmatpush1.bf16.msra.mxu0 0
  %883 = vmatprep.mubr.bf16.mxu0 0
  %884 = vmatmul.mubr.bf16.gmra.mrb[0].mxu0 %v790
  %v885 = vpop.f32.mrb[0].mxu0
  %v886 = vadd.f32 0.0, %v885
  %v887 = vpop.f32.mrb[0].mxu0
  %v888 = vadd.f32 0.0, %v887
  %v889 = vpop.f32.mrb[0].mxu0
  %v890 = vpop.f32.mrb[0].mxu0
  %891 = vdwg.mxu0
  %892 = vmatprep.subr.bf16.mxu0 %v808
  %893 = vmatpush1.bf16.msra.mxu0 %v805
  %894 = vmatprep.subr.bf16.mxu0 0
  %895 = vmatpush1.bf16.msra.mxu0 0
  %896 = vmatprep.subr.bf16.mxu0 0
  %897 = vmatpush1.bf16.msra.mxu0 0
  %898 = vmatprep.subr.bf16.mxu0 0
  %899 = vmatpush1.bf16.msra.mxu0 0
  %900 = vmatprep.subr.bf16.mxu0 0
  %901 = vmatpush1.bf16.msra.mxu0 0
  %902 = vmatprep.subr.bf16.mxu0 0
  %903 = vmatpush1.bf16.msra.mxu0 0
  %904 = vmatprep.subr.bf16.mxu0 0
  %905 = vmatpush1.bf16.msra.mxu0 0
  %906 = vmatprep.subr.bf16.mxu0 0
  %907 = vmatpush1.bf16.msra.mxu0 0
  %908 = vmatprep.subr.bf16.mxu0 0
  %909 = vmatpush1.bf16.msra.mxu0 0
  %910 = vmatprep.subr.bf16.mxu0 0
  %911 = vmatpush1.bf16.msra.mxu0 0
  %912 = vmatprep.subr.bf16.mxu0 0
  %913 = vmatpush1.bf16.msra.mxu0 0
  %914 = vmatprep.subr.bf16.mxu0 0
  %915 = vmatpush1.bf16.msra.mxu0 0
  %916 = vmatprep.subr.bf16.mxu0 0
  %917 = vmatpush1.bf16.msra.mxu0 0
  %918 = vmatprep.subr.bf16.mxu0 0
  %919 = vmatpush1.bf16.msra.mxu0 0
  %920 = vmatprep.subr.bf16.mxu0 0
  %921 = vmatpush1.bf16.msra.mxu0 0
  %922 = vmatprep.subr.bf16.mxu0 0
  %923 = vmatpush1.bf16.msra.mxu0 0
  %924 = vmatprep.mubr.bf16.mxu0 0
  %925 = vmatmul.mubr.bf16.gmra.mrb[0].mxu0 %v790
  %v926 = vpop.f32.mrb[0].mxu0
  %v927 = vadd.f32 0.0, %v926
  %v928 = vpop.f32.mrb[0].mxu0
  %v929 = vadd.f32 0.0, %v928
  %v930 = vpop.f32.mrb[0].mxu0
  %v931 = vpop.f32.mrb[0].mxu0
  %932 = vdwg.mxu0
  %v933 = vld [vmem:[#allocation2] sm:$0xff]
  %v934 = vld [vmem:[#allocation2 + $0x8] sm:$0xff]
  %v935 = vld [vmem:[#allocation2 + $0x10] sm:$0xff]
  %v936 = vld [vmem:[#allocation2 + $0x18] sm:$0xff]
  %v937 = vld [vmem:[#allocation2 + $0x20] sm:$0xff]
  %v938 = vld [vmem:[#allocation2 + $0x28] sm:$0xff]
  %v939 = vadd.f32 %v933, %v845
  %v940 = vadd.f32 %v934, %v847
  %v941 = vadd.f32 %v935, %v886
  %v942 = vadd.f32 %v936, %v888
  %v943 = vadd.f32 %v937, %v927
  %v944 = vadd.f32 %v938, %v929
  %945 = vst [vmem:[#allocation2] sm:$0xff] %v939
  %946 = vst [vmem:[#allocation2 + $0x8] sm:$0xff] %v940
  %947 = vst [vmem:[#allocation2 + $0x10] sm:$0xff] %v941
  %948 = vst [vmem:[#allocation2 + $0x18] sm:$0xff] %v942
  %949 = vst [vmem:[#allocation2 + $0x20] sm:$0xff] %v943
  %950 = vst.msk [vmem:[#allocation2 + $0x28] sm:$0xff] %vm221, %v944
  %s951 = scalar_lea.vmem %s3, 20
  %v952 = vld [vmem:[%s951] sm:$0xf]
  %953 = vrot.lane.b32.xlu0 %v52, 108
  %v954 = vpop.permute.xlu0 %953
  %955 = vrot.lane.b32.xlu0 %v60, 108
  %v956 = vpop.permute.xlu0 %955
  %957 = vrot.lane.b32.xlu0 %v59, 108
  %v958 = vpop.permute.xlu0 %957
  %959 = vrot.lane.b32.xlu0 %v61, 108
  %v960 = vpop.permute.xlu0 %959
  %961 = vrot.lane.b32.xlu0 %v68, 108
  %v962 = vpop.permute.xlu0 %961
  %963 = vrot.lane.b32.xlu0 %v69, 108
  %v964 = vpop.permute.xlu0 %963
  %vm965 = vcmask 883712
  %v966 = vsel %vm965, %v954, %v956
  %v967 = vsel %vm965, %v956, %v958
  %v968 = vsel %vm965, %v958, %v960
  %v969 = vsel %vm965, %v960, %v962
  %v970 = vsel %vm965, %v962, %v964
  %v972 = vsel %vm70, %v952, 0
  %v975 = vsel %vm74, %v966, 0
  %v978 = vsel %vm74, %v967, 0
  %v981 = vsel %vm74, %v968, 0
  %v984 = vsel %vm74, %v969, 0
  %v987 = vsel %vm74, %v970, 0
  %v990 = vsel %vm74, %v964, 0
  %992 = vmatprep.subr.bf16.mxu0 %v978
  %993 = vmatpush1.bf16.msra.mxu0 %v975
  %994 = vmatprep.subr.bf16.mxu0 0
  %995 = vmatpush1.bf16.msra.mxu0 0
  %996 = vmatprep.subr.bf16.mxu0 0
  %997 = vmatpush1.bf16.msra.mxu0 0
  %998 = vmatprep.subr.bf16.mxu0 0
  %999 = vmatpush1.bf16.msra.mxu0 0
  %1000 = vmatprep.subr.bf16.mxu0 0
  %1001 = vmatpush1.bf16.msra.mxu0 0
  %1002 = vmatprep.subr.bf16.mxu0 0
  %1003 = vmatpush1.bf16.msra.mxu0 0
  %1004 = vmatprep.subr.bf16.mxu0 0
  %1005 = vmatpush1.bf16.msra.mxu0 0
  %1006 = vmatprep.subr.bf16.mxu0 0
  %1007 = vmatpush1.bf16.msra.mxu0 0
  %1008 = vmatprep.subr.bf16.mxu0 0
  %1009 = vmatpush1.bf16.msra.mxu0 0
  %1010 = vmatprep.subr.bf16.mxu0 0
  %1011 = vmatpush1.bf16.msra.mxu0 0
  %1012 = vmatprep.subr.bf16.mxu0 0
  %1013 = vmatpush1.bf16.msra.mxu0 0
  %1014 = vmatprep.subr.bf16.mxu0 0
  %1015 = vmatpush1.bf16.msra.mxu0 0
  %1016 = vmatprep.subr.bf16.mxu0 0
  %1017 = vmatpush1.bf16.msra.mxu0 0
  %1018 = vmatprep.subr.bf16.mxu0 0
  %1019 = vmatpush1.bf16.msra.mxu0 0
  %1020 = vmatprep.subr.bf16.mxu0 0
  %1021 = vmatpush1.bf16.msra.mxu0 0
  %1022 = vmatprep.subr.bf16.mxu0 0
  %1023 = vmatpush1.bf16.msra.mxu0 0
  %1024 = vmatprep.mubr.bf16.mxu0 0
  %1025 = vmatmul.mubr.bf16.gmra.mrb[0].mxu0 %v972
  %v1026 = vpop.f32.mrb[0].mxu0
  %v1027 = vadd.f32 0.0, %v1026
  %v1028 = vpop.f32.mrb[0].mxu0
  %v1029 = vadd.f32 0.0, %v1028
  %v1030 = vpop.f32.mrb[0].mxu0
  %v1031 = vpop.f32.mrb[0].mxu0
  %1032 = vdwg.mxu0
  %1033 = vmatprep.subr.bf16.mxu0 %v984
  %1034 = vmatpush1.bf16.msra.mxu0 %v981
  %1035 = vmatprep.subr.bf16.mxu0 0
  %1036 = vmatpush1.bf16.msra.mxu0 0
  %1037 = vmatprep.subr.bf16.mxu0 0
  %1038 = vmatpush1.bf16.msra.mxu0 0
  %1039 = vmatprep.subr.bf16.mxu0 0
  %1040 = vmatpush1.bf16.msra.mxu0 0
  %1041 = vmatprep.subr.bf16.mxu0 0
  %1042 = vmatpush1.bf16.msra.mxu0 0
  %1043 = vmatprep.subr.bf16.mxu0 0
  %1044 = vmatpush1.bf16.msra.mxu0 0
  %1045 = vmatprep.subr.bf16.mxu0 0
  %1046 = vmatpush1.bf16.msra.mxu0 0
  %1047 = vmatprep.subr.bf16.mxu0 0
  %1048 = vmatpush1.bf16.msra.mxu0 0
  %1049 = vmatprep.subr.bf16.mxu0 0
  %1050 = vmatpush1.bf16.msra.mxu0 0
  %1051 = vmatprep.subr.bf16.mxu0 0
  %1052 = vmatpush1.bf16.msra.mxu0 0
  %1053 = vmatprep.subr.bf16.mxu0 0
  %1054 = vmatpush1.bf16.msra.mxu0 0
  %1055 = vmatprep.subr.bf16.mxu0 0
  %1056 = vmatpush1.bf16.msra.mxu0 0
  %1057 = vmatprep.subr.bf16.mxu0 0
  %1058 = vmatpush1.bf16.msra.mxu0 0
  %1059 = vmatprep.subr.bf16.mxu0 0
  %1060 = vmatpush1.bf16.msra.mxu0 0
  %1061 = vmatprep.subr.bf16.mxu0 0
  %1062 = vmatpush1.bf16.msra.mxu0 0
  %1063 = vmatprep.subr.bf16.mxu0 0
  %1064 = vmatpush1.bf16.msra.mxu0 0
  %1065 = vmatprep.mubr.bf16.mxu0 0
  %1066 = vmatmul.mubr.bf16.gmra.mrb[0].mxu0 %v972
  %v1067 = vpop.f32.mrb[0].mxu0
  %v1068 = vadd.f32 0.0, %v1067
  %v1069 = vpop.f32.mrb[0].mxu0
  %v1070 = vadd.f32 0.0, %v1069
  %v1071 = vpop.f32.mrb[0].mxu0
  %v1072 = vpop.f32.mrb[0].mxu0
  %1073 = vdwg.mxu0
  %1074 = vmatprep.subr.bf16.mxu0 %v990
  %1075 = vmatpush1.bf16.msra.mxu0 %v987
  %1076 = vmatprep.subr.bf16.mxu0 0
  %1077 = vmatpush1.bf16.msra.mxu0 0
  %1078 = vmatprep.subr.bf16.mxu0 0
  %1079 = vmatpush1.bf16.msra.mxu0 0
  %1080 = vmatprep.subr.bf16.mxu0 0
  %1081 = vmatpush1.bf16.msra.mxu0 0
  %1082 = vmatprep.subr.bf16.mxu0 0
  %1083 = vmatpush1.bf16.msra.mxu0 0
  %1084 = vmatprep.subr.bf16.mxu0 0
  %1085 = vmatpush1.bf16.msra.mxu0 0
  %1086 = vmatprep.subr.bf16.mxu0 0
  %1087 = vmatpush1.bf16.msra.mxu0 0
  %1088 = vmatprep.subr.bf16.mxu0 0
  %1089 = vmatpush1.bf16.msra.mxu0 0
  %1090 = vmatprep.subr.bf16.mxu0 0
  %1091 = vmatpush1.bf16.msra.mxu0 0
  %1092 = vmatprep.subr.bf16.mxu0 0
  %1093 = vmatpush1.bf16.msra.mxu0 0
  %1094 = vmatprep.subr.bf16.mxu0 0
  %1095 = vmatpush1.bf16.msra.mxu0 0
  %1096 = vmatprep.subr.bf16.mxu0 0
  %1097 = vmatpush1.bf16.msra.mxu0 0
  %1098 = vmatprep.subr.bf16.mxu0 0
  %1099 = vmatpush1.bf16.msra.mxu0 0
  %1100 = vmatprep.subr.bf16.mxu0 0
  %1101 = vmatpush1.bf16.msra.mxu0 0
  %1102 = vmatprep.subr.bf16.mxu0 0
  %1103 = vmatpush1.bf16.msra.mxu0 0
  %1104 = vmatprep.subr.bf16.mxu0 0
  %1105 = vmatpush1.bf16.msra.mxu0 0
  %1106 = vmatprep.mubr.bf16.mxu0 0
  %1107 = vmatmul.mubr.bf16.gmra.mrb[0].mxu0 %v972
  %v1108 = vpop.f32.mrb[0].mxu0
  %v1109 = vadd.f32 0.0, %v1108
  %v1110 = vpop.f32.mrb[0].mxu0
  %v1111 = vadd.f32 0.0, %v1110
  %v1112 = vpop.f32.mrb[0].mxu0
  %v1113 = vpop.f32.mrb[0].mxu0
  %1114 = vdwg.mxu0
  %v1115 = vld [vmem:[#allocation2] sm:$0xff]
  %v1116 = vld [vmem:[#allocation2 + $0x8] sm:$0xff]
  %v1117 = vld [vmem:[#allocation2 + $0x10] sm:$0xff]
  %v1118 = vld [vmem:[#allocation2 + $0x18] sm:$0xff]
  %v1119 = vld [vmem:[#allocation2 + $0x20] sm:$0xff]
  %v1120 = vld [vmem:[#allocation2 + $0x28] sm:$0xff]
  %v1121 = vadd.f32 %v1115, %v1027
  %v1122 = vadd.f32 %v1116, %v1029
  %v1123 = vadd.f32 %v1117, %v1068
  %v1124 = vadd.f32 %v1118, %v1070
  %v1125 = vadd.f32 %v1119, %v1109
  %v1126 = vadd.f32 %v1120, %v1111
  %1127 = vst [vmem:[#allocation2] sm:$0xff] %v1121
  %1128 = vst [vmem:[#allocation2 + $0x8] sm:$0xff] %v1122
  %1129 = vst [vmem:[#allocation2 + $0x10] sm:$0xff] %v1123
  %1130 = vst [vmem:[#allocation2 + $0x18] sm:$0xff] %v1124
  %1131 = vst [vmem:[#allocation2 + $0x20] sm:$0xff] %v1125
  %1132 = vst.msk [vmem:[#allocation2 + $0x28] sm:$0xff] %vm221, %v1126
  %s1133 = scalar_lea.vmem %s3, 24
  %v1134 = vld [vmem:[%s1133] sm:$0xf]
  %1135 = vrot.lane.b32.xlu0 %v52, 92
  %v1136 = vpop.permute.xlu0 %1135
  %1137 = vrot.lane.b32.xlu0 %v60, 92
  %v1138 = vpop.permute.xlu0 %1137
  %1139 = vrot.lane.b32.xlu0 %v59, 92
  %v1140 = vpop.permute.xlu0 %1139
  %1141 = vrot.lane.b32.xlu0 %v61, 92
  %v1142 = vpop.permute.xlu0 %1141
  %1143 = vrot.lane.b32.xlu0 %v68, 92
  %v1144 = vpop.permute.xlu0 %1143
  %1145 = vrot.lane.b32.xlu0 %v69, 92
  %v1146 = vpop.permute.xlu0 %1145
  %vm1147 = vcmask 752640
  %v1148 = vsel %vm1147, %v1136, %v1138
  %v1149 = vsel %vm1147, %v1138, %v1140
  %v1150 = vsel %vm1147, %v1140, %v1142
  %v1151 = vsel %vm1147, %v1142, %v1144
  %v1152 = vsel %vm1147, %v1144, %v1146
  %v1154 = vsel %vm70, %v1134, 0
  %v1157 = vsel %vm74, %v1148, 0
  %v1160 = vsel %vm74, %v1149, 0
  %v1163 = vsel %vm74, %v1150, 0
  %v1166 = vsel %vm74, %v1151, 0
  %v1169 = vsel %vm74, %v1152, 0
  %v1172 = vsel %vm74, %v1146, 0
  %1174 = vmatprep.subr.bf16.mxu0 %v1160
  %1175 = vmatpush1.bf16.msra.mxu0 %v1157
  %1176 = vmatprep.subr.bf16.mxu0 0
  %1177 = vmatpush1.bf16.msra.mxu0 0
  %1178 = vmatprep.subr.bf16.mxu0 0
  %1179 = vmatpush1.bf16.msra.mxu0 0
  %1180 = vmatprep.subr.bf16.mxu0 0
  %1181 = vmatpush1.bf16.msra.mxu0 0
  %1182 = vmatprep.subr.bf16.mxu0 0
  %1183 = vmatpush1.bf16.msra.mxu0 0
  %1184 = vmatprep.subr.bf16.mxu0 0
  %1185 = vmatpush1.bf16.msra.mxu0 0
  %1186 = vmatprep.subr.bf16.mxu0 0
  %1187 = vmatpush1.bf16.msra.mxu0 0
  %1188 = vmatprep.subr.bf16.mxu0 0
  %1189 = vmatpush1.bf16.msra.mxu0 0
  %1190 = vmatprep.subr.bf16.mxu0 0
  %1191 = vmatpush1.bf16.msra.mxu0 0
  %1192 = vmatprep.subr.bf16.mxu0 0
  %1193 = vmatpush1.bf16.msra.mxu0 0
  %1194 = vmatprep.subr.bf16.mxu0 0
  %1195 = vmatpush1.bf16.msra.mxu0 0
  %1196 = vmatprep.subr.bf16.mxu0 0
  %1197 = vmatpush1.bf16.msra.mxu0 0
  %1198 = vmatprep.subr.bf16.mxu0 0
  %1199 = vmatpush1.bf16.msra.mxu0 0
  %1200 = vmatprep.subr.bf16.mxu0 0
  %1201 = vmatpush1.bf16.msra.mxu0 0
  %1202 = vmatprep.subr.bf16.mxu0 0
  %1203 = vmatpush1.bf16.msra.mxu0 0
  %1204 = vmatprep.subr.bf16.mxu0 0
  %1205 = vmatpush1.bf16.msra.mxu0 0
  %1206 = vmatprep.mubr.bf16.mxu0 0
  %1207 = vmatmul.mubr.bf16.gmra.mrb[0].mxu0 %v1154
  %v1208 = vpop.f32.mrb[0].mxu0
  %v1209 = vadd.f32 0.0, %v1208
  %v1210 = vpop.f32.mrb[0].mxu0
  %v1211 = vadd.f32 0.0, %v1210
  %v1212 = vpop.f32.mrb[0].mxu0
  %v1213 = vpop.f32.mrb[0].mxu0
  %1214 = vdwg.mxu0
  %1215 = vmatprep.subr.bf16.mxu0 %v1166
  %1216 = vmatpush1.bf16.msra.mxu0 %v1163
  %1217 = vmatprep.subr.bf16.mxu0 0
  %1218 = vmatpush1.bf16.msra.mxu0 0
  %1219 = vmatprep.subr.bf16.mxu0 0
  %1220 = vmatpush1.bf16.msra.mxu0 0
  %1221 = vmatprep.subr.bf16.mxu0 0
  %1222 = vmatpush1.bf16.msra.mxu0 0
  %1223 = vmatprep.subr.bf16.mxu0 0
  %1224 = vmatpush1.bf16.msra.mxu0 0
  %1225 = vmatprep.subr.bf16.mxu0 0
  %1226 = vmatpush1.bf16.msra.mxu0 0
  %1227 = vmatprep.subr.bf16.mxu0 0
  %1228 = vmatpush1.bf16.msra.mxu0 0
  %1229 = vmatprep.subr.bf16.mxu0 0
  %1230 = vmatpush1.bf16.msra.mxu0 0
  %1231 = vmatprep.subr.bf16.mxu0 0
  %1232 = vmatpush1.bf16.msra.mxu0 0
  %1233 = vmatprep.subr.bf16.mxu0 0
  %1234 = vmatpush1.bf16.msra.mxu0 0
  %1235 = vmatprep.subr.bf16.mxu0 0
  %1236 = vmatpush1.bf16.msra.mxu0 0
  %1237 = vmatprep.subr.bf16.mxu0 0
  %1238 = vmatpush1.bf16.msra.mxu0 0
  %1239 = vmatprep.subr.bf16.mxu0 0
  %1240 = vmatpush1.bf16.msra.mxu0 0
  %1241 = vmatprep.subr.bf16.mxu0 0
  %1242 = vmatpush1.bf16.msra.mxu0 0
  %1243 = vmatprep.subr.bf16.mxu0 0
  %1244 = vmatpush1.bf16.msra.mxu0 0
  %1245 = vmatprep.subr.bf16.mxu0 0
  %1246 = vmatpush1.bf16.msra.mxu0 0
  %1247 = vmatprep.mubr.bf16.mxu0 0
  %1248 = vmatmul.mubr.bf16.gmra.mrb[0].mxu0 %v1154
  %v1249 = vpop.f32.mrb[0].mxu0
  %v1250 = vadd.f32 0.0, %v1249
  %v1251 = vpop.f32.mrb[0].mxu0
  %v1252 = vadd.f32 0.0, %v1251
  %v1253 = vpop.f32.mrb[0].mxu0
  %v1254 = vpop.f32.mrb[0].mxu0
  %1255 = vdwg.mxu0
  %1256 = vmatprep.subr.bf16.mxu0 %v1172
  %1257 = vmatpush1.bf16.msra.mxu0 %v1169
  %1258 = vmatprep.subr.bf16.mxu0 0
  %1259 = vmatpush1.bf16.msra.mxu0 0
  %1260 = vmatprep.subr.bf16.mxu0 0
  %1261 = vmatpush1.bf16.msra.mxu0 0
  %1262 = vmatprep.subr.bf16.mxu0 0
  %1263 = vmatpush1.bf16.msra.mxu0 0
  %1264 = vmatprep.subr.bf16.mxu0 0
  %1265 = vmatpush1.bf16.msra.mxu0 0
  %1266 = vmatprep.subr.bf16.mxu0 0
  %1267 = vmatpush1.bf16.msra.mxu0 0
  %1268 = vmatprep.subr.bf16.mxu0 0
  %1269 = vmatpush1.bf16.msra.mxu0 0
  %1270 = vmatprep.subr.bf16.mxu0 0
  %1271 = vmatpush1.bf16.msra.mxu0 0
  %1272 = vmatprep.subr.bf16.mxu0 0
  %1273 = vmatpush1.bf16.msra.mxu0 0
  %1274 = vmatprep.subr.bf16.mxu0 0
  %1275 = vmatpush1.bf16.msra.mxu0 0
  %1276 = vmatprep.subr.bf16.mxu0 0
  %1277 = vmatpush1.bf16.msra.mxu0 0
  %1278 = vmatprep.subr.bf16.mxu0 0
  %1279 = vmatpush1.bf16.msra.mxu0 0
  %1280 = vmatprep.subr.bf16.mxu0 0
  %1281 = vmatpush1.bf16.msra.mxu0 0
  %1282 = vmatprep.subr.bf16.mxu0 0
  %1283 = vmatpush1.bf16.msra.mxu0 0
  %1284 = vmatprep.subr.bf16.mxu0 0
  %1285 = vmatpush1.bf16.msra.mxu0 0
  %1286 = vmatprep.subr.bf16.mxu0 0
  %1287 = vmatpush1.bf16.msra.mxu0 0
  %1288 = vmatprep.mubr.bf16.mxu0 0
  %1289 = vmatmul.mubr.bf16.gmra.mrb[0].mxu0 %v1154
  %v1290 = vpop.f32.mrb[0].mxu0
  %v1291 = vadd.f32 0.0, %v1290
  %v1292 = vpop.f32.mrb[0].mxu0
  %v1293 = vadd.f32 0.0, %v1292
  %v1294 = vpop.f32.mrb[0].mxu0
  %v1295 = vpop.f32.mrb[0].mxu0
  %1296 = vdwg.mxu0
  %v1297 = vld [vmem:[#allocation2] sm:$0xff]
  %v1298 = vld [vmem:[#allocation2 + $0x8] sm:$0xff]
  %v1299 = vld [vmem:[#allocation2 + $0x10] sm:$0xff]
  %v1300 = vld [vmem:[#allocation2 + $0x18] sm:$0xff]
  %v1301 = vld [vmem:[#allocation2 + $0x20] sm:$0xff]
  %v1302 = vld [vmem:[#allocation2 + $0x28] sm:$0xff]
  %v1303 = vadd.f32 %v1297, %v1209
  %v1304 = vadd.f32 %v1298, %v1211
  %v1305 = vadd.f32 %v1299, %v1250
  %v1306 = vadd.f32 %v1300, %v1252
  %v1307 = vadd.f32 %v1301, %v1291
  %v1308 = vadd.f32 %v1302, %v1293
  %1309 = vst [vmem:[#allocation2] sm:$0xff] %v1303
  %1310 = vst [vmem:[#allocation2 + $0x8] sm:$0xff] %v1304
  %1311 = vst [vmem:[#allocation2 + $0x10] sm:$0xff] %v1305
  %1312 = vst [vmem:[#allocation2 + $0x18] sm:$0xff] %v1306
  %1313 = vst [vmem:[#allocation2 + $0x20] sm:$0xff] %v1307
  %1314 = vst.msk [vmem:[#allocation2 + $0x28] sm:$0xff] %vm221, %v1308
  %s1315 = scalar_lea.vmem %s3, 28
  %v1316 = vld [vmem:[%s1315] sm:$0xf]
  %1317 = vrot.lane.b32.xlu0 %v52, 91
  %v1318 = vpop.permute.xlu0 %1317
  %1319 = vrot.lane.b32.xlu0 %v60, 91
  %v1320 = vpop.permute.xlu0 %1319
  %1321 = vrot.lane.b32.xlu0 %v59, 91
  %v1322 = vpop.permute.xlu0 %1321
  %1323 = vrot.lane.b32.xlu0 %v61, 91
  %v1324 = vpop.permute.xlu0 %1323
  %1325 = vrot.lane.b32.xlu0 %v68, 91
  %v1326 = vpop.permute.xlu0 %1325
  %1327 = vrot.lane.b32.xlu0 %v69, 91
  %v1328 = vpop.permute.xlu0 %1327
  %vm1329 = vcmask 744448
  %v1330 = vsel %vm1329, %v1318, %v1320
  %v1331 = vsel %vm1329, %v1320, %v1322
  %v1332 = vsel %vm1329, %v1322, %v1324
  %v1333 = vsel %vm1329, %v1324, %v1326
  %v1334 = vsel %vm1329, %v1326, %v1328
  %v1336 = vsel %vm70, %v1316, 0
  %v1339 = vsel %vm74, %v1330, 0
  %v1342 = vsel %vm74, %v1331, 0
  %v1345 = vsel %vm74, %v1332, 0
  %v1348 = vsel %vm74, %v1333, 0
  %v1351 = vsel %vm74, %v1334, 0
  %v1354 = vsel %vm74, %v1328, 0
  %1356 = vmatprep.subr.bf16.mxu0 %v1342
  %1357 = vmatpush1.bf16.msra.mxu0 %v1339
  %1358 = vmatprep.subr.bf16.mxu0 0
  %1359 = vmatpush1.bf16.msra.mxu0 0
  %1360 = vmatprep.subr.bf16.mxu0 0
  %1361 = vmatpush1.bf16.msra.mxu0 0
  %1362 = vmatprep.subr.bf16.mxu0 0
  %1363 = vmatpush1.bf16.msra.mxu0 0
  %1364 = vmatprep.subr.bf16.mxu0 0
  %1365 = vmatpush1.bf16.msra.mxu0 0
  %1366 = vmatprep.subr.bf16.mxu0 0
  %1367 = vmatpush1.bf16.msra.mxu0 0
  %1368 = vmatprep.subr.bf16.mxu0 0
  %1369 = vmatpush1.bf16.msra.mxu0 0
  %1370 = vmatprep.subr.bf16.mxu0 0
  %1371 = vmatpush1.bf16.msra.mxu0 0
  %1372 = vmatprep.subr.bf16.mxu0 0
  %1373 = vmatpush1.bf16.msra.mxu0 0
  %1374 = vmatprep.subr.bf16.mxu0 0
  %1375 = vmatpush1.bf16.msra.mxu0 0
  %1376 = vmatprep.subr.bf16.mxu0 0
  %1377 = vmatpush1.bf16.msra.mxu0 0
  %1378 = vmatprep.subr.bf16.mxu0 0
  %1379 = vmatpush1.bf16.msra.mxu0 0
  %1380 = vmatprep.subr.bf16.mxu0 0
  %1381 = vmatpush1.bf16.msra.mxu0 0
  %1382 = vmatprep.subr.bf16.mxu0 0
  %1383 = vmatpush1.bf16.msra.mxu0 0
  %1384 = vmatprep.subr.bf16.mxu0 0
  %1385 = vmatpush1.bf16.msra.mxu0 0
  %1386 = vmatprep.subr.bf16.mxu0 0
  %1387 = vmatpush1.bf16.msra.mxu0 0
  %1388 = vmatprep.mubr.bf16.mxu0 0
  %1389 = vmatmul.mubr.bf16.gmra.mrb[0].mxu0 %v1336
  %v1390 = vpop.f32.mrb[0].mxu0
  %v1391 = vadd.f32 0.0, %v1390
  %v1392 = vpop.f32.mrb[0].mxu0
  %v1393 = vadd.f32 0.0, %v1392
  %v1394 = vpop.f32.mrb[0].mxu0
  %v1395 = vpop.f32.mrb[0].mxu0
  %1396 = vdwg.mxu0
  %1397 = vmatprep.subr.bf16.mxu0 %v1348
  %1398 = vmatpush1.bf16.msra.mxu0 %v1345
  %1399 = vmatprep.subr.bf16.mxu0 0
  %1400 = vmatpush1.bf16.msra.mxu0 0
  %1401 = vmatprep.subr.bf16.mxu0 0
  %1402 = vmatpush1.bf16.msra.mxu0 0
  %1403 = vmatprep.subr.bf16.mxu0 0
  %1404 = vmatpush1.bf16.msra.mxu0 0
  %1405 = vmatprep.subr.bf16.mxu0 0
  %1406 = vmatpush1.bf16.msra.mxu0 0
  %1407 = vmatprep.subr.bf16.mxu0 0
  %1408 = vmatpush1.bf16.msra.mxu0 0
  %1409 = vmatprep.subr.bf16.mxu0 0
  %1410 = vmatpush1.bf16.msra.mxu0 0
  %1411 = vmatprep.subr.bf16.mxu0 0
  %1412 = vmatpush1.bf16.msra.mxu0 0
  %1413 = vmatprep.subr.bf16.mxu0 0
  %1414 = vmatpush1.bf16.msra.mxu0 0
  %1415 = vmatprep.subr.bf16.mxu0 0
  %1416 = vmatpush1.bf16.msra.mxu0 0
  %1417 = vmatprep.subr.bf16.mxu0 0
  %1418 = vmatpush1.bf16.msra.mxu0 0
  %1419 = vmatprep.subr.bf16.mxu0 0
  %1420 = vmatpush1.bf16.msra.mxu0 0
  %1421 = vmatprep.subr.bf16.mxu0 0
  %1422 = vmatpush1.bf16.msra.mxu0 0
  %1423 = vmatprep.subr.bf16.mxu0 0
  %1424 = vmatpush1.bf16.msra.mxu0 0
  %1425 = vmatprep.subr.bf16.mxu0 0
  %1426 = vmatpush1.bf16.msra.mxu0 0
  %1427 = vmatprep.subr.bf16.mxu0 0
  %1428 = vmatpush1.bf16.msra.mxu0 0
  %1429 = vmatprep.mubr.bf16.mxu0 0
  %1430 = vmatmul.mubr.bf16.gmra.mrb[0].mxu0 %v1336
  %v1431 = vpop.f32.mrb[0].mxu0
  %v1432 = vadd.f32 0.0, %v1431
  %v1433 = vpop.f32.mrb[0].mxu0
  %v1434 = vadd.f32 0.0, %v1433
  %v1435 = vpop.f32.mrb[0].mxu0
  %v1436 = vpop.f32.mrb[0].mxu0
  %1437 = vdwg.mxu0
  %1438 = vmatprep.subr.bf16.mxu0 %v1354
  %1439 = vmatpush1.bf16.msra.mxu0 %v1351
  %1440 = vmatprep.subr.bf16.mxu0 0
  %1441 = vmatpush1.bf16.msra.mxu0 0
  %1442 = vmatprep.subr.bf16.mxu0 0
  %1443 = vmatpush1.bf16.msra.mxu0 0
  %1444 = vmatprep.subr.bf16.mxu0 0
  %1445 = vmatpush1.bf16.msra.mxu0 0
  %1446 = vmatprep.subr.bf16.mxu0 0
  %1447 = vmatpush1.bf16.msra.mxu0 0
  %1448 = vmatprep.subr.bf16.mxu0 0
  %1449 = vmatpush1.bf16.msra.mxu0 0
  %1450 = vmatprep.subr.bf16.mxu0 0
  %1451 = vmatpush1.bf16.msra.mxu0 0
  %1452 = vmatprep.subr.bf16.mxu0 0
  %1453 = vmatpush1.bf16.msra.mxu0 0
  %1454 = vmatprep.subr.bf16.mxu0 0
  %1455 = vmatpush1.bf16.msra.mxu0 0
  %1456 = vmatprep.subr.bf16.mxu0 0
  %1457 = vmatpush1.bf16.msra.mxu0 0
  %1458 = vmatprep.subr.bf16.mxu0 0
  %1459 = vmatpush1.bf16.msra.mxu0 0
  %1460 = vmatprep.subr.bf16.mxu0 0
  %1461 = vmatpush1.bf16.msra.mxu0 0
  %1462 = vmatprep.subr.bf16.mxu0 0
  %1463 = vmatpush1.bf16.msra.mxu0 0
  %1464 = vmatprep.subr.bf16.mxu0 0
  %1465 = vmatpush1.bf16.msra.mxu0 0
  %1466 = vmatprep.subr.bf16.mxu0 0
  %1467 = vmatpush1.bf16.msra.mxu0 0
  %1468 = vmatprep.subr.bf16.mxu0 0
  %1469 = vmatpush1.bf16.msra.mxu0 0
  %1470 = vmatprep.mubr.bf16.mxu0 0
  %1471 = vmatmul.mubr.bf16.gmra.mrb[0].mxu0 %v1336
  %v1472 = vpop.f32.mrb[0].mxu0
  %v1473 = vadd.f32 0.0, %v1472
  %v1474 = vpop.f32.mrb[0].mxu0
  %v1475 = vadd.f32 0.0, %v1474
  %v1476 = vpop.f32.mrb[0].mxu0
  %v1477 = vpop.f32.mrb[0].mxu0
  %1478 = vdwg.mxu0
  %v1479 = vld [vmem:[#allocation2] sm:$0xff]
  %v1480 = vld [vmem:[#allocation2 + $0x8] sm:$0xff]
  %v1481 = vld [vmem:[#allocation2 + $0x10] sm:$0xff]
  %v1482 = vld [vmem:[#allocation2 + $0x18] sm:$0xff]
  %v1483 = vld [vmem:[#allocation2 + $0x20] sm:$0xff]
  %v1484 = vld [vmem:[#allocation2 + $0x28] sm:$0xff]
  %v1485 = vadd.f32 %v1479, %v1391
  %v1486 = vadd.f32 %v1480, %v1393
  %v1487 = vadd.f32 %v1481, %v1432
  %v1488 = vadd.f32 %v1482, %v1434
  %v1489 = vadd.f32 %v1483, %v1473
  %v1490 = vadd.f32 %v1484, %v1475
  %1491 = vst [vmem:[#allocation2] sm:$0xff] %v1485
  %1492 = vst [vmem:[#allocation2 + $0x8] sm:$0xff] %v1486
  %1493 = vst [vmem:[#allocation2 + $0x10] sm:$0xff] %v1487
  %1494 = vst [vmem:[#allocation2 + $0x18] sm:$0xff] %v1488
  %1495 = vst [vmem:[#allocation2 + $0x20] sm:$0xff] %v1489
  %1496 = vst.msk [vmem:[#allocation2 + $0x28] sm:$0xff] %vm221, %v1490
  %s1497 = scalar_lea.vmem %s3, 32
  %v1498 = vld [vmem:[%s1497] sm:$0xf]
  %1499 = vrot.lane.b32.xlu0 %v52, 90
  %v1500 = vpop.permute.xlu0 %1499
  %1501 = vrot.lane.b32.xlu0 %v60, 90
  %v1502 = vpop.permute.xlu0 %1501
  %1503 = vrot.lane.b32.xlu0 %v59, 90
  %v1504 = vpop.permute.xlu0 %1503
  %1505 = vrot.lane.b32.xlu0 %v61, 90
  %v1506 = vpop.permute.xlu0 %1505
  %1507 = vrot.lane.b32.xlu0 %v68, 90
  %v1508 = vpop.permute.xlu0 %1507
  %1509 = vrot.lane.b32.xlu0 %v69, 90
  %v1510 = vpop.permute.xlu0 %1509
  %vm1511 = vcmask 736256
  %v1512 = vsel %vm1511, %v1500, %v1502
  %v1513 = vsel %vm1511, %v1502, %v1504
  %v1514 = vsel %vm1511, %v1504, %v1506
  %v1515 = vsel %vm1511, %v1506, %v1508
  %v1516 = vsel %vm1511, %v1508, %v1510
  %v1518 = vsel %vm70, %v1498, 0
  %v1521 = vsel %vm74, %v1512, 0
  %v1524 = vsel %vm74, %v1513, 0
  %v1527 = vsel %vm74, %v1514, 0
  %v1530 = vsel %vm74, %v1515, 0
  %v1533 = vsel %vm74, %v1516, 0
  %v1536 = vsel %vm74, %v1510, 0
  %1538 = vmatprep.subr.bf16.mxu0 %v1524
  %1539 = vmatpush1.bf16.msra.mxu0 %v1521
  %1540 = vmatprep.subr.bf16.mxu0 0
  %1541 = vmatpush1.bf16.msra.mxu0 0
  %1542 = vmatprep.subr.bf16.mxu0 0
  %1543 = vmatpush1.bf16.msra.mxu0 0
  %1544 = vmatprep.subr.bf16.mxu0 0
  %1545 = vmatpush1.bf16.msra.mxu0 0
  %1546 = vmatprep.subr.bf16.mxu0 0
  %1547 = vmatpush1.bf16.msra.mxu0 0
  %1548 = vmatprep.subr.bf16.mxu0 0
  %1549 = vmatpush1.bf16.msra.mxu0 0
  %1550 = vmatprep.subr.bf16.mxu0 0
  %1551 = vmatpush1.bf16.msra.mxu0 0
  %1552 = vmatprep.subr.bf16.mxu0 0
  %1553 = vmatpush1.bf16.msra.mxu0 0
  %1554 = vmatprep.subr.bf16.mxu0 0
  %1555 = vmatpush1.bf16.msra.mxu0 0
  %1556 = vmatprep.subr.bf16.mxu0 0
  %1557 = vmatpush1.bf16.msra.mxu0 0
  %1558 = vmatprep.subr.bf16.mxu0 0
  %1559 = vmatpush1.bf16.msra.mxu0 0
  %1560 = vmatprep.subr.bf16.mxu0 0
  %1561 = vmatpush1.bf16.msra.mxu0 0
  %1562 = vmatprep.subr.bf16.mxu0 0
  %1563 = vmatpush1.bf16.msra.mxu0 0
  %1564 = vmatprep.subr.bf16.mxu0 0
  %1565 = vmatpush1.bf16.msra.mxu0 0
  %1566 = vmatprep.subr.bf16.mxu0 0
  %1567 = vmatpush1.bf16.msra.mxu0 0
  %1568 = vmatprep.subr.bf16.mxu0 0
  %1569 = vmatpush1.bf16.msra.mxu0 0
  %1570 = vmatprep.mubr.bf16.mxu0 0
  %1571 = vmatmul.mubr.bf16.gmra.mrb[0].mxu0 %v1518
  %v1572 = vpop.f32.mrb[0].mxu0
  %v1573 = vadd.f32 0.0, %v1572
  %v1574 = vpop.f32.mrb[0].mxu0
  %v1575 = vadd.f32 0.0, %v1574
  %v1576 = vpop.f32.mrb[0].mxu0
  %v1577 = vpop.f32.mrb[0].mxu0
  %1578 = vdwg.mxu0
  %1579 = vmatprep.subr.bf16.mxu0 %v1530
  %1580 = vmatpush1.bf16.msra.mxu0 %v1527
  %1581 = vmatprep.subr.bf16.mxu0 0
  %1582 = vmatpush1.bf16.msra.mxu0 0
  %1583 = vmatprep.subr.bf16.mxu0 0
  %1584 = vmatpush1.bf16.msra.mxu0 0
  %1585 = vmatprep.subr.bf16.mxu0 0
  %1586 = vmatpush1.bf16.msra.mxu0 0
  %1587 = vmatprep.subr.bf16.mxu0 0
  %1588 = vmatpush1.bf16.msra.mxu0 0
  %1589 = vmatprep.subr.bf16.mxu0 0
  %1590 = vmatpush1.bf16.msra.mxu0 0
  %1591 = vmatprep.subr.bf16.mxu0 0
  %1592 = vmatpush1.bf16.msra.mxu0 0
  %1593 = vmatprep.subr.bf16.mxu0 0
  %1594 = vmatpush1.bf16.msra.mxu0 0
  %1595 = vmatprep.subr.bf16.mxu0 0
  %1596 = vmatpush1.bf16.msra.mxu0 0
  %1597 = vmatprep.subr.bf16.mxu0 0
  %1598 = vmatpush1.bf16.msra.mxu0 0
  %1599 = vmatprep.subr.bf16.mxu0 0
  %1600 = vmatpush1.bf16.msra.mxu0 0
  %1601 = vmatprep.subr.bf16.mxu0 0
  %1602 = vmatpush1.bf16.msra.mxu0 0
  %1603 = vmatprep.subr.bf16.mxu0 0
  %1604 = vmatpush1.bf16.msra.mxu0 0
  %1605 = vmatprep.subr.bf16.mxu0 0
  %1606 = vmatpush1.bf16.msra.mxu0 0
  %1607 = vmatprep.subr.bf16.mxu0 0
  %1608 = vmatpush1.bf16.msra.mxu0 0
  %1609 = vmatprep.subr.bf16.mxu0 0
  %1610 = vmatpush1.bf16.msra.mxu0 0
  %1611 = vmatprep.mubr.bf16.mxu0 0
  %1612 = vmatmul.mubr.bf16.gmra.mrb[0].mxu0 %v1518
  %v1613 = vpop.f32.mrb[0].mxu0
  %v1614 = vadd.f32 0.0, %v1613
  %v1615 = vpop.f32.mrb[0].mxu0
  %v1616 = vadd.f32 0.0, %v1615
  %v1617 = vpop.f32.mrb[0].mxu0
  %v1618 = vpop.f32.mrb[0].mxu0
  %1619 = vdwg.mxu0
  %1620 = vmatprep.subr.bf16.mxu0 %v1536
  %1621 = vmatpush1.bf16.msra.mxu0 %v1533
  %1622 = vmatprep.subr.bf16.mxu0 0
  %1623 = vmatpush1.bf16.msra.mxu0 0
  %1624 = vmatprep.subr.bf16.mxu0 0
  %1625 = vmatpush1.bf16.msra.mxu0 0
  %1626 = vmatprep.subr.bf16.mxu0 0
  %1627 = vmatpush1.bf16.msra.mxu0 0
  %1628 = vmatprep.subr.bf16.mxu0 0
  %1629 = vmatpush1.bf16.msra.mxu0 0
  %1630 = vmatprep.subr.bf16.mxu0 0
  %1631 = vmatpush1.bf16.msra.mxu0 0
  %1632 = vmatprep.subr.bf16.mxu0 0
  %1633 = vmatpush1.bf16.msra.mxu0 0
  %1634 = vmatprep.subr.bf16.mxu0 0
  %1635 = vmatpush1.bf16.msra.mxu0 0
  %1636 = vmatprep.subr.bf16.mxu0 0
  %1637 = vmatpush1.bf16.msra.mxu0 0
  %1638 = vmatprep.subr.bf16.mxu0 0
  %1639 = vmatpush1.bf16.msra.mxu0 0
  %1640 = vmatprep.subr.bf16.mxu0 0
  %1641 = vmatpush1.bf16.msra.mxu0 0
  %1642 = vmatprep.subr.bf16.mxu0 0
  %1643 = vmatpush1.bf16.msra.mxu0 0
  %1644 = vmatprep.subr.bf16.mxu0 0
  %1645 = vmatpush1.bf16.msra.mxu0 0
  %1646 = vmatprep.subr.bf16.mxu0 0
  %1647 = vmatpush1.bf16.msra.mxu0 0
  %1648 = vmatprep.subr.bf16.mxu0 0
  %1649 = vmatpush1.bf16.msra.mxu0 0
  %1650 = vmatprep.subr.bf16.mxu0 0
  %1651 = vmatpush1.bf16.msra.mxu0 0
  %1652 = vmatprep.mubr.bf16.mxu0 0
  %1653 = vmatmul.mubr.bf16.gmra.mrb[0].mxu0 %v1518
  %v1654 = vpop.f32.mrb[0].mxu0
  %v1655 = vadd.f32 0.0, %v1654
  %v1656 = vpop.f32.mrb[0].mxu0
  %v1657 = vadd.f32 0.0, %v1656
  %v1658 = vpop.f32.mrb[0].mxu0
  %v1659 = vpop.f32.mrb[0].mxu0
  %1660 = vdwg.mxu0
  %v1661 = vld [vmem:[#allocation2] sm:$0xff]
  %v1662 = vld [vmem:[#allocation2 + $0x8] sm:$0xff]
  %v1663 = vld [vmem:[#allocation2 + $0x10] sm:$0xff]
  %v1664 = vld [vmem:[#allocation2 + $0x18] sm:$0xff]
  %v1665 = vld [vmem:[#allocation2 + $0x20] sm:$0xff]
  %v1666 = vld [vmem:[#allocation2 + $0x28] sm:$0xff]
  %v1667 = vadd.f32 %v1661, %v1573
  %v1668 = vadd.f32 %v1662, %v1575
  %v1669 = vadd.f32 %v1663, %v1614
  %v1670 = vadd.f32 %v1664, %v1616
  %v1671 = vadd.f32 %v1665, %v1655
  %v1672 = vadd.f32 %v1666, %v1657
  %1673 = vst [vmem:[#allocation2] sm:$0xff] %v1667
  %1674 = vst [vmem:[#allocation2 + $0x8] sm:$0xff] %v1668
  %1675 = vst [vmem:[#allocation2 + $0x10] sm:$0xff] %v1669
  %1676 = vst [vmem:[#allocation2 + $0x18] sm:$0xff] %v1670
  %1677 = vst [vmem:[#allocation2 + $0x20] sm:$0xff] %v1671
  %1678 = vst.msk [vmem:[#allocation2 + $0x28] sm:$0xff] %vm221, %v1672
  %v1679 = vld [vmem:[#allocation2] sm:$0xff]
  %v1680 = vld [vmem:[#allocation2 + $0x8] sm:$0xff]
  %v1681 = vld [vmem:[#allocation2 + $0x10] sm:$0xff]
  %v1682 = vld [vmem:[#allocation2 + $0x18] sm:$0xff]
  %v1683 = vld [vmem:[#allocation2 + $0x20] sm:$0xff]
  %v1684 = vld [vmem:[#allocation2 + $0x28] sm:$0xff]
  %v1685 = vld [vmem:[%s4] sm:$0xff]
  %1687 = vset.pattern.permute.xlu0 0
  %1688 = vperm.xlu0 %1687, %v1685
  %v1689 = vpop.permute.xlu0 %1688
  %v1691 = vadd.f32 %v1679, %v1689
  %v1692 = vadd.f32 %v1680, %v1689
  %v1693 = vadd.f32 %v1681, %v1689
  %v1694 = vadd.f32 %v1682, %v1689
  %v1695 = vadd.f32 %v1683, %v1689
  %v1696 = vadd.f32 %v1684, %v1689
  %v1697 = vmax.f32 %v1691, 0.0
  %v1698 = vmax.f32 %v1692, 0.0
  %v1699 = vmax.f32 %v1693, 0.0
  %v1700 = vmax.f32 %v1694, 0.0
  %v1701 = vmax.f32 %v1695, 0.0
  %v1702 = vmax.f32 %v1696, 0.0
  %v1703 = vld [vmem:[%s5] sm:$0xff]
  %v1704 = vld [vmem:[%s5 + $0x8] sm:$0xff]
  %v1705 = vld [vmem:[%s5 + $0x10] sm:$0xff]
  %v1706 = vld [vmem:[%s5 + $0x18] sm:$0xff]
  %v1707 = vld [vmem:[%s5 + $0x20] sm:$0xff]
  %v1708 = vld [vmem:[%s5 + $0x28] sm:$0xff]
  %v1709 = vld [vmem:[%s5 + $0x30] sm:$0xff]
  %v1710 = vld [vmem:[%s5 + $0x38] sm:$0xff]
  %v1711 = vld [vmem:[%s5 + $0x40] sm:$0xff]
  %v1712 = vld [vmem:[%s5 + $0x48] sm:$0xff]
  %v1713 = vld [vmem:[%s5 + $0x50] sm:$0xff]
  %v1714 = vld [vmem:[%s5 + $0x58] sm:$0xff]
  %v1715 = vld [vmem:[%s5 + $0x60] sm:$0xff]
  %v1716 = vld [vmem:[%s5 + $0x68] sm:$0xff]
  %v1717 = vld [vmem:[%s5 + $0x70] sm:$0xff]
  %v1718 = vld [vmem:[%s5 + $0x78] sm:$0xff]
  %v1719 = vld [vmem:[%s5 + $0x80] sm:$0xff]
  %v1720 = vld [vmem:[%s5 + $0x88] sm:$0xff]
  %v1721 = vld [vmem:[%s5 + $0x90] sm:$0xff]
  %v1722 = vld [vmem:[%s5 + $0x98] sm:$0xff]
  %v1723 = vld [vmem:[%s5 + $0xa0] sm:$0xff]
  %v1724 = vld [vmem:[%s5 + $0xa8] sm:$0xff]
  %v1725 = vld [vmem:[%s5 + $0xb0] sm:$0xff]
  %v1726 = vld [vmem:[%s5 + $0xb8] sm:$0xff]
  %v1727 = vld [vmem:[%s5 + $0xc0] sm:$0xff]
  %v1728 = vld [vmem:[%s5 + $0xc8] sm:$0xff]
  %v1729 = vld [vmem:[%s5 + $0xd0] sm:$0xff]
  %v1730 = vld [vmem:[%s5 + $0xd8] sm:$0xff]
  %v1731 = vld [vmem:[%s5 + $0xe0] sm:$0xff]
  %v1732 = vld [vmem:[%s5 + $0xe8] sm:$0xff]
  %v1733 = vld [vmem:[%s5 + $0xf0] sm:$0xff]
  %v1734 = vld [vmem:[%s5 + $0xf8] sm:$0xff]
  %v1735 = vld [vmem:[%s5 + $0x100] sm:$0xff]
  %v1736 = vld [vmem:[%s5 + $0x108] sm:$0xff]
  %v1737 = vld [vmem:[%s5 + $0x110] sm:$0xff]
  %v1738 = vld [vmem:[%s5 + $0x118] sm:$0xff]
  %v1739 = vld [vmem:[%s5 + $0x120] sm:$0xff]
  %v1740 = vld [vmem:[%s5 + $0x128] sm:$0xff]
  %v1741 = vld [vmem:[%s5 + $0x130] sm:$0xff]
  %v1742 = vld [vmem:[%s5 + $0x138] sm:$0xff]
  %v1743 = vld [vmem:[%s5 + $0x140] sm:$0xff]
  %v1744 = vld [vmem:[%s5 + $0x148] sm:$0xff]
  %v1745 = vld [vmem:[%s5 + $0x150] sm:$0xff]
  %v1746 = vld [vmem:[%s5 + $0x158] sm:$0xff]
  %v1747 = vld [vmem:[%s5 + $0x160] sm:$0xff]
  %v1748 = vld [vmem:[%s5 + $0x168] sm:$0xff]
  %v1749 = vld [vmem:[%s5 + $0x170] sm:$0xff]
  %v1750 = vld [vmem:[%s5 + $0x178] sm:$0xff]
  %v1751 = vld [vmem:[%s5 + $0x180] sm:$0xff]
  %v1752 = vld [vmem:[%s5 + $0x188] sm:$0xff]
  %v1753 = vld [vmem:[%s5 + $0x190] sm:$0xff]
  %v1754 = vld [vmem:[%s5 + $0x198] sm:$0xff]
  %v1755 = vld [vmem:[%s5 + $0x1a0] sm:$0xff]
  %v1756 = vld [vmem:[%s5 + $0x1a8] sm:$0xff]
  %v1757 = vld [vmem:[%s5 + $0x1b0] sm:$0xff]
  %v1758 = vld [vmem:[%s5 + $0x1b8] sm:$0xff]
  %v1759 = vld [vmem:[%s5 + $0x1c0] sm:$0xff]
  %v1760 = vld [vmem:[%s5 + $0x1c8] sm:$0xff]
  %v1761 = vld [vmem:[%s5 + $0x1d0] sm:$0xff]
  %v1762 = vld [vmem:[%s5 + $0x1d8] sm:$0xff]
  %v1763 = vld [vmem:[%s5 + $0x1e0] sm:$0xff]
  %v1764 = vld [vmem:[%s5 + $0x1e8] sm:$0xff]
  %v1765 = vld [vmem:[%s5 + $0x1f0] sm:$0xff]
  %v1766 = vld [vmem:[%s5 + $0x1f8] sm:$0xff]
  %v1767 = vld [vmem:[%s5 + $0x200] sm:$0xff]
  %v1768 = vld [vmem:[%s5 + $0x208] sm:$0xff]
  %v1769 = vld [vmem:[%s5 + $0x210] sm:$0xff]
  %v1770 = vld [vmem:[%s5 + $0x218] sm:$0xff]
  %v1771 = vld [vmem:[%s5 + $0x220] sm:$0xff]
  %v1772 = vld [vmem:[%s5 + $0x228] sm:$0xff]
  %v1773 = vld [vmem:[%s5 + $0x230] sm:$0xff]
  %v1774 = vld [vmem:[%s5 + $0x238] sm:$0xff]
  %v1775 = vld [vmem:[%s5 + $0x240] sm:$0xff]
  %v1776 = vld [vmem:[%s5 + $0x248] sm:$0xff]
  %v1777 = vld [vmem:[%s5 + $0x250] sm:$0xff]
  %v1778 = vld [vmem:[%s5 + $0x258] sm:$0xff]
  %v1779 = vld [vmem:[%s5 + $0x260] sm:$0xff]
  %v1780 = vld [vmem:[%s5 + $0x268] sm:$0xff]
  %v1781 = vld [vmem:[%s5 + $0x270] sm:$0xff]
  %v1782 = vld [vmem:[%s5 + $0x278] sm:$0xff]
  %v1783 = vld [vmem:[%s5 + $0x280] sm:$0xff]
  %v1785 = vsel %vm221, %v1702, 0
  %1787 = vmatprep.subr.mxu0 0.0
  %1788 = vmatpush1.msra.mxu0 %v1703
  %1789 = vmatprep.subr.mxu0 0.0
  %1790 = vmatpush1.msra.mxu0 %v1704
  %1791 = vmatprep.subr.mxu0 0.0
  %1792 = vmatpush1.msra.mxu0 %v1705
  %1793 = vmatprep.subr.mxu0 0.0
  %1794 = vmatpush1.msra.mxu0 %v1706
  %1795 = vmatprep.subr.mxu0 0.0
  %1796 = vmatpush1.msra.mxu0 %v1707
  %1797 = vmatprep.subr.mxu0 0.0
  %1798 = vmatpush1.msra.mxu0 %v1708
  %1799 = vmatprep.subr.mxu0 0.0
  %1800 = vmatpush1.msra.mxu0 %v1709
  %1801 = vmatprep.subr.mxu0 0.0
  %1802 = vmatpush1.msra.mxu0 %v1710
  %1803 = vmatprep.subr.mxu0 0.0
  %1804 = vmatpush1.msra.mxu0 %v1711
  %1805 = vmatprep.subr.mxu0 0.0
  %1806 = vmatpush1.msra.mxu0 %v1712
  %1807 = vmatprep.subr.mxu0 0.0
  %1808 = vmatpush1.msra.mxu0 %v1713
  %1809 = vmatprep.subr.mxu0 0.0
  %1810 = vmatpush1.msra.mxu0 %v1714
  %1811 = vmatprep.subr.mxu0 0.0
  %1812 = vmatpush1.msra.mxu0 %v1715
  %1813 = vmatprep.subr.mxu0 0.0
  %1814 = vmatpush1.msra.mxu0 %v1716
  %1815 = vmatprep.subr.mxu0 0.0
  %1816 = vmatpush1.msra.mxu0 %v1717
  %1817 = vmatprep.subr.mxu0 0.0
  %1818 = vmatpush1.msra.mxu0 %v1718
  %1819 = vmatprep.subr.mxu0 0.0
  %1820 = vmatpush1.msra.mxu0 %v1719
  %1821 = vmatprep.subr.mxu0 0.0
  %1822 = vmatpush1.msra.mxu0 %v1720
  %1823 = vmatprep.subr.mxu0 0.0
  %1824 = vmatpush1.msra.mxu0 %v1721
  %1825 = vmatprep.subr.mxu0 0.0
  %1826 = vmatpush1.msra.mxu0 %v1722
  %1827 = vmatprep.subr.mxu0 0.0
  %1828 = vmatpush1.msra.mxu0 %v1723
  %1829 = vmatprep.subr.mxu0 0.0
  %1830 = vmatpush1.msra.mxu0 %v1724
  %1831 = vmatprep.subr.mxu0 0.0
  %1832 = vmatpush1.msra.mxu0 %v1725
  %1833 = vmatprep.subr.mxu0 0.0
  %1834 = vmatpush1.msra.mxu0 %v1726
  %1835 = vmatprep.subr.mxu0 0.0
  %1836 = vmatpush1.msra.mxu0 %v1727
  %1837 = vmatprep.subr.mxu0 0.0
  %1838 = vmatpush1.msra.mxu0 %v1728
  %1839 = vmatprep.subr.mxu0 0.0
  %1840 = vmatpush1.msra.mxu0 %v1729
  %1841 = vmatprep.subr.mxu0 0.0
  %1842 = vmatpush1.msra.mxu0 %v1730
  %1843 = vmatprep.subr.mxu0 0.0
  %1844 = vmatpush1.msra.mxu0 %v1731
  %1845 = vmatprep.subr.mxu0 0.0
  %1846 = vmatpush1.msra.mxu0 %v1732
  %1847 = vmatprep.subr.mxu0 0.0
  %1848 = vmatpush1.msra.mxu0 %v1733
  %1849 = vmatprep.subr.mxu0 0.0
  %1850 = vmatpush1.msra.mxu0 %v1734
  %1851 = vmatprep.mubr.f32.mxu0 %v1698
  %1852 = vmatmul.mubr.f32.gmra.mrb[0].mxu0 %v1697
  %v1853 = vpop.f32.mrb[0].mxu0
  %v1854 = vadd.f32 0.0, %v1853
  %v1855 = vpop.f32.mrb[0].mxu0
  %1856 = vdwg.mxu0
  %1857 = vmatprep.subr.mxu0 0.0
  %1858 = vmatpush1.msra.mxu0 %v1735
  %1859 = vmatprep.subr.mxu0 0.0
  %1860 = vmatpush1.msra.mxu0 %v1736
  %1861 = vmatprep.subr.mxu0 0.0
  %1862 = vmatpush1.msra.mxu0 %v1737
  %1863 = vmatprep.subr.mxu0 0.0
  %1864 = vmatpush1.msra.mxu0 %v1738
  %1865 = vmatprep.subr.mxu0 0.0
  %1866 = vmatpush1.msra.mxu0 %v1739
  %1867 = vmatprep.subr.mxu0 0.0
  %1868 = vmatpush1.msra.mxu0 %v1740
  %1869 = vmatprep.subr.mxu0 0.0
  %1870 = vmatpush1.msra.mxu0 %v1741
  %1871 = vmatprep.subr.mxu0 0.0
  %1872 = vmatpush1.msra.mxu0 %v1742
  %1873 = vmatprep.subr.mxu0 0.0
  %1874 = vmatpush1.msra.mxu0 %v1743
  %1875 = vmatprep.subr.mxu0 0.0
  %1876 = vmatpush1.msra.mxu0 %v1744
  %1877 = vmatprep.subr.mxu0 0.0
  %1878 = vmatpush1.msra.mxu0 %v1745
  %1879 = vmatprep.subr.mxu0 0.0
  %1880 = vmatpush1.msra.mxu0 %v1746
  %1881 = vmatprep.subr.mxu0 0.0
  %1882 = vmatpush1.msra.mxu0 %v1747
  %1883 = vmatprep.subr.mxu0 0.0
  %1884 = vmatpush1.msra.mxu0 %v1748
  %1885 = vmatprep.subr.mxu0 0.0
  %1886 = vmatpush1.msra.mxu0 %v1749
  %1887 = vmatprep.subr.mxu0 0.0
  %1888 = vmatpush1.msra.mxu0 %v1750
  %1889 = vmatprep.subr.mxu0 0.0
  %1890 = vmatpush1.msra.mxu0 %v1751
  %1891 = vmatprep.subr.mxu0 0.0
  %1892 = vmatpush1.msra.mxu0 %v1752
  %1893 = vmatprep.subr.mxu0 0.0
  %1894 = vmatpush1.msra.mxu0 %v1753
  %1895 = vmatprep.subr.mxu0 0.0
  %1896 = vmatpush1.msra.mxu0 %v1754
  %1897 = vmatprep.subr.mxu0 0.0
  %1898 = vmatpush1.msra.mxu0 %v1755
  %1899 = vmatprep.subr.mxu0 0.0
  %1900 = vmatpush1.msra.mxu0 %v1756
  %1901 = vmatprep.subr.mxu0 0.0
  %1902 = vmatpush1.msra.mxu0 %v1757
  %1903 = vmatprep.subr.mxu0 0.0
  %1904 = vmatpush1.msra.mxu0 %v1758
  %1905 = vmatprep.subr.mxu0 0.0
  %1906 = vmatpush1.msra.mxu0 %v1759
  %1907 = vmatprep.subr.mxu0 0.0
  %1908 = vmatpush1.msra.mxu0 %v1760
  %1909 = vmatprep.subr.mxu0 0.0
  %1910 = vmatpush1.msra.mxu0 %v1761
  %1911 = vmatprep.subr.mxu0 0.0
  %1912 = vmatpush1.msra.mxu0 %v1762
  %1913 = vmatprep.subr.mxu0 0.0
  %1914 = vmatpush1.msra.mxu0 %v1763
  %1915 = vmatprep.subr.mxu0 0.0
  %1916 = vmatpush1.msra.mxu0 %v1764
  %1917 = vmatprep.subr.mxu0 0.0
  %1918 = vmatpush1.msra.mxu0 %v1765
  %1919 = vmatprep.subr.mxu0 0.0
  %1920 = vmatpush1.msra.mxu0 %v1766
  %1921 = vmatprep.mubr.f32.mxu0 %v1700
  %1922 = vmatmul.mubr.f32.gmra.mrb[0].mxu0 %v1699
  %v1923 = vpop.f32.mrb[0].mxu0
  %v1924 = vadd.f32 %v1854, %v1923
  %v1925 = vpop.f32.mrb[0].mxu0
  %1926 = vdwg.mxu0
  %1927 = vmatprep.subr.mxu0 0.0
  %1928 = vmatpush1.msra.mxu0 %v1767
  %1929 = vmatprep.subr.mxu0 0.0
  %1930 = vmatpush1.msra.mxu0 %v1768
  %1931 = vmatprep.subr.mxu0 0.0
  %1932 = vmatpush1.msra.mxu0 %v1769
  %1933 = vmatprep.subr.mxu0 0.0
  %1934 = vmatpush1.msra.mxu0 %v1770
  %1935 = vmatprep.subr.mxu0 0.0
  %1936 = vmatpush1.msra.mxu0 %v1771
  %1937 = vmatprep.subr.mxu0 0.0
  %1938 = vmatpush1.msra.mxu0 %v1772
  %1939 = vmatprep.subr.mxu0 0.0
  %1940 = vmatpush1.msra.mxu0 %v1773
  %1941 = vmatprep.subr.mxu0 0.0
  %1942 = vmatpush1.msra.mxu0 %v1774
  %1943 = vmatprep.subr.mxu0 0.0
  %1944 = vmatpush1.msra.mxu0 %v1775
  %1945 = vmatprep.subr.mxu0 0.0
  %1946 = vmatpush1.msra.mxu0 %v1776
  %1947 = vmatprep.subr.mxu0 0.0
  %1948 = vmatpush1.msra.mxu0 %v1777
  %1949 = vmatprep.subr.mxu0 0.0
  %1950 = vmatpush1.msra.mxu0 %v1778
  %1951 = vmatprep.subr.mxu0 0.0
  %1952 = vmatpush1.msra.mxu0 %v1779
  %1953 = vmatprep.subr.mxu0 0.0
  %1954 = vmatpush1.msra.mxu0 %v1780
  %1955 = vmatprep.subr.mxu0 0.0
  %1956 = vmatpush1.msra.mxu0 %v1781
  %1957 = vmatprep.subr.mxu0 0.0
  %1958 = vmatpush1.msra.mxu0 %v1782
  %1959 = vmatprep.subr.mxu0 0.0
  %1960 = vmatpush1.msra.mxu0 %v1783
  %1961 = vmatprep.subr.mxu0 0.0
  %1962 = vmatpush1.msra.mxu0 0.0
  %1963 = vmatprep.subr.mxu0 0.0
  %1964 = vmatpush1.msra.mxu0 0.0
  %1965 = vmatprep.subr.mxu0 0.0
  %1966 = vmatpush1.msra.mxu0 0.0
  %1967 = vmatprep.subr.mxu0 0.0
  %1968 = vmatpush1.msra.mxu0 0.0
  %1969 = vmatprep.subr.mxu0 0.0
  %1970 = vmatpush1.msra.mxu0 0.0
  %1971 = vmatprep.subr.mxu0 0.0
  %1972 = vmatpush1.msra.mxu0 0.0
  %1973 = vmatprep.subr.mxu0 0.0
  %1974 = vmatpush1.msra.mxu0 0.0
  %1975 = vmatprep.subr.mxu0 0.0
  %1976 = vmatpush1.msra.mxu0 0.0
  %1977 = vmatprep.subr.mxu0 0.0
  %1978 = vmatpush1.msra.mxu0 0.0
  %1979 = vmatprep.subr.mxu0 0.0
  %1980 = vmatpush1.msra.mxu0 0.0
  %1981 = vmatprep.subr.mxu0 0.0
  %1982 = vmatpush1.msra.mxu0 0.0
  %1983 = vmatprep.subr.mxu0 0.0
  %1984 = vmatpush1.msra.mxu0 0.0
  %1985 = vmatprep.subr.mxu0 0.0
  %1986 = vmatpush1.msra.mxu0 0.0
  %1987 = vmatprep.subr.mxu0 0.0
  %1988 = vmatpush1.msra.mxu0 0.0
  %1989 = vmatprep.subr.mxu0 0.0
  %1990 = vmatpush1.msra.mxu0 0.0
  %1991 = vmatprep.mubr.f32.mxu0 %v1785
  %1992 = vmatmul.mubr.f32.gmra.mrb[0].mxu0 %v1701
  %v1993 = vpop.f32.mrb[0].mxu0
  %v1994 = vadd.f32 %v1924, %v1993
  %v1995 = vpop.f32.mrb[0].mxu0
  %1996 = vdwg.mxu0
  %v1997 = vld [vmem:[%s6] sm:$0xf]
  %v1998 = vld [vmem:[%s6 + $0x4] sm:$0xf]
  %v1999 = vld [vmem:[%s6 + $0x8] sm:$0xf]
  %v2000 = vld [vmem:[%s6 + $0xc] sm:$0xf]
  %v2001 = vpack.c.bf16 %v1994, %v1994
  %v2002 = vld [vmem:[%s7] sm:$0xff]
  %v2003 = vld [vmem:[%s7 + $0x8] sm:$0xff]
  %v2004 = vld [vmem:[%s7 + $0x10] sm:$0xff]
  %v2005 = vld [vmem:[%s7 + $0x18] sm:$0xff]
  %2007 = vset.pattern.permute.xlu0 0
  %2008 = vperm.xlu0 %2007, %v2002
  %v2009 = vpop.permute.xlu0 %2008
  %2012 = vset.pattern.permute.xlu0 0
  %2013 = vperm.xlu0 %2012, %v2003
  %v2014 = vpop.permute.xlu0 %2013
  %2017 = vset.pattern.permute.xlu0 0
  %2018 = vperm.xlu0 %2017, %v2004
  %v2019 = vpop.permute.xlu0 %2018
  %2022 = vset.pattern.permute.xlu0 0
  %2023 = vperm.xlu0 %2022, %v2005
  %v2024 = vpop.permute.xlu0 %2023
  %v2030 = vunpack.c.l.b16 %v1997
  %v2031 = vunpack.c.l.b16 %v1998
  %v2032 = vunpack.c.l.b16 %v1999
  %v2033 = vunpack.c.l.b16 %v2000
  %v2034 = vpack.c.b16 %v2031, %v2030
  %v2035 = vpack.c.b16 %v2033, %v2032
  %v2037 = vsel %vm221, %v2034, 0
  %v2040 = vsel %vm221, %v2035, 0
  %vm2042 = vcmask 1043456
  %v2044 = vsel %vm2042, %v2001, 0
  %2046 = vmatprep.subr.bf16.mxu0 0
  %2047 = vmatpush1.bf16.msra.mxu0 %v2044
  %2048 = vmatprep.subr.bf16.mxu0 0
  %2049 = vmatpush1.bf16.msra.mxu0 0
  %2050 = vmatprep.subr.bf16.mxu0 0
  %2051 = vmatpush1.bf16.msra.mxu0 0
  %2052 = vmatprep.subr.bf16.mxu0 0
  %2053 = vmatpush1.bf16.msra.mxu0 0
  %2054 = vmatprep.subr.bf16.mxu0 0
  %2055 = vmatpush1.bf16.msra.mxu0 0
  %2056 = vmatprep.subr.bf16.mxu0 0
  %2057 = vmatpush1.bf16.msra.mxu0 0
  %2058 = vmatprep.subr.bf16.mxu0 0
  %2059 = vmatpush1.bf16.msra.mxu0 0
  %2060 = vmatprep.subr.bf16.mxu0 0
  %2061 = vmatpush1.bf16.msra.mxu0 0
  %2062 = vmatprep.subr.bf16.mxu0 0
  %2063 = vmatpush1.bf16.msra.mxu0 0
  %2064 = vmatprep.subr.bf16.mxu0 0
  %2065 = vmatpush1.bf16.msra.mxu0 0
  %2066 = vmatprep.subr.bf16.mxu0 0
  %2067 = vmatpush1.bf16.msra.mxu0 0
  %2068 = vmatprep.subr.bf16.mxu0 0
  %2069 = vmatpush1.bf16.msra.mxu0 0
  %2070 = vmatprep.subr.bf16.mxu0 0
  %2071 = vmatpush1.bf16.msra.mxu0 0
  %2072 = vmatprep.subr.bf16.mxu0 0
  %2073 = vmatpush1.bf16.msra.mxu0 0
  %2074 = vmatprep.subr.bf16.mxu0 0
  %2075 = vmatpush1.bf16.msra.mxu0 0
  %2076 = vmatprep.subr.bf16.mxu0 0
  %2077 = vmatpush1.bf16.msra.mxu0 0
  %2078 = vmatprep.mubr.bf16.mxu0 0
  %2079 = vmatmul.mubr.bf16.gmra.mrb[0].mxu0 %v2037
  %v2080 = vpop.f32.mrb[0].mxu0
  %v2081 = vadd.f32 %v2009, %v2080
  %v2082 = vpop.f32.mrb[0].mxu0
  %v2083 = vpop.f32.mrb[0].mxu0
  %v2084 = vadd.f32 %v2014, %v2083
  %v2085 = vpop.f32.mrb[0].mxu0
  %2086 = vmatprep.mubr.bf16.mxu0 0
  %2087 = vmatmul.mubr.bf16.gmra.mrb[0].mxu0 %v2040
  %v2088 = vpop.f32.mrb[0].mxu0
  %v2089 = vadd.f32 %v2019, %v2088
  %v2090 = vpop.f32.mrb[0].mxu0
  %v2091 = vpop.f32.mrb[0].mxu0
  %v2092 = vadd.f32 %v2024, %v2091
  %v2093 = vpop.f32.mrb[0].mxu0
  %2094 = vdwg.mxu0
  %v2095 = vmax.f32 %v2081, 0.0
  %v2096 = vmax.f32 %v2084, 0.0
  %v2097 = vmax.f32 %v2089, 0.0
  %v2098 = vmax.f32 %v2092, 0.0
  %v2099 = vlaneseq
  %v2100 = vshrl.u32 %v2099, 7
  %v2101 = vsub.s32 0, %v2100
  %v2102 = vrot.slane %v39, %v2101
  %v2103 = vmul.f32 %v2095, %v2102
  %v2104 = vmul.f32 %v2096, %v2102
  %v2105 = vmul.f32 %v2097, %v2102
  %v2106 = vmul.f32 %v2098, %v2102
  %v2107 = vld [vmem:[%s1] sm:$0xff]
  %v2108 = vld [vmem:[%s1 + $0x8] sm:$0xf]
  %s2109 = scalar_lea.vmem %s3, 36
  %v2110 = vld [vmem:[%s2109] sm:$0xf]
  %v2113 = vcombine.high %v2107, %v2107
  %v2115 = vunpack.c.l.s4 1983009808
  %v2116 = vunpack.c.0.s8 %v2115
  %v2117 = vlaneseq
  %v2118 = vshrl.u32 %v2117, 7
  %v2119 = vsub.s32 %v2116, %v2118
  %v2120 = vrot.slane %v2107, %v2119
  %v2122 = vunpack.c.l.s4 1983009808
  %v2123 = vunpack.c.0.s8 %v2122
  %v2124 = vlaneseq
  %v2125 = vshrl.u32 %v2124, 7
  %v2126 = vsub.s32 %v2123, %v2125
  %v2127 = vrot.slane %v2113, %v2126
  %v2128 = vcombine.high %v2120, %v2120
  %v2129 = vcombine.high %v2127, %v2127
  %v2131 = vunpack.c.l.s4 1983009808
  %v2132 = vunpack.c.0.s8 %v2131
  %v2133 = vlaneseq
  %v2134 = vshrl.u32 %v2133, 7
  %v2135 = vsub.s32 %v2132, %v2134
  %v2136 = vrot.slane %v2108, %v2135
  %v2137 = vcombine.high %v2136, %v2136
  %v2139 = vsel %vm70, %v2110, 0
  %v2142 = vsel %vm74, %v2120, 0
  %v2145 = vsel %vm74, %v2128, 0
  %v2148 = vsel %vm74, %v2127, 0
  %v2151 = vsel %vm74, %v2129, 0
  %v2154 = vsel %vm74, %v2136, 0
  %v2157 = vsel %vm74, %v2137, 0
  %2159 = vmatprep.subr.bf16.mxu0 %v2145
  %2160 = vmatpush1.bf16.msra.mxu0 %v2142
  %2161 = vmatprep.subr.bf16.mxu0 0
  %2162 = vmatpush1.bf16.msra.mxu0 0
  %2163 = vmatprep.subr.bf16.mxu0 0
  %2164 = vmatpush1.bf16.msra.mxu0 0
  %2165 = vmatprep.subr.bf16.mxu0 0
  %2166 = vmatpush1.bf16.msra.mxu0 0
  %2167 = vmatprep.subr.bf16.mxu0 0
  %2168 = vmatpush1.bf16.msra.mxu0 0
  %2169 = vmatprep.subr.bf16.mxu0 0
  %2170 = vmatpush1.bf16.msra.mxu0 0
  %2171 = vmatprep.subr.bf16.mxu0 0
  %2172 = vmatpush1.bf16.msra.mxu0 0
  %2173 = vmatprep.subr.bf16.mxu0 0
  %2174 = vmatpush1.bf16.msra.mxu0 0
  %2175 = vmatprep.subr.bf16.mxu0 0
  %2176 = vmatpush1.bf16.msra.mxu0 0
  %2177 = vmatprep.subr.bf16.mxu0 0
  %2178 = vmatpush1.bf16.msra.mxu0 0
  %2179 = vmatprep.subr.bf16.mxu0 0
  %2180 = vmatpush1.bf16.msra.mxu0 0
  %2181 = vmatprep.subr.bf16.mxu0 0
  %2182 = vmatpush1.bf16.msra.mxu0 0
  %2183 = vmatprep.subr.bf16.mxu0 0
  %2184 = vmatpush1.bf16.msra.mxu0 0
  %2185 = vmatprep.subr.bf16.mxu0 0
  %2186 = vmatpush1.bf16.msra.mxu0 0
  %2187 = vmatprep.subr.bf16.mxu0 0
  %2188 = vmatpush1.bf16.msra.mxu0 0
  %2189 = vmatprep.subr.bf16.mxu0 0
  %2190 = vmatpush1.bf16.msra.mxu0 0
  %2191 = vmatprep.mubr.bf16.mxu0 0
  %2192 = vmatmul.mubr.bf16.gmra.mrb[0].mxu0 %v2139
  %v2193 = vpop.f32.mrb[0].mxu0
  %v2194 = vadd.f32 0.0, %v2193
  %v2195 = vpop.f32.mrb[0].mxu0
  %v2196 = vadd.f32 0.0, %v2195
  %v2197 = vpop.f32.mrb[0].mxu0
  %v2198 = vpop.f32.mrb[0].mxu0
  %2199 = vdwg.mxu0
  %2200 = vmatprep.subr.bf16.mxu0 %v2151
  %2201 = vmatpush1.bf16.msra.mxu0 %v2148
  %2202 = vmatprep.subr.bf16.mxu0 0
  %2203 = vmatpush1.bf16.msra.mxu0 0
  %2204 = vmatprep.subr.bf16.mxu0 0
  %2205 = vmatpush1.bf16.msra.mxu0 0
  %2206 = vmatprep.subr.bf16.mxu0 0
  %2207 = vmatpush1.bf16.msra.mxu0 0
  %2208 = vmatprep.subr.bf16.mxu0 0
  %2209 = vmatpush1.bf16.msra.mxu0 0
  %2210 = vmatprep.subr.bf16.mxu0 0
  %2211 = vmatpush1.bf16.msra.mxu0 0
  %2212 = vmatprep.subr.bf16.mxu0 0
  %2213 = vmatpush1.bf16.msra.mxu0 0
  %2214 = vmatprep.subr.bf16.mxu0 0
  %2215 = vmatpush1.bf16.msra.mxu0 0
  %2216 = vmatprep.subr.bf16.mxu0 0
  %2217 = vmatpush1.bf16.msra.mxu0 0
  %2218 = vmatprep.subr.bf16.mxu0 0
  %2219 = vmatpush1.bf16.msra.mxu0 0
  %2220 = vmatprep.subr.bf16.mxu0 0
  %2221 = vmatpush1.bf16.msra.mxu0 0
  %2222 = vmatprep.subr.bf16.mxu0 0
  %2223 = vmatpush1.bf16.msra.mxu0 0
  %2224 = vmatprep.subr.bf16.mxu0 0
  %2225 = vmatpush1.bf16.msra.mxu0 0
  %2226 = vmatprep.subr.bf16.mxu0 0
  %2227 = vmatpush1.bf16.msra.mxu0 0
  %2228 = vmatprep.subr.bf16.mxu0 0
  %2229 = vmatpush1.bf16.msra.mxu0 0
  %2230 = vmatprep.subr.bf16.mxu0 0
  %2231 = vmatpush1.bf16.msra.mxu0 0
  %2232 = vmatprep.mubr.bf16.mxu0 0
  %2233 = vmatmul.mubr.bf16.gmra.mrb[0].mxu0 %v2139
  %v2234 = vpop.f32.mrb[0].mxu0
  %v2235 = vadd.f32 0.0, %v2234
  %v2236 = vpop.f32.mrb[0].mxu0
  %v2237 = vadd.f32 0.0, %v2236
  %v2238 = vpop.f32.mrb[0].mxu0
  %v2239 = vpop.f32.mrb[0].mxu0
  %2240 = vdwg.mxu0
  %2241 = vmatprep.subr.bf16.mxu0 %v2157
  %2242 = vmatpush1.bf16.msra.mxu0 %v2154
  %2243 = vmatprep.subr.bf16.mxu0 0
  %2244 = vmatpush1.bf16.msra.mxu0 0
  %2245 = vmatprep.subr.bf16.mxu0 0
  %2246 = vmatpush1.bf16.msra.mxu0 0
  %2247 = vmatprep.subr.bf16.mxu0 0
  %2248 = vmatpush1.bf16.msra.mxu0 0
  %2249 = vmatprep.subr.bf16.mxu0 0
  %2250 = vmatpush1.bf16.msra.mxu0 0
  %2251 = vmatprep.subr.bf16.mxu0 0
  %2252 = vmatpush1.bf16.msra.mxu0 0
  %2253 = vmatprep.subr.bf16.mxu0 0
  %2254 = vmatpush1.bf16.msra.mxu0 0
  %2255 = vmatprep.subr.bf16.mxu0 0
  %2256 = vmatpush1.bf16.msra.mxu0 0
  %2257 = vmatprep.subr.bf16.mxu0 0
  %2258 = vmatpush1.bf16.msra.mxu0 0
  %2259 = vmatprep.subr.bf16.mxu0 0
  %2260 = vmatpush1.bf16.msra.mxu0 0
  %2261 = vmatprep.subr.bf16.mxu0 0
  %2262 = vmatpush1.bf16.msra.mxu0 0
  %2263 = vmatprep.subr.bf16.mxu0 0
  %2264 = vmatpush1.bf16.msra.mxu0 0
  %2265 = vmatprep.subr.bf16.mxu0 0
  %2266 = vmatpush1.bf16.msra.mxu0 0
  %2267 = vmatprep.subr.bf16.mxu0 0
  %2268 = vmatpush1.bf16.msra.mxu0 0
  %2269 = vmatprep.subr.bf16.mxu0 0
  %2270 = vmatpush1.bf16.msra.mxu0 0
  %2271 = vmatprep.subr.bf16.mxu0 0
  %2272 = vmatpush1.bf16.msra.mxu0 0
  %2273 = vmatprep.mubr.bf16.mxu0 0
  %2274 = vmatmul.mubr.bf16.gmra.mrb[0].mxu0 %v2139
  %v2275 = vpop.f32.mrb[0].mxu0
  %v2276 = vadd.f32 0.0, %v2275
  %v2277 = vpop.f32.mrb[0].mxu0
  %v2278 = vadd.f32 0.0, %v2277
  %v2279 = vpop.f32.mrb[0].mxu0
  %v2280 = vpop.f32.mrb[0].mxu0
  %2281 = vdwg.mxu0
  %2282 = vst [vmem:[#allocation2] sm:$0xff] %v2194
  %2283 = vst [vmem:[#allocation2 + $0x8] sm:$0xff] %v2196
  %2284 = vst [vmem:[#allocation2 + $0x10] sm:$0xff] %v2235
  %2285 = vst [vmem:[#allocation2 + $0x18] sm:$0xff] %v2237
  %2286 = vst [vmem:[#allocation2 + $0x20] sm:$0xff] %v2276
  %2287 = vst.msk [vmem:[#allocation2 + $0x28] sm:$0xff] %vm221, %v2278
  %s2288 = scalar_lea.vmem %s3, 40
  %v2289 = vld [vmem:[%s2288] sm:$0xf]
  %2290 = vrot.lane.b32.xlu0 %v2120, 127
  %v2291 = vpop.permute.xlu0 %2290
  %2292 = vrot.lane.b32.xlu0 %v2128, 127
  %v2293 = vpop.permute.xlu0 %2292
  %2294 = vrot.lane.b32.xlu0 %v2127, 127
  %v2295 = vpop.permute.xlu0 %2294
  %2296 = vrot.lane.b32.xlu0 %v2129, 127
  %v2297 = vpop.permute.xlu0 %2296
  %2298 = vrot.lane.b32.xlu0 %v2136, 127
  %v2299 = vpop.permute.xlu0 %2298
  %2300 = vrot.lane.b32.xlu0 %v2137, 127
  %v2301 = vpop.permute.xlu0 %2300
  %v2302 = vsel %vm237, %v2291, %v2293
  %v2303 = vsel %vm237, %v2293, %v2295
  %v2304 = vsel %vm237, %v2295, %v2297
  %v2305 = vsel %vm237, %v2297, %v2299
  %v2306 = vsel %vm237, %v2299, %v2301
  %v2308 = vsel %vm70, %v2289, 0
  %v2311 = vsel %vm74, %v2302, 0
  %v2314 = vsel %vm74, %v2303, 0
  %v2317 = vsel %vm74, %v2304, 0
  %v2320 = vsel %vm74, %v2305, 0
  %v2323 = vsel %vm74, %v2306, 0
  %v2326 = vsel %vm74, %v2301, 0
  %2328 = vmatprep.subr.bf16.mxu0 %v2314
  %2329 = vmatpush1.bf16.msra.mxu0 %v2311
  %2330 = vmatprep.subr.bf16.mxu0 0
  %2331 = vmatpush1.bf16.msra.mxu0 0
  %2332 = vmatprep.subr.bf16.mxu0 0
  %2333 = vmatpush1.bf16.msra.mxu0 0
  %2334 = vmatprep.subr.bf16.mxu0 0
  %2335 = vmatpush1.bf16.msra.mxu0 0
  %2336 = vmatprep.subr.bf16.mxu0 0
  %2337 = vmatpush1.bf16.msra.mxu0 0
  %2338 = vmatprep.subr.bf16.mxu0 0
  %2339 = vmatpush1.bf16.msra.mxu0 0
  %2340 = vmatprep.subr.bf16.mxu0 0
  %2341 = vmatpush1.bf16.msra.mxu0 0
  %2342 = vmatprep.subr.bf16.mxu0 0
  %2343 = vmatpush1.bf16.msra.mxu0 0
  %2344 = vmatprep.subr.bf16.mxu0 0
  %2345 = vmatpush1.bf16.msra.mxu0 0
  %2346 = vmatprep.subr.bf16.mxu0 0
  %2347 = vmatpush1.bf16.msra.mxu0 0
  %2348 = vmatprep.subr.bf16.mxu0 0
  %2349 = vmatpush1.bf16.msra.mxu0 0
  %2350 = vmatprep.subr.bf16.mxu0 0
  %2351 = vmatpush1.bf16.msra.mxu0 0
  %2352 = vmatprep.subr.bf16.mxu0 0
  %2353 = vmatpush1.bf16.msra.mxu0 0
  %2354 = vmatprep.subr.bf16.mxu0 0
  %2355 = vmatpush1.bf16.msra.mxu0 0
  %2356 = vmatprep.subr.bf16.mxu0 0
  %2357 = vmatpush1.bf16.msra.mxu0 0
  %2358 = vmatprep.subr.bf16.mxu0 0
  %2359 = vmatpush1.bf16.msra.mxu0 0
  %2360 = vmatprep.mubr.bf16.mxu0 0
  %2361 = vmatmul.mubr.bf16.gmra.mrb[0].mxu0 %v2308
  %v2362 = vpop.f32.mrb[0].mxu0
  %v2363 = vadd.f32 0.0, %v2362
  %v2364 = vpop.f32.mrb[0].mxu0
  %v2365 = vadd.f32 0.0, %v2364
  %v2366 = vpop.f32.mrb[0].mxu0
  %v2367 = vpop.f32.mrb[0].mxu0
  %2368 = vdwg.mxu0
  %2369 = vmatprep.subr.bf16.mxu0 %v2320
  %2370 = vmatpush1.bf16.msra.mxu0 %v2317
  %2371 = vmatprep.subr.bf16.mxu0 0
  %2372 = vmatpush1.bf16.msra.mxu0 0
  %2373 = vmatprep.subr.bf16.mxu0 0
  %2374 = vmatpush1.bf16.msra.mxu0 0
  %2375 = vmatprep.subr.bf16.mxu0 0
  %2376 = vmatpush1.bf16.msra.mxu0 0
  %2377 = vmatprep.subr.bf16.mxu0 0
  %2378 = vmatpush1.bf16.msra.mxu0 0
  %2379 = vmatprep.subr.bf16.mxu0 0
  %2380 = vmatpush1.bf16.msra.mxu0 0
  %2381 = vmatprep.subr.bf16.mxu0 0
  %2382 = vmatpush1.bf16.msra.mxu0 0
  %2383 = vmatprep.subr.bf16.mxu0 0
  %2384 = vmatpush1.bf16.msra.mxu0 0
  %2385 = vmatprep.subr.bf16.mxu0 0
  %2386 = vmatpush1.bf16.msra.mxu0 0
  %2387 = vmatprep.subr.bf16.mxu0 0
  %2388 = vmatpush1.bf16.msra.mxu0 0
  %2389 = vmatprep.subr.bf16.mxu0 0
  %2390 = vmatpush1.bf16.msra.mxu0 0
  %2391 = vmatprep.subr.bf16.mxu0 0
  %2392 = vmatpush1.bf16.msra.mxu0 0
  %2393 = vmatprep.subr.bf16.mxu0 0
  %2394 = vmatpush1.bf16.msra.mxu0 0
  %2395 = vmatprep.subr.bf16.mxu0 0
  %2396 = vmatpush1.bf16.msra.mxu0 0
  %2397 = vmatprep.subr.bf16.mxu0 0
  %2398 = vmatpush1.bf16.msra.mxu0 0
  %2399 = vmatprep.subr.bf16.mxu0 0
  %2400 = vmatpush1.bf16.msra.mxu0 0
  %2401 = vmatprep.mubr.bf16.mxu0 0
  %2402 = vmatmul.mubr.bf16.gmra.mrb[0].mxu0 %v2308
  %v2403 = vpop.f32.mrb[0].mxu0
  %v2404 = vadd.f32 0.0, %v2403
  %v2405 = vpop.f32.mrb[0].mxu0
  %v2406 = vadd.f32 0.0, %v2405
  %v2407 = vpop.f32.mrb[0].mxu0
  %v2408 = vpop.f32.mrb[0].mxu0
  %2409 = vdwg.mxu0
  %2410 = vmatprep.subr.bf16.mxu0 %v2326
  %2411 = vmatpush1.bf16.msra.mxu0 %v2323
  %2412 = vmatprep.subr.bf16.mxu0 0
  %2413 = vmatpush1.bf16.msra.mxu0 0
  %2414 = vmatprep.subr.bf16.mxu0 0
  %2415 = vmatpush1.bf16.msra.mxu0 0
  %2416 = vmatprep.subr.bf16.mxu0 0
  %2417 = vmatpush1.bf16.msra.mxu0 0
  %2418 = vmatprep.subr.bf16.mxu0 0
  %2419 = vmatpush1.bf16.msra.mxu0 0
  %2420 = vmatprep.subr.bf16.mxu0 0
  %2421 = vmatpush1.bf16.msra.mxu0 0
  %2422 = vmatprep.subr.bf16.mxu0 0
  %2423 = vmatpush1.bf16.msra.mxu0 0
  %2424 = vmatprep.subr.bf16.mxu0 0
  %2425 = vmatpush1.bf16.msra.mxu0 0
  %2426 = vmatprep.subr.bf16.mxu0 0
  %2427 = vmatpush1.bf16.msra.mxu0 0
  %2428 = vmatprep.subr.bf16.mxu0 0
  %2429 = vmatpush1.bf16.msra.mxu0 0
  %2430 = vmatprep.subr.bf16.mxu0 0
  %2431 = vmatpush1.bf16.msra.mxu0 0
  %2432 = vmatprep.subr.bf16.mxu0 0
  %2433 = vmatpush1.bf16.msra.mxu0 0
  %2434 = vmatprep.subr.bf16.mxu0 0
  %2435 = vmatpush1.bf16.msra.mxu0 0
  %2436 = vmatprep.subr.bf16.mxu0 0
  %2437 = vmatpush1.bf16.msra.mxu0 0
  %2438 = vmatprep.subr.bf16.mxu0 0
  %2439 = vmatpush1.bf16.msra.mxu0 0
  %2440 = vmatprep.subr.bf16.mxu0 0
  %2441 = vmatpush1.bf16.msra.mxu0 0
  %2442 = vmatprep.mubr.bf16.mxu0 0
  %2443 = vmatmul.mubr.bf16.gmra.mrb[0].mxu0 %v2308
  %v2444 = vpop.f32.mrb[0].mxu0
  %v2445 = vadd.f32 0.0, %v2444
  %v2446 = vpop.f32.mrb[0].mxu0
  %v2447 = vadd.f32 0.0, %v2446
  %v2448 = vpop.f32.mrb[0].mxu0
  %v2449 = vpop.f32.mrb[0].mxu0
  %2450 = vdwg.mxu0
  %v2451 = vld [vmem:[#allocation2] sm:$0xff]
  %v2452 = vld [vmem:[#allocation2 + $0x8] sm:$0xff]
  %v2453 = vld [vmem:[#allocation2 + $0x10] sm:$0xff]
  %v2454 = vld [vmem:[#allocation2 + $0x18] sm:$0xff]
  %v2455 = vld [vmem:[#allocation2 + $0x20] sm:$0xff]
  %v2456 = vld [vmem:[#allocation2 + $0x28] sm:$0xff]
  %v2457 = vadd.f32 %v2451, %v2363
  %v2458 = vadd.f32 %v2452, %v2365
  %v2459 = vadd.f32 %v2453, %v2404
  %v2460 = vadd.f32 %v2454, %v2406
  %v2461 = vadd.f32 %v2455, %v2445
  %v2462 = vadd.f32 %v2456, %v2447
  %2463 = vst [vmem:[#allocation2] sm:$0xff] %v2457
  %2464 = vst [vmem:[#allocation2 + $0x8] sm:$0xff] %v2458
  %2465 = vst [vmem:[#allocation2 + $0x10] sm:$0xff] %v2459
  %2466 = vst [vmem:[#allocation2 + $0x18] sm:$0xff] %v2460
  %2467 = vst [vmem:[#allocation2 + $0x20] sm:$0xff] %v2461
  %2468 = vst.msk [vmem:[#allocation2 + $0x28] sm:$0xff] %vm221, %v2462
  %s2469 = scalar_lea.vmem %s3, 44
  %v2470 = vld [vmem:[%s2469] sm:$0xf]
  %2471 = vrot.lane.b32.xlu0 %v2120, 126
  %v2472 = vpop.permute.xlu0 %2471
  %2473 = vrot.lane.b32.xlu0 %v2128, 126
  %v2474 = vpop.permute.xlu0 %2473
  %2475 = vrot.lane.b32.xlu0 %v2127, 126
  %v2476 = vpop.permute.xlu0 %2475
  %2477 = vrot.lane.b32.xlu0 %v2129, 126
  %v2478 = vpop.permute.xlu0 %2477
  %2479 = vrot.lane.b32.xlu0 %v2136, 126
  %v2480 = vpop.permute.xlu0 %2479
  %2481 = vrot.lane.b32.xlu0 %v2137, 126
  %v2482 = vpop.permute.xlu0 %2481
  %v2483 = vsel %vm419, %v2472, %v2474
  %v2484 = vsel %vm419, %v2474, %v2476
  %v2485 = vsel %vm419, %v2476, %v2478
  %v2486 = vsel %vm419, %v2478, %v2480
  %v2487 = vsel %vm419, %v2480, %v2482
  %v2489 = vsel %vm70, %v2470, 0
  %v2492 = vsel %vm74, %v2483, 0
  %v2495 = vsel %vm74, %v2484, 0
  %v2498 = vsel %vm74, %v2485, 0
  %v2501 = vsel %vm74, %v2486, 0
  %v2504 = vsel %vm74, %v2487, 0
  %v2507 = vsel %vm74, %v2482, 0
  %2509 = vmatprep.subr.bf16.mxu0 %v2495
  %2510 = vmatpush1.bf16.msra.mxu0 %v2492
  %2511 = vmatprep.subr.bf16.mxu0 0
  %2512 = vmatpush1.bf16.msra.mxu0 0
  %2513 = vmatprep.subr.bf16.mxu0 0
  %2514 = vmatpush1.bf16.msra.mxu0 0
  %2515 = vmatprep.subr.bf16.mxu0 0
  %2516 = vmatpush1.bf16.msra.mxu0 0
  %2517 = vmatprep.subr.bf16.mxu0 0
  %2518 = vmatpush1.bf16.msra.mxu0 0
  %2519 = vmatprep.subr.bf16.mxu0 0
  %2520 = vmatpush1.bf16.msra.mxu0 0
  %2521 = vmatprep.subr.bf16.mxu0 0
  %2522 = vmatpush1.bf16.msra.mxu0 0
  %2523 = vmatprep.subr.bf16.mxu0 0
  %2524 = vmatpush1.bf16.msra.mxu0 0
  %2525 = vmatprep.subr.bf16.mxu0 0
  %2526 = vmatpush1.bf16.msra.mxu0 0
  %2527 = vmatprep.subr.bf16.mxu0 0
  %2528 = vmatpush1.bf16.msra.mxu0 0
  %2529 = vmatprep.subr.bf16.mxu0 0
  %2530 = vmatpush1.bf16.msra.mxu0 0
  %2531 = vmatprep.subr.bf16.mxu0 0
  %2532 = vmatpush1.bf16.msra.mxu0 0
  %2533 = vmatprep.subr.bf16.mxu0 0
  %2534 = vmatpush1.bf16.msra.mxu0 0
  %2535 = vmatprep.subr.bf16.mxu0 0
  %2536 = vmatpush1.bf16.msra.mxu0 0
  %2537 = vmatprep.subr.bf16.mxu0 0
  %2538 = vmatpush1.bf16.msra.mxu0 0
  %2539 = vmatprep.subr.bf16.mxu0 0
  %2540 = vmatpush1.bf16.msra.mxu0 0
  %2541 = vmatprep.mubr.bf16.mxu0 0
  %2542 = vmatmul.mubr.bf16.gmra.mrb[0].mxu0 %v2489
  %v2543 = vpop.f32.mrb[0].mxu0
  %v2544 = vadd.f32 0.0, %v2543
  %v2545 = vpop.f32.mrb[0].mxu0
  %v2546 = vadd.f32 0.0, %v2545
  %v2547 = vpop.f32.mrb[0].mxu0
  %v2548 = vpop.f32.mrb[0].mxu0
  %2549 = vdwg.mxu0
  %2550 = vmatprep.subr.bf16.mxu0 %v2501
  %2551 = vmatpush1.bf16.msra.mxu0 %v2498
  %2552 = vmatprep.subr.bf16.mxu0 0
  %2553 = vmatpush1.bf16.msra.mxu0 0
  %2554 = vmatprep.subr.bf16.mxu0 0
  %2555 = vmatpush1.bf16.msra.mxu0 0
  %2556 = vmatprep.subr.bf16.mxu0 0
  %2557 = vmatpush1.bf16.msra.mxu0 0
  %2558 = vmatprep.subr.bf16.mxu0 0
  %2559 = vmatpush1.bf16.msra.mxu0 0
  %2560 = vmatprep.subr.bf16.mxu0 0
  %2561 = vmatpush1.bf16.msra.mxu0 0
  %2562 = vmatprep.subr.bf16.mxu0 0
  %2563 = vmatpush1.bf16.msra.mxu0 0
  %2564 = vmatprep.subr.bf16.mxu0 0
  %2565 = vmatpush1.bf16.msra.mxu0 0
  %2566 = vmatprep.subr.bf16.mxu0 0
  %2567 = vmatpush1.bf16.msra.mxu0 0
  %2568 = vmatprep.subr.bf16.mxu0 0
  %2569 = vmatpush1.bf16.msra.mxu0 0
  %2570 = vmatprep.subr.bf16.mxu0 0
  %2571 = vmatpush1.bf16.msra.mxu0 0
  %2572 = vmatprep.subr.bf16.mxu0 0
  %2573 = vmatpush1.bf16.msra.mxu0 0
  %2574 = vmatprep.subr.bf16.mxu0 0
  %2575 = vmatpush1.bf16.msra.mxu0 0
  %2576 = vmatprep.subr.bf16.mxu0 0
  %2577 = vmatpush1.bf16.msra.mxu0 0
  %2578 = vmatprep.subr.bf16.mxu0 0
  %2579 = vmatpush1.bf16.msra.mxu0 0
  %2580 = vmatprep.subr.bf16.mxu0 0
  %2581 = vmatpush1.bf16.msra.mxu0 0
  %2582 = vmatprep.mubr.bf16.mxu0 0
  %2583 = vmatmul.mubr.bf16.gmra.mrb[0].mxu0 %v2489
  %v2584 = vpop.f32.mrb[0].mxu0
  %v2585 = vadd.f32 0.0, %v2584
  %v2586 = vpop.f32.mrb[0].mxu0
  %v2587 = vadd.f32 0.0, %v2586
  %v2588 = vpop.f32.mrb[0].mxu0
  %v2589 = vpop.f32.mrb[0].mxu0
  %2590 = vdwg.mxu0
  %2591 = vmatprep.subr.bf16.mxu0 %v2507
  %2592 = vmatpush1.bf16.msra.mxu0 %v2504
  %2593 = vmatprep.subr.bf16.mxu0 0
  %2594 = vmatpush1.bf16.msra.mxu0 0
  %2595 = vmatprep.subr.bf16.mxu0 0
  %2596 = vmatpush1.bf16.msra.mxu0 0
  %2597 = vmatprep.subr.bf16.mxu0 0
  %2598 = vmatpush1.bf16.msra.mxu0 0
  %2599 = vmatprep.subr.bf16.mxu0 0
  %2600 = vmatpush1.bf16.msra.mxu0 0
  %2601 = vmatprep.subr.bf16.mxu0 0
  %2602 = vmatpush1.bf16.msra.mxu0 0
  %2603 = vmatprep.subr.bf16.mxu0 0
  %2604 = vmatpush1.bf16.msra.mxu0 0
  %2605 = vmatprep.subr.bf16.mxu0 0
  %2606 = vmatpush1.bf16.msra.mxu0 0
  %2607 = vmatprep.subr.bf16.mxu0 0
  %2608 = vmatpush1.bf16.msra.mxu0 0
  %2609 = vmatprep.subr.bf16.mxu0 0
  %2610 = vmatpush1.bf16.msra.mxu0 0
  %2611 = vmatprep.subr.bf16.mxu0 0
  %2612 = vmatpush1.bf16.msra.mxu0 0
  %2613 = vmatprep.subr.bf16.mxu0 0
  %2614 = vmatpush1.bf16.msra.mxu0 0
  %2615 = vmatprep.subr.bf16.mxu0 0
  %2616 = vmatpush1.bf16.msra.mxu0 0
  %2617 = vmatprep.subr.bf16.mxu0 0
  %2618 = vmatpush1.bf16.msra.mxu0 0
  %2619 = vmatprep.subr.bf16.mxu0 0
  %2620 = vmatpush1.bf16.msra.mxu0 0
  %2621 = vmatprep.subr.bf16.mxu0 0
  %2622 = vmatpush1.bf16.msra.mxu0 0
  %2623 = vmatprep.mubr.bf16.mxu0 0
  %2624 = vmatmul.mubr.bf16.gmra.mrb[0].mxu0 %v2489
  %v2625 = vpop.f32.mrb[0].mxu0
  %v2626 = vadd.f32 0.0, %v2625
  %v2627 = vpop.f32.mrb[0].mxu0
  %v2628 = vadd.f32 0.0, %v2627
  %v2629 = vpop.f32.mrb[0].mxu0
  %v2630 = vpop.f32.mrb[0].mxu0
  %2631 = vdwg.mxu0
  %v2632 = vld [vmem:[#allocation2] sm:$0xff]
  %v2633 = vld [vmem:[#allocation2 + $0x8] sm:$0xff]
  %v2634 = vld [vmem:[#allocation2 + $0x10] sm:$0xff]
  %v2635 = vld [vmem:[#allocation2 + $0x18] sm:$0xff]
  %v2636 = vld [vmem:[#allocation2 + $0x20] sm:$0xff]
  %v2637 = vld [vmem:[#allocation2 + $0x28] sm:$0xff]
  %v2638 = vadd.f32 %v2632, %v2544
  %v2639 = vadd.f32 %v2633, %v2546
  %v2640 = vadd.f32 %v2634, %v2585
  %v2641 = vadd.f32 %v2635, %v2587
  %v2642 = vadd.f32 %v2636, %v2626
  %v2643 = vadd.f32 %v2637, %v2628
  %2644 = vst [vmem:[#allocation2] sm:$0xff] %v2638
  %2645 = vst [vmem:[#allocation2 + $0x8] sm:$0xff] %v2639
  %2646 = vst [vmem:[#allocation2 + $0x10] sm:$0xff] %v2640
  %2647 = vst [vmem:[#allocation2 + $0x18] sm:$0xff] %v2641
  %2648 = vst [vmem:[#allocation2 + $0x20] sm:$0xff] %v2642
  %2649 = vst.msk [vmem:[#allocation2 + $0x28] sm:$0xff] %vm221, %v2643
  %s2650 = scalar_lea.vmem %s3, 48
  %v2651 = vld [vmem:[%s2650] sm:$0xf]
  %2652 = vrot.lane.b32.xlu0 %v2120, 110
  %v2653 = vpop.permute.xlu0 %2652
  %2654 = vrot.lane.b32.xlu0 %v2128, 110
  %v2655 = vpop.permute.xlu0 %2654
  %2656 = vrot.lane.b32.xlu0 %v2127, 110
  %v2657 = vpop.permute.xlu0 %2656
  %2658 = vrot.lane.b32.xlu0 %v2129, 110
  %v2659 = vpop.permute.xlu0 %2658
  %2660 = vrot.lane.b32.xlu0 %v2136, 110
  %v2661 = vpop.permute.xlu0 %2660
  %2662 = vrot.lane.b32.xlu0 %v2137, 110
  %v2663 = vpop.permute.xlu0 %2662
  %v2664 = vsel %vm601, %v2653, %v2655
  %v2665 = vsel %vm601, %v2655, %v2657
  %v2666 = vsel %vm601, %v2657, %v2659
  %v2667 = vsel %vm601, %v2659, %v2661
  %v2668 = vsel %vm601, %v2661, %v2663
  %v2670 = vsel %vm70, %v2651, 0
  %v2673 = vsel %vm74, %v2664, 0
  %v2676 = vsel %vm74, %v2665, 0
  %v2679 = vsel %vm74, %v2666, 0
  %v2682 = vsel %vm74, %v2667, 0
  %v2685 = vsel %vm74, %v2668, 0
  %v2688 = vsel %vm74, %v2663, 0
  %2690 = vmatprep.subr.bf16.mxu0 %v2676
  %2691 = vmatpush1.bf16.msra.mxu0 %v2673
  %2692 = vmatprep.subr.bf16.mxu0 0
  %2693 = vmatpush1.bf16.msra.mxu0 0
  %2694 = vmatprep.subr.bf16.mxu0 0
  %2695 = vmatpush1.bf16.msra.mxu0 0
  %2696 = vmatprep.subr.bf16.mxu0 0
  %2697 = vmatpush1.bf16.msra.mxu0 0
  %2698 = vmatprep.subr.bf16.mxu0 0
  %2699 = vmatpush1.bf16.msra.mxu0 0
  %2700 = vmatprep.subr.bf16.mxu0 0
  %2701 = vmatpush1.bf16.msra.mxu0 0
  %2702 = vmatprep.subr.bf16.mxu0 0
  %2703 = vmatpush1.bf16.msra.mxu0 0
  %2704 = vmatprep.subr.bf16.mxu0 0
  %2705 = vmatpush1.bf16.msra.mxu0 0
  %2706 = vmatprep.subr.bf16.mxu0 0
  %2707 = vmatpush1.bf16.msra.mxu0 0
  %2708 = vmatprep.subr.bf16.mxu0 0
  %2709 = vmatpush1.bf16.msra.mxu0 0
  %2710 = vmatprep.subr.bf16.mxu0 0
  %2711 = vmatpush1.bf16.msra.mxu0 0
  %2712 = vmatprep.subr.bf16.mxu0 0
  %2713 = vmatpush1.bf16.msra.mxu0 0
  %2714 = vmatprep.subr.bf16.mxu0 0
  %2715 = vmatpush1.bf16.msra.mxu0 0
  %2716 = vmatprep.subr.bf16.mxu0 0
  %2717 = vmatpush1.bf16.msra.mxu0 0
  %2718 = vmatprep.subr.bf16.mxu0 0
  %2719 = vmatpush1.bf16.msra.mxu0 0
  %2720 = vmatprep.subr.bf16.mxu0 0
  %2721 = vmatpush1.bf16.msra.mxu0 0
  %2722 = vmatprep.mubr.bf16.mxu0 0
  %2723 = vmatmul.mubr.bf16.gmra.mrb[0].mxu0 %v2670
  %v2724 = vpop.f32.mrb[0].mxu0
  %v2725 = vadd.f32 0.0, %v2724
  %v2726 = vpop.f32.mrb[0].mxu0
  %v2727 = vadd.f32 0.0, %v2726
  %v2728 = vpop.f32.mrb[0].mxu0
  %v2729 = vpop.f32.mrb[0].mxu0
  %2730 = vdwg.mxu0
  %2731 = vmatprep.subr.bf16.mxu0 %v2682
  %2732 = vmatpush1.bf16.msra.mxu0 %v2679
  %2733 = vmatprep.subr.bf16.mxu0 0
  %2734 = vmatpush1.bf16.msra.mxu0 0
  %2735 = vmatprep.subr.bf16.mxu0 0
  %2736 = vmatpush1.bf16.msra.mxu0 0
  %2737 = vmatprep.subr.bf16.mxu0 0
  %2738 = vmatpush1.bf16.msra.mxu0 0
  %2739 = vmatprep.subr.bf16.mxu0 0
  %2740 = vmatpush1.bf16.msra.mxu0 0
  %2741 = vmatprep.subr.bf16.mxu0 0
  %2742 = vmatpush1.bf16.msra.mxu0 0
  %2743 = vmatprep.subr.bf16.mxu0 0
  %2744 = vmatpush1.bf16.msra.mxu0 0
  %2745 = vmatprep.subr.bf16.mxu0 0
  %2746 = vmatpush1.bf16.msra.mxu0 0
  %2747 = vmatprep.subr.bf16.mxu0 0
  %2748 = vmatpush1.bf16.msra.mxu0 0
  %2749 = vmatprep.subr.bf16.mxu0 0
  %2750 = vmatpush1.bf16.msra.mxu0 0
  %2751 = vmatprep.subr.bf16.mxu0 0
  %2752 = vmatpush1.bf16.msra.mxu0 0
  %2753 = vmatprep.subr.bf16.mxu0 0
  %2754 = vmatpush1.bf16.msra.mxu0 0
  %2755 = vmatprep.subr.bf16.mxu0 0
  %2756 = vmatpush1.bf16.msra.mxu0 0
  %2757 = vmatprep.subr.bf16.mxu0 0
  %2758 = vmatpush1.bf16.msra.mxu0 0
  %2759 = vmatprep.subr.bf16.mxu0 0
  %2760 = vmatpush1.bf16.msra.mxu0 0
  %2761 = vmatprep.subr.bf16.mxu0 0
  %2762 = vmatpush1.bf16.msra.mxu0 0
  %2763 = vmatprep.mubr.bf16.mxu0 0
  %2764 = vmatmul.mubr.bf16.gmra.mrb[0].mxu0 %v2670
  %v2765 = vpop.f32.mrb[0].mxu0
  %v2766 = vadd.f32 0.0, %v2765
  %v2767 = vpop.f32.mrb[0].mxu0
  %v2768 = vadd.f32 0.0, %v2767
  %v2769 = vpop.f32.mrb[0].mxu0
  %v2770 = vpop.f32.mrb[0].mxu0
  %2771 = vdwg.mxu0
  %2772 = vmatprep.subr.bf16.mxu0 %v2688
  %2773 = vmatpush1.bf16.msra.mxu0 %v2685
  %2774 = vmatprep.subr.bf16.mxu0 0
  %2775 = vmatpush1.bf16.msra.mxu0 0
  %2776 = vmatprep.subr.bf16.mxu0 0
  %2777 = vmatpush1.bf16.msra.mxu0 0
  %2778 = vmatprep.subr.bf16.mxu0 0
  %2779 = vmatpush1.bf16.msra.mxu0 0
  %2780 = vmatprep.subr.bf16.mxu0 0
  %2781 = vmatpush1.bf16.msra.mxu0 0
  %2782 = vmatprep.subr.bf16.mxu0 0
  %2783 = vmatpush1.bf16.msra.mxu0 0
  %2784 = vmatprep.subr.bf16.mxu0 0
  %2785 = vmatpush1.bf16.msra.mxu0 0
  %2786 = vmatprep.subr.bf16.mxu0 0
  %2787 = vmatpush1.bf16.msra.mxu0 0
  %2788 = vmatprep.subr.bf16.mxu0 0
  %2789 = vmatpush1.bf16.msra.mxu0 0
  %2790 = vmatprep.subr.bf16.mxu0 0
  %2791 = vmatpush1.bf16.msra.mxu0 0
  %2792 = vmatprep.subr.bf16.mxu0 0
  %2793 = vmatpush1.bf16.msra.mxu0 0
  %2794 = vmatprep.subr.bf16.mxu0 0
  %2795 = vmatpush1.bf16.msra.mxu0 0
  %2796 = vmatprep.subr.bf16.mxu0 0
  %2797 = vmatpush1.bf16.msra.mxu0 0
  %2798 = vmatprep.subr.bf16.mxu0 0
  %2799 = vmatpush1.bf16.msra.mxu0 0
  %2800 = vmatprep.subr.bf16.mxu0 0
  %2801 = vmatpush1.bf16.msra.mxu0 0
  %2802 = vmatprep.subr.bf16.mxu0 0
  %2803 = vmatpush1.bf16.msra.mxu0 0
  %2804 = vmatprep.mubr.bf16.mxu0 0
  %2805 = vmatmul.mubr.bf16.gmra.mrb[0].mxu0 %v2670
  %v2806 = vpop.f32.mrb[0].mxu0
  %v2807 = vadd.f32 0.0, %v2806
  %v2808 = vpop.f32.mrb[0].mxu0
  %v2809 = vadd.f32 0.0, %v2808
  %v2810 = vpop.f32.mrb[0].mxu0
  %v2811 = vpop.f32.mrb[0].mxu0
  %2812 = vdwg.mxu0
  %v2813 = vld [vmem:[#allocation2] sm:$0xff]
  %v2814 = vld [vmem:[#allocation2 + $0x8] sm:$0xff]
  %v2815 = vld [vmem:[#allocation2 + $0x10] sm:$0xff]
  %v2816 = vld [vmem:[#allocation2 + $0x18] sm:$0xff]
  %v2817 = vld [vmem:[#allocation2 + $0x20] sm:$0xff]
  %v2818 = vld [vmem:[#allocation2 + $0x28] sm:$0xff]
  %v2819 = vadd.f32 %v2813, %v2725
  %v2820 = vadd.f32 %v2814, %v2727
  %v2821 = vadd.f32 %v2815, %v2766
  %v2822 = vadd.f32 %v2816, %v2768
  %v2823 = vadd.f32 %v2817, %v2807
  %v2824 = vadd.f32 %v2818, %v2809
  %2825 = vst [vmem:[#allocation2] sm:$0xff] %v2819
  %2826 = vst [vmem:[#allocation2 + $0x8] sm:$0xff] %v2820
  %2827 = vst [vmem:[#allocation2 + $0x10] sm:$0xff] %v2821
  %2828 = vst [vmem:[#allocation2 + $0x18] sm:$0xff] %v2822
  %2829 = vst [vmem:[#allocation2 + $0x20] sm:$0xff] %v2823
  %2830 = vst.msk [vmem:[#allocation2 + $0x28] sm:$0xff] %vm221, %v2824
  %s2831 = scalar_lea.vmem %s3, 52
  %v2832 = vld [vmem:[%s2831] sm:$0xf]
  %2833 = vrot.lane.b32.xlu0 %v2120, 109
  %v2834 = vpop.permute.xlu0 %2833
  %2835 = vrot.lane.b32.xlu0 %v2128, 109
  %v2836 = vpop.permute.xlu0 %2835
  %2837 = vrot.lane.b32.xlu0 %v2127, 109
  %v2838 = vpop.permute.xlu0 %2837
  %2839 = vrot.lane.b32.xlu0 %v2129, 109
  %v2840 = vpop.permute.xlu0 %2839
  %2841 = vrot.lane.b32.xlu0 %v2136, 109
  %v2842 = vpop.permute.xlu0 %2841
  %2843 = vrot.lane.b32.xlu0 %v2137, 109
  %v2844 = vpop.permute.xlu0 %2843
  %v2845 = vsel %vm783, %v2834, %v2836
  %v2846 = vsel %vm783, %v2836, %v2838
  %v2847 = vsel %vm783, %v2838, %v2840
  %v2848 = vsel %vm783, %v2840, %v2842
  %v2849 = vsel %vm783, %v2842, %v2844
  %v2851 = vsel %vm70, %v2832, 0
  %v2854 = vsel %vm74, %v2845, 0
  %v2857 = vsel %vm74, %v2846, 0
  %v2860 = vsel %vm74, %v2847, 0
  %v2863 = vsel %vm74, %v2848, 0
  %v2866 = vsel %vm74, %v2849, 0
  %v2869 = vsel %vm74, %v2844, 0
  %2871 = vmatprep.subr.bf16.mxu0 %v2857
  %2872 = vmatpush1.bf16.msra.mxu0 %v2854
  %2873 = vmatprep.subr.bf16.mxu0 0
  %2874 = vmatpush1.bf16.msra.mxu0 0
  %2875 = vmatprep.subr.bf16.mxu0 0
  %2876 = vmatpush1.bf16.msra.mxu0 0
  %2877 = vmatprep.subr.bf16.mxu0 0
  %2878 = vmatpush1.bf16.msra.mxu0 0
  %2879 = vmatprep.subr.bf16.mxu0 0
  %2880 = vmatpush1.bf16.msra.mxu0 0
  %2881 = vmatprep.subr.bf16.mxu0 0
  %2882 = vmatpush1.bf16.msra.mxu0 0
  %2883 = vmatprep.subr.bf16.mxu0 0
  %2884 = vmatpush1.bf16.msra.mxu0 0
  %2885 = vmatprep.subr.bf16.mxu0 0
  %2886 = vmatpush1.bf16.msra.mxu0 0
  %2887 = vmatprep.subr.bf16.mxu0 0
  %2888 = vmatpush1.bf16.msra.mxu0 0
  %2889 = vmatprep.subr.bf16.mxu0 0
  %2890 = vmatpush1.bf16.msra.mxu0 0
  %2891 = vmatprep.subr.bf16.mxu0 0
  %2892 = vmatpush1.bf16.msra.mxu0 0
  %2893 = vmatprep.subr.bf16.mxu0 0
  %2894 = vmatpush1.bf16.msra.mxu0 0
  %2895 = vmatprep.subr.bf16.mxu0 0
  %2896 = vmatpush1.bf16.msra.mxu0 0
  %2897 = vmatprep.subr.bf16.mxu0 0
  %2898 = vmatpush1.bf16.msra.mxu0 0
  %2899 = vmatprep.subr.bf16.mxu0 0
  %2900 = vmatpush1.bf16.msra.mxu0 0
  %2901 = vmatprep.subr.bf16.mxu0 0
  %2902 = vmatpush1.bf16.msra.mxu0 0
  %2903 = vmatprep.mubr.bf16.mxu0 0
  %2904 = vmatmul.mubr.bf16.gmra.mrb[0].mxu0 %v2851
  %v2905 = vpop.f32.mrb[0].mxu0
  %v2906 = vadd.f32 0.0, %v2905
  %v2907 = vpop.f32.mrb[0].mxu0
  %v2908 = vadd.f32 0.0, %v2907
  %v2909 = vpop.f32.mrb[0].mxu0
  %v2910 = vpop.f32.mrb[0].mxu0
  %2911 = vdwg.mxu0
  %2912 = vmatprep.subr.bf16.mxu0 %v2863
  %2913 = vmatpush1.bf16.msra.mxu0 %v2860
  %2914 = vmatprep.subr.bf16.mxu0 0
  %2915 = vmatpush1.bf16.msra.mxu0 0
  %2916 = vmatprep.subr.bf16.mxu0 0
  %2917 = vmatpush1.bf16.msra.mxu0 0
  %2918 = vmatprep.subr.bf16.mxu0 0
  %2919 = vmatpush1.bf16.msra.mxu0 0
  %2920 = vmatprep.subr.bf16.mxu0 0
  %2921 = vmatpush1.bf16.msra.mxu0 0
  %2922 = vmatprep.subr.bf16.mxu0 0
  %2923 = vmatpush1.bf16.msra.mxu0 0
  %2924 = vmatprep.subr.bf16.mxu0 0
  %2925 = vmatpush1.bf16.msra.mxu0 0
  %2926 = vmatprep.subr.bf16.mxu0 0
  %2927 = vmatpush1.bf16.msra.mxu0 0
  %2928 = vmatprep.subr.bf16.mxu0 0
  %2929 = vmatpush1.bf16.msra.mxu0 0
  %2930 = vmatprep.subr.bf16.mxu0 0
  %2931 = vmatpush1.bf16.msra.mxu0 0
  %2932 = vmatprep.subr.bf16.mxu0 0
  %2933 = vmatpush1.bf16.msra.mxu0 0
  %2934 = vmatprep.subr.bf16.mxu0 0
  %2935 = vmatpush1.bf16.msra.mxu0 0
  %2936 = vmatprep.subr.bf16.mxu0 0
  %2937 = vmatpush1.bf16.msra.mxu0 0
  %2938 = vmatprep.subr.bf16.mxu0 0
  %2939 = vmatpush1.bf16.msra.mxu0 0
  %2940 = vmatprep.subr.bf16.mxu0 0
  %2941 = vmatpush1.bf16.msra.mxu0 0
  %2942 = vmatprep.subr.bf16.mxu0 0
  %2943 = vmatpush1.bf16.msra.mxu0 0
  %2944 = vmatprep.mubr.bf16.mxu0 0
  %2945 = vmatmul.mubr.bf16.gmra.mrb[0].mxu0 %v2851
  %v2946 = vpop.f32.mrb[0].mxu0
  %v2947 = vadd.f32 0.0, %v2946
  %v2948 = vpop.f32.mrb[0].mxu0
  %v2949 = vadd.f32 0.0, %v2948
  %v2950 = vpop.f32.mrb[0].mxu0
  %v2951 = vpop.f32.mrb[0].mxu0
  %2952 = vdwg.mxu0
  %2953 = vmatprep.subr.bf16.mxu0 %v2869
  %2954 = vmatpush1.bf16.msra.mxu0 %v2866
  %2955 = vmatprep.subr.bf16.mxu0 0
  %2956 = vmatpush1.bf16.msra.mxu0 0
  %2957 = vmatprep.subr.bf16.mxu0 0
  %2958 = vmatpush1.bf16.msra.mxu0 0
  %2959 = vmatprep.subr.bf16.mxu0 0
  %2960 = vmatpush1.bf16.msra.mxu0 0
  %2961 = vmatprep.subr.bf16.mxu0 0
  %2962 = vmatpush1.bf16.msra.mxu0 0
  %2963 = vmatprep.subr.bf16.mxu0 0
  %2964 = vmatpush1.bf16.msra.mxu0 0
  %2965 = vmatprep.subr.bf16.mxu0 0
  %2966 = vmatpush1.bf16.msra.mxu0 0
  %2967 = vmatprep.subr.bf16.mxu0 0
  %2968 = vmatpush1.bf16.msra.mxu0 0
  %2969 = vmatprep.subr.bf16.mxu0 0
  %2970 = vmatpush1.bf16.msra.mxu0 0
  %2971 = vmatprep.subr.bf16.mxu0 0
  %2972 = vmatpush1.bf16.msra.mxu0 0
  %2973 = vmatprep.subr.bf16.mxu0 0
  %2974 = vmatpush1.bf16.msra.mxu0 0
  %2975 = vmatprep.subr.bf16.mxu0 0
  %2976 = vmatpush1.bf16.msra.mxu0 0
  %2977 = vmatprep.subr.bf16.mxu0 0
  %2978 = vmatpush1.bf16.msra.mxu0 0
  %2979 = vmatprep.subr.bf16.mxu0 0
  %2980 = vmatpush1.bf16.msra.mxu0 0
  %2981 = vmatprep.subr.bf16.mxu0 0
  %2982 = vmatpush1.bf16.msra.mxu0 0
  %2983 = vmatprep.subr.bf16.mxu0 0
  %2984 = vmatpush1.bf16.msra.mxu0 0
  %2985 = vmatprep.mubr.bf16.mxu0 0
  %2986 = vmatmul.mubr.bf16.gmra.mrb[0].mxu0 %v2851
  %v2987 = vpop.f32.mrb[0].mxu0
  %v2988 = vadd.f32 0.0, %v2987
  %v2989 = vpop.f32.mrb[0].mxu0
  %v2990 = vadd.f32 0.0, %v2989
  %v2991 = vpop.f32.mrb[0].mxu0
  %v2992 = vpop.f32.mrb[0].mxu0
  %2993 = vdwg.mxu0
  %v2994 = vld [vmem:[#allocation2] sm:$0xff]
  %v2995 = vld [vmem:[#allocation2 + $0x8] sm:$0xff]
  %v2996 = vld [vmem:[#allocation2 + $0x10] sm:$0xff]
  %v2997 = vld [vmem:[#allocation2 + $0x18] sm:$0xff]
  %v2998 = vld [vmem:[#allocation2 + $0x20] sm:$0xff]
  %v2999 = vld [vmem:[#allocation2 + $0x28] sm:$0xff]
  %v3000 = vadd.f32 %v2994, %v2906
  %v3001 = vadd.f32 %v2995, %v2908
  %v3002 = vadd.f32 %v2996, %v2947
  %v3003 = vadd.f32 %v2997, %v2949
  %v3004 = vadd.f32 %v2998, %v2988
  %v3005 = vadd.f32 %v2999, %v2990
  %3006 = vst [vmem:[#allocation2] sm:$0xff] %v3000
  %3007 = vst [vmem:[#allocation2 + $0x8] sm:$0xff] %v3001
  %3008 = vst [vmem:[#allocation2 + $0x10] sm:$0xff] %v3002
  %3009 = vst [vmem:[#allocation2 + $0x18] sm:$0xff] %v3003
  %3010 = vst [vmem:[#allocation2 + $0x20] sm:$0xff] %v3004
  %3011 = vst.msk [vmem:[#allocation2 + $0x28] sm:$0xff] %vm221, %v3005
  %s3012 = scalar_lea.vmem %s3, 56
  %v3013 = vld [vmem:[%s3012] sm:$0xf]
  %3014 = vrot.lane.b32.xlu0 %v2120, 108
  %v3015 = vpop.permute.xlu0 %3014
  %3016 = vrot.lane.b32.xlu0 %v2128, 108
  %v3017 = vpop.permute.xlu0 %3016
  %3018 = vrot.lane.b32.xlu0 %v2127, 108
  %v3019 = vpop.permute.xlu0 %3018
  %3020 = vrot.lane.b32.xlu0 %v2129, 108
  %v3021 = vpop.permute.xlu0 %3020
  %3022 = vrot.lane.b32.xlu0 %v2136, 108
  %v3023 = vpop.permute.xlu0 %3022
  %3024 = vrot.lane.b32.xlu0 %v2137, 108
  %v3025 = vpop.permute.xlu0 %3024
  %v3026 = vsel %vm965, %v3015, %v3017
  %v3027 = vsel %vm965, %v3017, %v3019
  %v3028 = vsel %vm965, %v3019, %v3021
  %v3029 = vsel %vm965, %v3021, %v3023
  %v3030 = vsel %vm965, %v3023, %v3025
  %v3032 = vsel %vm70, %v3013, 0
  %v3035 = vsel %vm74, %v3026, 0
  %v3038 = vsel %vm74, %v3027, 0
  %v3041 = vsel %vm74, %v3028, 0
  %v3044 = vsel %vm74, %v3029, 0
  %v3047 = vsel %vm74, %v3030, 0
  %v3050 = vsel %vm74, %v3025, 0
  %3052 = vmatprep.subr.bf16.mxu0 %v3038
  %3053 = vmatpush1.bf16.msra.mxu0 %v3035
  %3054 = vmatprep.subr.bf16.mxu0 0
  %3055 = vmatpush1.bf16.msra.mxu0 0
  %3056 = vmatprep.subr.bf16.mxu0 0
  %3057 = vmatpush1.bf16.msra.mxu0 0
  %3058 = vmatprep.subr.bf16.mxu0 0
  %3059 = vmatpush1.bf16.msra.mxu0 0
  %3060 = vmatprep.subr.bf16.mxu0 0
  %3061 = vmatpush1.bf16.msra.mxu0 0
  %3062 = vmatprep.subr.bf16.mxu0 0
  %3063 = vmatpush1.bf16.msra.mxu0 0
  %3064 = vmatprep.subr.bf16.mxu0 0
  %3065 = vmatpush1.bf16.msra.mxu0 0
  %3066 = vmatprep.subr.bf16.mxu0 0
  %3067 = vmatpush1.bf16.msra.mxu0 0
  %3068 = vmatprep.subr.bf16.mxu0 0
  %3069 = vmatpush1.bf16.msra.mxu0 0
  %3070 = vmatprep.subr.bf16.mxu0 0
  %3071 = vmatpush1.bf16.msra.mxu0 0
  %3072 = vmatprep.subr.bf16.mxu0 0
  %3073 = vmatpush1.bf16.msra.mxu0 0
  %3074 = vmatprep.subr.bf16.mxu0 0
  %3075 = vmatpush1.bf16.msra.mxu0 0
  %3076 = vmatprep.subr.bf16.mxu0 0
  %3077 = vmatpush1.bf16.msra.mxu0 0
  %3078 = vmatprep.subr.bf16.mxu0 0
  %3079 = vmatpush1.bf16.msra.mxu0 0
  %3080 = vmatprep.subr.bf16.mxu0 0
  %3081 = vmatpush1.bf16.msra.mxu0 0
  %3082 = vmatprep.subr.bf16.mxu0 0
  %3083 = vmatpush1.bf16.msra.mxu0 0
  %3084 = vmatprep.mubr.bf16.mxu0 0
  %3085 = vmatmul.mubr.bf16.gmra.mrb[0].mxu0 %v3032
  %v3086 = vpop.f32.mrb[0].mxu0
  %v3087 = vadd.f32 0.0, %v3086
  %v3088 = vpop.f32.mrb[0].mxu0
  %v3089 = vadd.f32 0.0, %v3088
  %v3090 = vpop.f32.mrb[0].mxu0
  %v3091 = vpop.f32.mrb[0].mxu0
  %3092 = vdwg.mxu0
  %3093 = vmatprep.subr.bf16.mxu0 %v3044
  %3094 = vmatpush1.bf16.msra.mxu0 %v3041
  %3095 = vmatprep.subr.bf16.mxu0 0
  %3096 = vmatpush1.bf16.msra.mxu0 0
  %3097 = vmatprep.subr.bf16.mxu0 0
  %3098 = vmatpush1.bf16.msra.mxu0 0
  %3099 = vmatprep.subr.bf16.mxu0 0
  %3100 = vmatpush1.bf16.msra.mxu0 0
  %3101 = vmatprep.subr.bf16.mxu0 0
  %3102 = vmatpush1.bf16.msra.mxu0 0
  %3103 = vmatprep.subr.bf16.mxu0 0
  %3104 = vmatpush1.bf16.msra.mxu0 0
  %3105 = vmatprep.subr.bf16.mxu0 0
  %3106 = vmatpush1.bf16.msra.mxu0 0
  %3107 = vmatprep.subr.bf16.mxu0 0
  %3108 = vmatpush1.bf16.msra.mxu0 0
  %3109 = vmatprep.subr.bf16.mxu0 0
  %3110 = vmatpush1.bf16.msra.mxu0 0
  %3111 = vmatprep.subr.bf16.mxu0 0
  %3112 = vmatpush1.bf16.msra.mxu0 0
  %3113 = vmatprep.subr.bf16.mxu0 0
  %3114 = vmatpush1.bf16.msra.mxu0 0
  %3115 = vmatprep.subr.bf16.mxu0 0
  %3116 = vmatpush1.bf16.msra.mxu0 0
  %3117 = vmatprep.subr.bf16.mxu0 0
  %3118 = vmatpush1.bf16.msra.mxu0 0
  %3119 = vmatprep.subr.bf16.mxu0 0
  %3120 = vmatpush1.bf16.msra.mxu0 0
  %3121 = vmatprep.subr.bf16.mxu0 0
  %3122 = vmatpush1.bf16.msra.mxu0 0
  %3123 = vmatprep.subr.bf16.mxu0 0
  %3124 = vmatpush1.bf16.msra.mxu0 0
  %3125 = vmatprep.mubr.bf16.mxu0 0
  %3126 = vmatmul.mubr.bf16.gmra.mrb[0].mxu0 %v3032
  %v3127 = vpop.f32.mrb[0].mxu0
  %v3128 = vadd.f32 0.0, %v3127
  %v3129 = vpop.f32.mrb[0].mxu0
  %v3130 = vadd.f32 0.0, %v3129
  %v3131 = vpop.f32.mrb[0].mxu0
  %v3132 = vpop.f32.mrb[0].mxu0
  %3133 = vdwg.mxu0
  %3134 = vmatprep.subr.bf16.mxu0 %v3050
  %3135 = vmatpush1.bf16.msra.mxu0 %v3047
  %3136 = vmatprep.subr.bf16.mxu0 0
  %3137 = vmatpush1.bf16.msra.mxu0 0
  %3138 = vmatprep.subr.bf16.mxu0 0
  %3139 = vmatpush1.bf16.msra.mxu0 0
  %3140 = vmatprep.subr.bf16.mxu0 0
  %3141 = vmatpush1.bf16.msra.mxu0 0
  %3142 = vmatprep.subr.bf16.mxu0 0
  %3143 = vmatpush1.bf16.msra.mxu0 0
  %3144 = vmatprep.subr.bf16.mxu0 0
  %3145 = vmatpush1.bf16.msra.mxu0 0
  %3146 = vmatprep.subr.bf16.mxu0 0
  %3147 = vmatpush1.bf16.msra.mxu0 0
  %3148 = vmatprep.subr.bf16.mxu0 0
  %3149 = vmatpush1.bf16.msra.mxu0 0
  %3150 = vmatprep.subr.bf16.mxu0 0
  %3151 = vmatpush1.bf16.msra.mxu0 0
  %3152 = vmatprep.subr.bf16.mxu0 0
  %3153 = vmatpush1.bf16.msra.mxu0 0
  %3154 = vmatprep.subr.bf16.mxu0 0
  %3155 = vmatpush1.bf16.msra.mxu0 0
  %3156 = vmatprep.subr.bf16.mxu0 0
  %3157 = vmatpush1.bf16.msra.mxu0 0
  %3158 = vmatprep.subr.bf16.mxu0 0
  %3159 = vmatpush1.bf16.msra.mxu0 0
  %3160 = vmatprep.subr.bf16.mxu0 0
  %3161 = vmatpush1.bf16.msra.mxu0 0
  %3162 = vmatprep.subr.bf16.mxu0 0
  %3163 = vmatpush1.bf16.msra.mxu0 0
  %3164 = vmatprep.subr.bf16.mxu0 0
  %3165 = vmatpush1.bf16.msra.mxu0 0
  %3166 = vmatprep.mubr.bf16.mxu0 0
  %3167 = vmatmul.mubr.bf16.gmra.mrb[0].mxu0 %v3032
  %v3168 = vpop.f32.mrb[0].mxu0
  %v3169 = vadd.f32 0.0, %v3168
  %v3170 = vpop.f32.mrb[0].mxu0
  %v3171 = vadd.f32 0.0, %v3170
  %v3172 = vpop.f32.mrb[0].mxu0
  %v3173 = vpop.f32.mrb[0].mxu0
  %3174 = vdwg.mxu0
  %v3175 = vld [vmem:[#allocation2] sm:$0xff]
  %v3176 = vld [vmem:[#allocation2 + $0x8] sm:$0xff]
  %v3177 = vld [vmem:[#allocation2 + $0x10] sm:$0xff]
  %v3178 = vld [vmem:[#allocation2 + $0x18] sm:$0xff]
  %v3179 = vld [vmem:[#allocation2 + $0x20] sm:$0xff]
  %v3180 = vld [vmem:[#allocation2 + $0x28] sm:$0xff]
  %v3181 = vadd.f32 %v3175, %v3087
  %v3182 = vadd.f32 %v3176, %v3089
  %v3183 = vadd.f32 %v3177, %v3128
  %v3184 = vadd.f32 %v3178, %v3130
  %v3185 = vadd.f32 %v3179, %v3169
  %v3186 = vadd.f32 %v3180, %v3171
  %3187 = vst [vmem:[#allocation2] sm:$0xff] %v3181
  %3188 = vst [vmem:[#allocation2 + $0x8] sm:$0xff] %v3182
  %3189 = vst [vmem:[#allocation2 + $0x10] sm:$0xff] %v3183
  %3190 = vst [vmem:[#allocation2 + $0x18] sm:$0xff] %v3184
  %3191 = vst [vmem:[#allocation2 + $0x20] sm:$0xff] %v3185
  %3192 = vst.msk [vmem:[#allocation2 + $0x28] sm:$0xff] %vm221, %v3186
  %s3193 = scalar_lea.vmem %s3, 60
  %v3194 = vld [vmem:[%s3193] sm:$0xf]
  %3195 = vrot.lane.b32.xlu0 %v2120, 92
  %v3196 = vpop.permute.xlu0 %3195
  %3197 = vrot.lane.b32.xlu0 %v2128, 92
  %v3198 = vpop.permute.xlu0 %3197
  %3199 = vrot.lane.b32.xlu0 %v2127, 92
  %v3200 = vpop.permute.xlu0 %3199
  %3201 = vrot.lane.b32.xlu0 %v2129, 92
  %v3202 = vpop.permute.xlu0 %3201
  %3203 = vrot.lane.b32.xlu0 %v2136, 92
  %v3204 = vpop.permute.xlu0 %3203
  %3205 = vrot.lane.b32.xlu0 %v2137, 92
  %v3206 = vpop.permute.xlu0 %3205
  %v3207 = vsel %vm1147, %v3196, %v3198
  %v3208 = vsel %vm1147, %v3198, %v3200
  %v3209 = vsel %vm1147, %v3200, %v3202
  %v3210 = vsel %vm1147, %v3202, %v3204
  %v3211 = vsel %vm1147, %v3204, %v3206
  %v3213 = vsel %vm70, %v3194, 0
  %v3216 = vsel %vm74, %v3207, 0
  %v3219 = vsel %vm74, %v3208, 0
  %v3222 = vsel %vm74, %v3209, 0
  %v3225 = vsel %vm74, %v3210, 0
  %v3228 = vsel %vm74, %v3211, 0
  %v3231 = vsel %vm74, %v3206, 0
  %3233 = vmatprep.subr.bf16.mxu0 %v3219
  %3234 = vmatpush1.bf16.msra.mxu0 %v3216
  %3235 = vmatprep.subr.bf16.mxu0 0
  %3236 = vmatpush1.bf16.msra.mxu0 0
  %3237 = vmatprep.subr.bf16.mxu0 0
  %3238 = vmatpush1.bf16.msra.mxu0 0
  %3239 = vmatprep.subr.bf16.mxu0 0
  %3240 = vmatpush1.bf16.msra.mxu0 0
  %3241 = vmatprep.subr.bf16.mxu0 0
  %3242 = vmatpush1.bf16.msra.mxu0 0
  %3243 = vmatprep.subr.bf16.mxu0 0
  %3244 = vmatpush1.bf16.msra.mxu0 0
  %3245 = vmatprep.subr.bf16.mxu0 0
  %3246 = vmatpush1.bf16.msra.mxu0 0
  %3247 = vmatprep.subr.bf16.mxu0 0
  %3248 = vmatpush1.bf16.msra.mxu0 0
  %3249 = vmatprep.subr.bf16.mxu0 0
  %3250 = vmatpush1.bf16.msra.mxu0 0
  %3251 = vmatprep.subr.bf16.mxu0 0
  %3252 = vmatpush1.bf16.msra.mxu0 0
  %3253 = vmatprep.subr.bf16.mxu0 0
  %3254 = vmatpush1.bf16.msra.mxu0 0
  %3255 = vmatprep.subr.bf16.mxu0 0
  %3256 = vmatpush1.bf16.msra.mxu0 0
  %3257 = vmatprep.subr.bf16.mxu0 0
  %3258 = vmatpush1.bf16.msra.mxu0 0
  %3259 = vmatprep.subr.bf16.mxu0 0
  %3260 = vmatpush1.bf16.msra.mxu0 0
  %3261 = vmatprep.subr.bf16.mxu0 0
  %3262 = vmatpush1.bf16.msra.mxu0 0
  %3263 = vmatprep.subr.bf16.mxu0 0
  %3264 = vmatpush1.bf16.msra.mxu0 0
  %3265 = vmatprep.mubr.bf16.mxu0 0
  %3266 = vmatmul.mubr.bf16.gmra.mrb[0].mxu0 %v3213
  %v3267 = vpop.f32.mrb[0].mxu0
  %v3268 = vadd.f32 0.0, %v3267
  %v3269 = vpop.f32.mrb[0].mxu0
  %v3270 = vadd.f32 0.0, %v3269
  %v3271 = vpop.f32.mrb[0].mxu0
  %v3272 = vpop.f32.mrb[0].mxu0
  %3273 = vdwg.mxu0
  %3274 = vmatprep.subr.bf16.mxu0 %v3225
  %3275 = vmatpush1.bf16.msra.mxu0 %v3222
  %3276 = vmatprep.subr.bf16.mxu0 0
  %3277 = vmatpush1.bf16.msra.mxu0 0
  %3278 = vmatprep.subr.bf16.mxu0 0
  %3279 = vmatpush1.bf16.msra.mxu0 0
  %3280 = vmatprep.subr.bf16.mxu0 0
  %3281 = vmatpush1.bf16.msra.mxu0 0
  %3282 = vmatprep.subr.bf16.mxu0 0
  %3283 = vmatpush1.bf16.msra.mxu0 0
  %3284 = vmatprep.subr.bf16.mxu0 0
  %3285 = vmatpush1.bf16.msra.mxu0 0
  %3286 = vmatprep.subr.bf16.mxu0 0
  %3287 = vmatpush1.bf16.msra.mxu0 0
  %3288 = vmatprep.subr.bf16.mxu0 0
  %3289 = vmatpush1.bf16.msra.mxu0 0
  %3290 = vmatprep.subr.bf16.mxu0 0
  %3291 = vmatpush1.bf16.msra.mxu0 0
  %3292 = vmatprep.subr.bf16.mxu0 0
  %3293 = vmatpush1.bf16.msra.mxu0 0
  %3294 = vmatprep.subr.bf16.mxu0 0
  %3295 = vmatpush1.bf16.msra.mxu0 0
  %3296 = vmatprep.subr.bf16.mxu0 0
  %3297 = vmatpush1.bf16.msra.mxu0 0
  %3298 = vmatprep.subr.bf16.mxu0 0
  %3299 = vmatpush1.bf16.msra.mxu0 0
  %3300 = vmatprep.subr.bf16.mxu0 0
  %3301 = vmatpush1.bf16.msra.mxu0 0
  %3302 = vmatprep.subr.bf16.mxu0 0
  %3303 = vmatpush1.bf16.msra.mxu0 0
  %3304 = vmatprep.subr.bf16.mxu0 0
  %3305 = vmatpush1.bf16.msra.mxu0 0
  %3306 = vmatprep.mubr.bf16.mxu0 0
  %3307 = vmatmul.mubr.bf16.gmra.mrb[0].mxu0 %v3213
  %v3308 = vpop.f32.mrb[0].mxu0
  %v3309 = vadd.f32 0.0, %v3308
  %v3310 = vpop.f32.mrb[0].mxu0
  %v3311 = vadd.f32 0.0, %v3310
  %v3312 = vpop.f32.mrb[0].mxu0
  %v3313 = vpop.f32.mrb[0].mxu0
  %3314 = vdwg.mxu0
  %3315 = vmatprep.subr.bf16.mxu0 %v3231
  %3316 = vmatpush1.bf16.msra.mxu0 %v3228
  %3317 = vmatprep.subr.bf16.mxu0 0
  %3318 = vmatpush1.bf16.msra.mxu0 0
  %3319 = vmatprep.subr.bf16.mxu0 0
  %3320 = vmatpush1.bf16.msra.mxu0 0
  %3321 = vmatprep.subr.bf16.mxu0 0
  %3322 = vmatpush1.bf16.msra.mxu0 0
  %3323 = vmatprep.subr.bf16.mxu0 0
  %3324 = vmatpush1.bf16.msra.mxu0 0
  %3325 = vmatprep.subr.bf16.mxu0 0
  %3326 = vmatpush1.bf16.msra.mxu0 0
  %3327 = vmatprep.subr.bf16.mxu0 0
  %3328 = vmatpush1.bf16.msra.mxu0 0
  %3329 = vmatprep.subr.bf16.mxu0 0
  %3330 = vmatpush1.bf16.msra.mxu0 0
  %3331 = vmatprep.subr.bf16.mxu0 0
  %3332 = vmatpush1.bf16.msra.mxu0 0
  %3333 = vmatprep.subr.bf16.mxu0 0
  %3334 = vmatpush1.bf16.msra.mxu0 0
  %3335 = vmatprep.subr.bf16.mxu0 0
  %3336 = vmatpush1.bf16.msra.mxu0 0
  %3337 = vmatprep.subr.bf16.mxu0 0
  %3338 = vmatpush1.bf16.msra.mxu0 0
  %3339 = vmatprep.subr.bf16.mxu0 0
  %3340 = vmatpush1.bf16.msra.mxu0 0
  %3341 = vmatprep.subr.bf16.mxu0 0
  %3342 = vmatpush1.bf16.msra.mxu0 0
  %3343 = vmatprep.subr.bf16.mxu0 0
  %3344 = vmatpush1.bf16.msra.mxu0 0
  %3345 = vmatprep.subr.bf16.mxu0 0
  %3346 = vmatpush1.bf16.msra.mxu0 0
  %3347 = vmatprep.mubr.bf16.mxu0 0
  %3348 = vmatmul.mubr.bf16.gmra.mrb[0].mxu0 %v3213
  %v3349 = vpop.f32.mrb[0].mxu0
  %v3350 = vadd.f32 0.0, %v3349
  %v3351 = vpop.f32.mrb[0].mxu0
  %v3352 = vadd.f32 0.0, %v3351
  %v3353 = vpop.f32.mrb[0].mxu0
  %v3354 = vpop.f32.mrb[0].mxu0
  %3355 = vdwg.mxu0
  %v3356 = vld [vmem:[#allocation2] sm:$0xff]
  %v3357 = vld [vmem:[#allocation2 + $0x8] sm:$0xff]
  %v3358 = vld [vmem:[#allocation2 + $0x10] sm:$0xff]
  %v3359 = vld [vmem:[#allocation2 + $0x18] sm:$0xff]
  %v3360 = vld [vmem:[#allocation2 + $0x20] sm:$0xff]
  %v3361 = vld [vmem:[#allocation2 + $0x28] sm:$0xff]
  %v3362 = vadd.f32 %v3356, %v3268
  %v3363 = vadd.f32 %v3357, %v3270
  %v3364 = vadd.f32 %v3358, %v3309
  %v3365 = vadd.f32 %v3359, %v3311
  %v3366 = vadd.f32 %v3360, %v3350
  %v3367 = vadd.f32 %v3361, %v3352
  %3368 = vst [vmem:[#allocation2] sm:$0xff] %v3362
  %3369 = vst [vmem:[#allocation2 + $0x8] sm:$0xff] %v3363
  %3370 = vst [vmem:[#allocation2 + $0x10] sm:$0xff] %v3364
  %3371 = vst [vmem:[#allocation2 + $0x18] sm:$0xff] %v3365
  %3372 = vst [vmem:[#allocation2 + $0x20] sm:$0xff] %v3366
  %3373 = vst.msk [vmem:[#allocation2 + $0x28] sm:$0xff] %vm221, %v3367
  %s3374 = scalar_lea.vmem %s3, 64
  %v3375 = vld [vmem:[%s3374] sm:$0xf]
  %3376 = vrot.lane.b32.xlu0 %v2120, 91
  %v3377 = vpop.permute.xlu0 %3376
  %3378 = vrot.lane.b32.xlu0 %v2128, 91
  %v3379 = vpop.permute.xlu0 %3378
  %3380 = vrot.lane.b32.xlu0 %v2127, 91
  %v3381 = vpop.permute.xlu0 %3380
  %3382 = vrot.lane.b32.xlu0 %v2129, 91
  %v3383 = vpop.permute.xlu0 %3382
  %3384 = vrot.lane.b32.xlu0 %v2136, 91
  %v3385 = vpop.permute.xlu0 %3384
  %3386 = vrot.lane.b32.xlu0 %v2137, 91
  %v3387 = vpop.permute.xlu0 %3386
  %v3388 = vsel %vm1329, %v3377, %v3379
  %v3389 = vsel %vm1329, %v3379, %v3381
  %v3390 = vsel %vm1329, %v3381, %v3383
  %v3391 = vsel %vm1329, %v3383, %v3385
  %v3392 = vsel %vm1329, %v3385, %v3387
  %v3394 = vsel %vm70, %v3375, 0
  %v3397 = vsel %vm74, %v3388, 0
  %v3400 = vsel %vm74, %v3389, 0
  %v3403 = vsel %vm74, %v3390, 0
  %v3406 = vsel %vm74, %v3391, 0
  %v3409 = vsel %vm74, %v3392, 0
  %v3412 = vsel %vm74, %v3387, 0
  %3414 = vmatprep.subr.bf16.mxu0 %v3400
  %3415 = vmatpush1.bf16.msra.mxu0 %v3397
  %3416 = vmatprep.subr.bf16.mxu0 0
  %3417 = vmatpush1.bf16.msra.mxu0 0
  %3418 = vmatprep.subr.bf16.mxu0 0
  %3419 = vmatpush1.bf16.msra.mxu0 0
  %3420 = vmatprep.subr.bf16.mxu0 0
  %3421 = vmatpush1.bf16.msra.mxu0 0
  %3422 = vmatprep.subr.bf16.mxu0 0
  %3423 = vmatpush1.bf16.msra.mxu0 0
  %3424 = vmatprep.subr.bf16.mxu0 0
  %3425 = vmatpush1.bf16.msra.mxu0 0
  %3426 = vmatprep.subr.bf16.mxu0 0
  %3427 = vmatpush1.bf16.msra.mxu0 0
  %3428 = vmatprep.subr.bf16.mxu0 0
  %3429 = vmatpush1.bf16.msra.mxu0 0
  %3430 = vmatprep.subr.bf16.mxu0 0
  %3431 = vmatpush1.bf16.msra.mxu0 0
  %3432 = vmatprep.subr.bf16.mxu0 0
  %3433 = vmatpush1.bf16.msra.mxu0 0
  %3434 = vmatprep.subr.bf16.mxu0 0
  %3435 = vmatpush1.bf16.msra.mxu0 0
  %3436 = vmatprep.subr.bf16.mxu0 0
  %3437 = vmatpush1.bf16.msra.mxu0 0
  %3438 = vmatprep.subr.bf16.mxu0 0
  %3439 = vmatpush1.bf16.msra.mxu0 0
  %3440 = vmatprep.subr.bf16.mxu0 0
  %3441 = vmatpush1.bf16.msra.mxu0 0
  %3442 = vmatprep.subr.bf16.mxu0 0
  %3443 = vmatpush1.bf16.msra.mxu0 0
  %3444 = vmatprep.subr.bf16.mxu0 0
  %3445 = vmatpush1.bf16.msra.mxu0 0
  %3446 = vmatprep.mubr.bf16.mxu0 0
  %3447 = vmatmul.mubr.bf16.gmra.mrb[0].mxu0 %v3394
  %v3448 = vpop.f32.mrb[0].mxu0
  %v3449 = vadd.f32 0.0, %v3448
  %v3450 = vpop.f32.mrb[0].mxu0
  %v3451 = vadd.f32 0.0, %v3450
  %v3452 = vpop.f32.mrb[0].mxu0
  %v3453 = vpop.f32.mrb[0].mxu0
  %3454 = vdwg.mxu0
  %3455 = vmatprep.subr.bf16.mxu0 %v3406
  %3456 = vmatpush1.bf16.msra.mxu0 %v3403
  %3457 = vmatprep.subr.bf16.mxu0 0
  %3458 = vmatpush1.bf16.msra.mxu0 0
  %3459 = vmatprep.subr.bf16.mxu0 0
  %3460 = vmatpush1.bf16.msra.mxu0 0
  %3461 = vmatprep.subr.bf16.mxu0 0
  %3462 = vmatpush1.bf16.msra.mxu0 0
  %3463 = vmatprep.subr.bf16.mxu0 0
  %3464 = vmatpush1.bf16.msra.mxu0 0
  %3465 = vmatprep.subr.bf16.mxu0 0
  %3466 = vmatpush1.bf16.msra.mxu0 0
  %3467 = vmatprep.subr.bf16.mxu0 0
  %3468 = vmatpush1.bf16.msra.mxu0 0
  %3469 = vmatprep.subr.bf16.mxu0 0
  %3470 = vmatpush1.bf16.msra.mxu0 0
  %3471 = vmatprep.subr.bf16.mxu0 0
  %3472 = vmatpush1.bf16.msra.mxu0 0
  %3473 = vmatprep.subr.bf16.mxu0 0
  %3474 = vmatpush1.bf16.msra.mxu0 0
  %3475 = vmatprep.subr.bf16.mxu0 0
  %3476 = vmatpush1.bf16.msra.mxu0 0
  %3477 = vmatprep.subr.bf16.mxu0 0
  %3478 = vmatpush1.bf16.msra.mxu0 0
  %3479 = vmatprep.subr.bf16.mxu0 0
  %3480 = vmatpush1.bf16.msra.mxu0 0
  %3481 = vmatprep.subr.bf16.mxu0 0
  %3482 = vmatpush1.bf16.msra.mxu0 0
  %3483 = vmatprep.subr.bf16.mxu0 0
  %3484 = vmatpush1.bf16.msra.mxu0 0
  %3485 = vmatprep.subr.bf16.mxu0 0
  %3486 = vmatpush1.bf16.msra.mxu0 0
  %3487 = vmatprep.mubr.bf16.mxu0 0
  %3488 = vmatmul.mubr.bf16.gmra.mrb[0].mxu0 %v3394
  %v3489 = vpop.f32.mrb[0].mxu0
  %v3490 = vadd.f32 0.0, %v3489
  %v3491 = vpop.f32.mrb[0].mxu0
  %v3492 = vadd.f32 0.0, %v3491
  %v3493 = vpop.f32.mrb[0].mxu0
  %v3494 = vpop.f32.mrb[0].mxu0
  %3495 = vdwg.mxu0
  %3496 = vmatprep.subr.bf16.mxu0 %v3412
  %3497 = vmatpush1.bf16.msra.mxu0 %v3409
  %3498 = vmatprep.subr.bf16.mxu0 0
  %3499 = vmatpush1.bf16.msra.mxu0 0
  %3500 = vmatprep.subr.bf16.mxu0 0
  %3501 = vmatpush1.bf16.msra.mxu0 0
  %3502 = vmatprep.subr.bf16.mxu0 0
  %3503 = vmatpush1.bf16.msra.mxu0 0
  %3504 = vmatprep.subr.bf16.mxu0 0
  %3505 = vmatpush1.bf16.msra.mxu0 0
  %3506 = vmatprep.subr.bf16.mxu0 0
  %3507 = vmatpush1.bf16.msra.mxu0 0
  %3508 = vmatprep.subr.bf16.mxu0 0
  %3509 = vmatpush1.bf16.msra.mxu0 0
  %3510 = vmatprep.subr.bf16.mxu0 0
  %3511 = vmatpush1.bf16.msra.mxu0 0
  %3512 = vmatprep.subr.bf16.mxu0 0
  %3513 = vmatpush1.bf16.msra.mxu0 0
  %3514 = vmatprep.subr.bf16.mxu0 0
  %3515 = vmatpush1.bf16.msra.mxu0 0
  %3516 = vmatprep.subr.bf16.mxu0 0
  %3517 = vmatpush1.bf16.msra.mxu0 0
  %3518 = vmatprep.subr.bf16.mxu0 0
  %3519 = vmatpush1.bf16.msra.mxu0 0
  %3520 = vmatprep.subr.bf16.mxu0 0
  %3521 = vmatpush1.bf16.msra.mxu0 0
  %3522 = vmatprep.subr.bf16.mxu0 0
  %3523 = vmatpush1.bf16.msra.mxu0 0
  %3524 = vmatprep.subr.bf16.mxu0 0
  %3525 = vmatpush1.bf16.msra.mxu0 0
  %3526 = vmatprep.subr.bf16.mxu0 0
  %3527 = vmatpush1.bf16.msra.mxu0 0
  %3528 = vmatprep.mubr.bf16.mxu0 0
  %3529 = vmatmul.mubr.bf16.gmra.mrb[0].mxu0 %v3394
  %v3530 = vpop.f32.mrb[0].mxu0
  %v3531 = vadd.f32 0.0, %v3530
  %v3532 = vpop.f32.mrb[0].mxu0
  %v3533 = vadd.f32 0.0, %v3532
  %v3534 = vpop.f32.mrb[0].mxu0
  %v3535 = vpop.f32.mrb[0].mxu0
  %3536 = vdwg.mxu0
  %v3537 = vld [vmem:[#allocation2] sm:$0xff]
  %v3538 = vld [vmem:[#allocation2 + $0x8] sm:$0xff]
  %v3539 = vld [vmem:[#allocation2 + $0x10] sm:$0xff]
  %v3540 = vld [vmem:[#allocation2 + $0x18] sm:$0xff]
  %v3541 = vld [vmem:[#allocation2 + $0x20] sm:$0xff]
  %v3542 = vld [vmem:[#allocation2 + $0x28] sm:$0xff]
  %v3543 = vadd.f32 %v3537, %v3449
  %v3544 = vadd.f32 %v3538, %v3451
  %v3545 = vadd.f32 %v3539, %v3490
  %v3546 = vadd.f32 %v3540, %v3492
  %v3547 = vadd.f32 %v3541, %v3531
  %v3548 = vadd.f32 %v3542, %v3533
  %3549 = vst [vmem:[#allocation2] sm:$0xff] %v3543
  %3550 = vst [vmem:[#allocation2 + $0x8] sm:$0xff] %v3544
  %3551 = vst [vmem:[#allocation2 + $0x10] sm:$0xff] %v3545
  %3552 = vst [vmem:[#allocation2 + $0x18] sm:$0xff] %v3546
  %3553 = vst [vmem:[#allocation2 + $0x20] sm:$0xff] %v3547
  %3554 = vst.msk [vmem:[#allocation2 + $0x28] sm:$0xff] %vm221, %v3548
  %s3555 = scalar_lea.vmem %s3, 68
  %v3556 = vld [vmem:[%s3555] sm:$0xf]
  %3557 = vrot.lane.b32.xlu0 %v2120, 90
  %v3558 = vpop.permute.xlu0 %3557
  %3559 = vrot.lane.b32.xlu0 %v2128, 90
  %v3560 = vpop.permute.xlu0 %3559
  %3561 = vrot.lane.b32.xlu0 %v2127, 90
  %v3562 = vpop.permute.xlu0 %3561
  %3563 = vrot.lane.b32.xlu0 %v2129, 90
  %v3564 = vpop.permute.xlu0 %3563
  %3565 = vrot.lane.b32.xlu0 %v2136, 90
  %v3566 = vpop.permute.xlu0 %3565
  %3567 = vrot.lane.b32.xlu0 %v2137, 90
  %v3568 = vpop.permute.xlu0 %3567
  %v3569 = vsel %vm1511, %v3558, %v3560
  %v3570 = vsel %vm1511, %v3560, %v3562
  %v3571 = vsel %vm1511, %v3562, %v3564
  %v3572 = vsel %vm1511, %v3564, %v3566
  %v3573 = vsel %vm1511, %v3566, %v3568
  %v3575 = vsel %vm70, %v3556, 0
  %v3578 = vsel %vm74, %v3569, 0
  %v3581 = vsel %vm74, %v3570, 0
  %v3584 = vsel %vm74, %v3571, 0
  %v3587 = vsel %vm74, %v3572, 0
  %v3590 = vsel %vm74, %v3573, 0
  %v3593 = vsel %vm74, %v3568, 0
  %3595 = vmatprep.subr.bf16.mxu0 %v3581
  %3596 = vmatpush1.bf16.msra.mxu0 %v3578
  %3597 = vmatprep.subr.bf16.mxu0 0
  %3598 = vmatpush1.bf16.msra.mxu0 0
  %3599 = vmatprep.subr.bf16.mxu0 0
  %3600 = vmatpush1.bf16.msra.mxu0 0
  %3601 = vmatprep.subr.bf16.mxu0 0
  %3602 = vmatpush1.bf16.msra.mxu0 0
  %3603 = vmatprep.subr.bf16.mxu0 0
  %3604 = vmatpush1.bf16.msra.mxu0 0
  %3605 = vmatprep.subr.bf16.mxu0 0
  %3606 = vmatpush1.bf16.msra.mxu0 0
  %3607 = vmatprep.subr.bf16.mxu0 0
  %3608 = vmatpush1.bf16.msra.mxu0 0
  %3609 = vmatprep.subr.bf16.mxu0 0
  %3610 = vmatpush1.bf16.msra.mxu0 0
  %3611 = vmatprep.subr.bf16.mxu0 0
  %3612 = vmatpush1.bf16.msra.mxu0 0
  %3613 = vmatprep.subr.bf16.mxu0 0
  %3614 = vmatpush1.bf16.msra.mxu0 0
  %3615 = vmatprep.subr.bf16.mxu0 0
  %3616 = vmatpush1.bf16.msra.mxu0 0
  %3617 = vmatprep.subr.bf16.mxu0 0
  %3618 = vmatpush1.bf16.msra.mxu0 0
  %3619 = vmatprep.subr.bf16.mxu0 0
  %3620 = vmatpush1.bf16.msra.mxu0 0
  %3621 = vmatprep.subr.bf16.mxu0 0
  %3622 = vmatpush1.bf16.msra.mxu0 0
  %3623 = vmatprep.subr.bf16.mxu0 0
  %3624 = vmatpush1.bf16.msra.mxu0 0
  %3625 = vmatprep.subr.bf16.mxu0 0
  %3626 = vmatpush1.bf16.msra.mxu0 0
  %3627 = vmatprep.mubr.bf16.mxu0 0
  %3628 = vmatmul.mubr.bf16.gmra.mrb[0].mxu0 %v3575
  %v3629 = vpop.f32.mrb[0].mxu0
  %v3630 = vadd.f32 0.0, %v3629
  %v3631 = vpop.f32.mrb[0].mxu0
  %v3632 = vadd.f32 0.0, %v3631
  %v3633 = vpop.f32.mrb[0].mxu0
  %v3634 = vpop.f32.mrb[0].mxu0
  %3635 = vdwg.mxu0
  %3636 = vmatprep.subr.bf16.mxu0 %v3587
  %3637 = vmatpush1.bf16.msra.mxu0 %v3584
  %3638 = vmatprep.subr.bf16.mxu0 0
  %3639 = vmatpush1.bf16.msra.mxu0 0
  %3640 = vmatprep.subr.bf16.mxu0 0
  %3641 = vmatpush1.bf16.msra.mxu0 0
  %3642 = vmatprep.subr.bf16.mxu0 0
  %3643 = vmatpush1.bf16.msra.mxu0 0
  %3644 = vmatprep.subr.bf16.mxu0 0
  %3645 = vmatpush1.bf16.msra.mxu0 0
  %3646 = vmatprep.subr.bf16.mxu0 0
  %3647 = vmatpush1.bf16.msra.mxu0 0
  %3648 = vmatprep.subr.bf16.mxu0 0
  %3649 = vmatpush1.bf16.msra.mxu0 0
  %3650 = vmatprep.subr.bf16.mxu0 0
  %3651 = vmatpush1.bf16.msra.mxu0 0
  %3652 = vmatprep.subr.bf16.mxu0 0
  %3653 = vmatpush1.bf16.msra.mxu0 0
  %3654 = vmatprep.subr.bf16.mxu0 0
  %3655 = vmatpush1.bf16.msra.mxu0 0
  %3656 = vmatprep.subr.bf16.mxu0 0
  %3657 = vmatpush1.bf16.msra.mxu0 0
  %3658 = vmatprep.subr.bf16.mxu0 0
  %3659 = vmatpush1.bf16.msra.mxu0 0
  %3660 = vmatprep.subr.bf16.mxu0 0
  %3661 = vmatpush1.bf16.msra.mxu0 0
  %3662 = vmatprep.subr.bf16.mxu0 0
  %3663 = vmatpush1.bf16.msra.mxu0 0
  %3664 = vmatprep.subr.bf16.mxu0 0
  %3665 = vmatpush1.bf16.msra.mxu0 0
  %3666 = vmatprep.subr.bf16.mxu0 0
  %3667 = vmatpush1.bf16.msra.mxu0 0
  %3668 = vmatprep.mubr.bf16.mxu0 0
  %3669 = vmatmul.mubr.bf16.gmra.mrb[0].mxu0 %v3575
  %v3670 = vpop.f32.mrb[0].mxu0
  %v3671 = vadd.f32 0.0, %v3670
  %v3672 = vpop.f32.mrb[0].mxu0
  %v3673 = vadd.f32 0.0, %v3672
  %v3674 = vpop.f32.mrb[0].mxu0
  %v3675 = vpop.f32.mrb[0].mxu0
  %3676 = vdwg.mxu0
  %3677 = vmatprep.subr.bf16.mxu0 %v3593
  %3678 = vmatpush1.bf16.msra.mxu0 %v3590
  %3679 = vmatprep.subr.bf16.mxu0 0
  %3680 = vmatpush1.bf16.msra.mxu0 0
  %3681 = vmatprep.subr.bf16.mxu0 0
  %3682 = vmatpush1.bf16.msra.mxu0 0
  %3683 = vmatprep.subr.bf16.mxu0 0
  %3684 = vmatpush1.bf16.msra.mxu0 0
  %3685 = vmatprep.subr.bf16.mxu0 0
  %3686 = vmatpush1.bf16.msra.mxu0 0
  %3687 = vmatprep.subr.bf16.mxu0 0
  %3688 = vmatpush1.bf16.msra.mxu0 0
  %3689 = vmatprep.subr.bf16.mxu0 0
  %3690 = vmatpush1.bf16.msra.mxu0 0
  %3691 = vmatprep.subr.bf16.mxu0 0
  %3692 = vmatpush1.bf16.msra.mxu0 0
  %3693 = vmatprep.subr.bf16.mxu0 0
  %3694 = vmatpush1.bf16.msra.mxu0 0
  %3695 = vmatprep.subr.bf16.mxu0 0
  %3696 = vmatpush1.bf16.msra.mxu0 0
  %3697 = vmatprep.subr.bf16.mxu0 0
  %3698 = vmatpush1.bf16.msra.mxu0 0
  %3699 = vmatprep.subr.bf16.mxu0 0
  %3700 = vmatpush1.bf16.msra.mxu0 0
  %3701 = vmatprep.subr.bf16.mxu0 0
  %3702 = vmatpush1.bf16.msra.mxu0 0
  %3703 = vmatprep.subr.bf16.mxu0 0
  %3704 = vmatpush1.bf16.msra.mxu0 0
  %3705 = vmatprep.subr.bf16.mxu0 0
  %3706 = vmatpush1.bf16.msra.mxu0 0
  %3707 = vmatprep.subr.bf16.mxu0 0
  %3708 = vmatpush1.bf16.msra.mxu0 0
  %3709 = vmatprep.mubr.bf16.mxu0 0
  %3710 = vmatmul.mubr.bf16.gmra.mrb[0].mxu0 %v3575
  %v3711 = vpop.f32.mrb[0].mxu0
  %v3712 = vadd.f32 0.0, %v3711
  %v3713 = vpop.f32.mrb[0].mxu0
  %v3714 = vadd.f32 0.0, %v3713
  %v3715 = vpop.f32.mrb[0].mxu0
  %v3716 = vpop.f32.mrb[0].mxu0
  %3717 = vdwg.mxu0
  %v3718 = vld [vmem:[#allocation2] sm:$0xff]
  %v3719 = vld [vmem:[#allocation2 + $0x8] sm:$0xff]
  %v3720 = vld [vmem:[#allocation2 + $0x10] sm:$0xff]
  %v3721 = vld [vmem:[#allocation2 + $0x18] sm:$0xff]
  %v3722 = vld [vmem:[#allocation2 + $0x20] sm:$0xff]
  %v3723 = vld [vmem:[#allocation2 + $0x28] sm:$0xff]
  %v3724 = vadd.f32 %v3718, %v3630
  %v3725 = vadd.f32 %v3719, %v3632
  %v3726 = vadd.f32 %v3720, %v3671
  %v3727 = vadd.f32 %v3721, %v3673
  %v3728 = vadd.f32 %v3722, %v3712
  %v3729 = vadd.f32 %v3723, %v3714
  %3730 = vst [vmem:[#allocation2] sm:$0xff] %v3724
  %3731 = vst [vmem:[#allocation2 + $0x8] sm:$0xff] %v3725
  %3732 = vst [vmem:[#allocation2 + $0x10] sm:$0xff] %v3726
  %3733 = vst [vmem:[#allocation2 + $0x18] sm:$0xff] %v3727
  %3734 = vst [vmem:[#allocation2 + $0x20] sm:$0xff] %v3728
  %3735 = vst.msk [vmem:[#allocation2 + $0x28] sm:$0xff] %vm221, %v3729
  %v3736 = vld [vmem:[#allocation2] sm:$0xff]
  %v3737 = vld [vmem:[#allocation2 + $0x8] sm:$0xff]
  %v3738 = vld [vmem:[#allocation2 + $0x10] sm:$0xff]
  %v3739 = vld [vmem:[#allocation2 + $0x18] sm:$0xff]
  %v3740 = vld [vmem:[#allocation2 + $0x20] sm:$0xff]
  %v3741 = vld [vmem:[#allocation2 + $0x28] sm:$0xff]
  %s3742 = scalar_lea.vmem %s4, 8
  %v3743 = vld [vmem:[%s3742] sm:$0xff]
  %3745 = vset.pattern.permute.xlu0 0
  %3746 = vperm.xlu0 %3745, %v3743
  %v3747 = vpop.permute.xlu0 %3746
  %v3749 = vadd.f32 %v3736, %v3747
  %v3750 = vadd.f32 %v3737, %v3747
  %v3751 = vadd.f32 %v3738, %v3747
  %v3752 = vadd.f32 %v3739, %v3747
  %v3753 = vadd.f32 %v3740, %v3747
  %v3754 = vadd.f32 %v3741, %v3747
  %v3755 = vmax.f32 %v3749, 0.0
  %v3756 = vmax.f32 %v3750, 0.0
  %v3757 = vmax.f32 %v3751, 0.0
  %v3758 = vmax.f32 %v3752, 0.0
  %v3759 = vmax.f32 %v3753, 0.0
  %v3760 = vmax.f32 %v3754, 0.0
  %v3761 = vld [vmem:[%s5] sm:$0xff]
  %v3762 = vld [vmem:[%s5 + $0x8] sm:$0xff]
  %v3763 = vld [vmem:[%s5 + $0x10] sm:$0xff]
  %v3764 = vld [vmem:[%s5 + $0x18] sm:$0xff]
  %v3765 = vld [vmem:[%s5 + $0x20] sm:$0xff]
  %v3766 = vld [vmem:[%s5 + $0x28] sm:$0xff]
  %v3767 = vld [vmem:[%s5 + $0x30] sm:$0xff]
  %v3768 = vld [vmem:[%s5 + $0x38] sm:$0xff]
  %v3769 = vld [vmem:[%s5 + $0x40] sm:$0xff]
  %v3770 = vld [vmem:[%s5 + $0x48] sm:$0xff]
  %v3771 = vld [vmem:[%s5 + $0x50] sm:$0xff]
  %v3772 = vld [vmem:[%s5 + $0x58] sm:$0xff]
  %v3773 = vld [vmem:[%s5 + $0x60] sm:$0xff]
  %v3774 = vld [vmem:[%s5 + $0x68] sm:$0xff]
  %v3775 = vld [vmem:[%s5 + $0x70] sm:$0xff]
  %v3776 = vld [vmem:[%s5 + $0x78] sm:$0xff]
  %v3777 = vld [vmem:[%s5 + $0x80] sm:$0xff]
  %v3778 = vld [vmem:[%s5 + $0x88] sm:$0xff]
  %v3779 = vld [vmem:[%s5 + $0x90] sm:$0xff]
  %v3780 = vld [vmem:[%s5 + $0x98] sm:$0xff]
  %v3781 = vld [vmem:[%s5 + $0xa0] sm:$0xff]
  %v3782 = vld [vmem:[%s5 + $0xa8] sm:$0xff]
  %v3783 = vld [vmem:[%s5 + $0xb0] sm:$0xff]
  %v3784 = vld [vmem:[%s5 + $0xb8] sm:$0xff]
  %v3785 = vld [vmem:[%s5 + $0xc0] sm:$0xff]
  %v3786 = vld [vmem:[%s5 + $0xc8] sm:$0xff]
  %v3787 = vld [vmem:[%s5 + $0xd0] sm:$0xff]
  %v3788 = vld [vmem:[%s5 + $0xd8] sm:$0xff]
  %v3789 = vld [vmem:[%s5 + $0xe0] sm:$0xff]
  %v3790 = vld [vmem:[%s5 + $0xe8] sm:$0xff]
  %v3791 = vld [vmem:[%s5 + $0xf0] sm:$0xff]
  %v3792 = vld [vmem:[%s5 + $0xf8] sm:$0xff]
  %v3793 = vld [vmem:[%s5 + $0x100] sm:$0xff]
  %v3794 = vld [vmem:[%s5 + $0x108] sm:$0xff]
  %v3795 = vld [vmem:[%s5 + $0x110] sm:$0xff]
  %v3796 = vld [vmem:[%s5 + $0x118] sm:$0xff]
  %v3797 = vld [vmem:[%s5 + $0x120] sm:$0xff]
  %v3798 = vld [vmem:[%s5 + $0x128] sm:$0xff]
  %v3799 = vld [vmem:[%s5 + $0x130] sm:$0xff]
  %v3800 = vld [vmem:[%s5 + $0x138] sm:$0xff]
  %v3801 = vld [vmem:[%s5 + $0x140] sm:$0xff]
  %v3802 = vld [vmem:[%s5 + $0x148] sm:$0xff]
  %v3803 = vld [vmem:[%s5 + $0x150] sm:$0xff]
  %v3804 = vld [vmem:[%s5 + $0x158] sm:$0xff]
  %v3805 = vld [vmem:[%s5 + $0x160] sm:$0xff]
  %v3806 = vld [vmem:[%s5 + $0x168] sm:$0xff]
  %v3807 = vld [vmem:[%s5 + $0x170] sm:$0xff]
  %v3808 = vld [vmem:[%s5 + $0x178] sm:$0xff]
  %v3809 = vld [vmem:[%s5 + $0x180] sm:$0xff]
  %v3810 = vld [vmem:[%s5 + $0x188] sm:$0xff]
  %v3811 = vld [vmem:[%s5 + $0x190] sm:$0xff]
  %v3812 = vld [vmem:[%s5 + $0x198] sm:$0xff]
  %v3813 = vld [vmem:[%s5 + $0x1a0] sm:$0xff]
  %v3814 = vld [vmem:[%s5 + $0x1a8] sm:$0xff]
  %v3815 = vld [vmem:[%s5 + $0x1b0] sm:$0xff]
  %v3816 = vld [vmem:[%s5 + $0x1b8] sm:$0xff]
  %v3817 = vld [vmem:[%s5 + $0x1c0] sm:$0xff]
  %v3818 = vld [vmem:[%s5 + $0x1c8] sm:$0xff]
  %v3819 = vld [vmem:[%s5 + $0x1d0] sm:$0xff]
  %v3820 = vld [vmem:[%s5 + $0x1d8] sm:$0xff]
  %v3821 = vld [vmem:[%s5 + $0x1e0] sm:$0xff]
  %v3822 = vld [vmem:[%s5 + $0x1e8] sm:$0xff]
  %v3823 = vld [vmem:[%s5 + $0x1f0] sm:$0xff]
  %v3824 = vld [vmem:[%s5 + $0x1f8] sm:$0xff]
  %v3825 = vld [vmem:[%s5 + $0x200] sm:$0xff]
  %v3826 = vld [vmem:[%s5 + $0x208] sm:$0xff]
  %v3827 = vld [vmem:[%s5 + $0x210] sm:$0xff]
  %v3828 = vld [vmem:[%s5 + $0x218] sm:$0xff]
  %v3829 = vld [vmem:[%s5 + $0x220] sm:$0xff]
  %v3830 = vld [vmem:[%s5 + $0x228] sm:$0xff]
  %v3831 = vld [vmem:[%s5 + $0x230] sm:$0xff]
  %v3832 = vld [vmem:[%s5 + $0x238] sm:$0xff]
  %v3833 = vld [vmem:[%s5 + $0x240] sm:$0xff]
  %v3834 = vld [vmem:[%s5 + $0x248] sm:$0xff]
  %v3835 = vld [vmem:[%s5 + $0x250] sm:$0xff]
  %v3836 = vld [vmem:[%s5 + $0x258] sm:$0xff]
  %v3837 = vld [vmem:[%s5 + $0x260] sm:$0xff]
  %v3838 = vld [vmem:[%s5 + $0x268] sm:$0xff]
  %v3839 = vld [vmem:[%s5 + $0x270] sm:$0xff]
  %v3840 = vld [vmem:[%s5 + $0x278] sm:$0xff]
  %v3841 = vld [vmem:[%s5 + $0x280] sm:$0xff]
  %v3843 = vsel %vm221, %v3760, 0
  %3845 = vmatprep.subr.mxu0 0.0
  %3846 = vmatpush1.msra.mxu0 %v3761
  %3847 = vmatprep.subr.mxu0 0.0
  %3848 = vmatpush1.msra.mxu0 %v3762
  %3849 = vmatprep.subr.mxu0 0.0
  %3850 = vmatpush1.msra.mxu0 %v3763
  %3851 = vmatprep.subr.mxu0 0.0
  %3852 = vmatpush1.msra.mxu0 %v3764
  %3853 = vmatprep.subr.mxu0 0.0
  %3854 = vmatpush1.msra.mxu0 %v3765
  %3855 = vmatprep.subr.mxu0 0.0
  %3856 = vmatpush1.msra.mxu0 %v3766
  %3857 = vmatprep.subr.mxu0 0.0
  %3858 = vmatpush1.msra.mxu0 %v3767
  %3859 = vmatprep.subr.mxu0 0.0
  %3860 = vmatpush1.msra.mxu0 %v3768
  %3861 = vmatprep.subr.mxu0 0.0
  %3862 = vmatpush1.msra.mxu0 %v3769
  %3863 = vmatprep.subr.mxu0 0.0
  %3864 = vmatpush1.msra.mxu0 %v3770
  %3865 = vmatprep.subr.mxu0 0.0
  %3866 = vmatpush1.msra.mxu0 %v3771
  %3867 = vmatprep.subr.mxu0 0.0
  %3868 = vmatpush1.msra.mxu0 %v3772
  %3869 = vmatprep.subr.mxu0 0.0
  %3870 = vmatpush1.msra.mxu0 %v3773
  %3871 = vmatprep.subr.mxu0 0.0
  %3872 = vmatpush1.msra.mxu0 %v3774
  %3873 = vmatprep.subr.mxu0 0.0
  %3874 = vmatpush1.msra.mxu0 %v3775
  %3875 = vmatprep.subr.mxu0 0.0
  %3876 = vmatpush1.msra.mxu0 %v3776
  %3877 = vmatprep.subr.mxu0 0.0
  %3878 = vmatpush1.msra.mxu0 %v3777
  %3879 = vmatprep.subr.mxu0 0.0
  %3880 = vmatpush1.msra.mxu0 %v3778
  %3881 = vmatprep.subr.mxu0 0.0
  %3882 = vmatpush1.msra.mxu0 %v3779
  %3883 = vmatprep.subr.mxu0 0.0
  %3884 = vmatpush1.msra.mxu0 %v3780
  %3885 = vmatprep.subr.mxu0 0.0
  %3886 = vmatpush1.msra.mxu0 %v3781
  %3887 = vmatprep.subr.mxu0 0.0
  %3888 = vmatpush1.msra.mxu0 %v3782
  %3889 = vmatprep.subr.mxu0 0.0
  %3890 = vmatpush1.msra.mxu0 %v3783
  %3891 = vmatprep.subr.mxu0 0.0
  %3892 = vmatpush1.msra.mxu0 %v3784
  %3893 = vmatprep.subr.mxu0 0.0
  %3894 = vmatpush1.msra.mxu0 %v3785
  %3895 = vmatprep.subr.mxu0 0.0
  %3896 = vmatpush1.msra.mxu0 %v3786
  %3897 = vmatprep.subr.mxu0 0.0
  %3898 = vmatpush1.msra.mxu0 %v3787
  %3899 = vmatprep.subr.mxu0 0.0
  %3900 = vmatpush1.msra.mxu0 %v3788
  %3901 = vmatprep.subr.mxu0 0.0
  %3902 = vmatpush1.msra.mxu0 %v3789
  %3903 = vmatprep.subr.mxu0 0.0
  %3904 = vmatpush1.msra.mxu0 %v3790
  %3905 = vmatprep.subr.mxu0 0.0
  %3906 = vmatpush1.msra.mxu0 %v3791
  %3907 = vmatprep.subr.mxu0 0.0
  %3908 = vmatpush1.msra.mxu0 %v3792
  %3909 = vmatprep.mubr.f32.mxu0 %v3756
  %3910 = vmatmul.mubr.f32.gmra.mrb[0].mxu0 %v3755
  %v3911 = vpop.f32.mrb[0].mxu0
  %v3912 = vadd.f32 0.0, %v3911
  %v3913 = vpop.f32.mrb[0].mxu0
  %3914 = vdwg.mxu0
  %3915 = vmatprep.subr.mxu0 0.0
  %3916 = vmatpush1.msra.mxu0 %v3793
  %3917 = vmatprep.subr.mxu0 0.0
  %3918 = vmatpush1.msra.mxu0 %v3794
  %3919 = vmatprep.subr.mxu0 0.0
  %3920 = vmatpush1.msra.mxu0 %v3795
  %3921 = vmatprep.subr.mxu0 0.0
  %3922 = vmatpush1.msra.mxu0 %v3796
  %3923 = vmatprep.subr.mxu0 0.0
  %3924 = vmatpush1.msra.mxu0 %v3797
  %3925 = vmatprep.subr.mxu0 0.0
  %3926 = vmatpush1.msra.mxu0 %v3798
  %3927 = vmatprep.subr.mxu0 0.0
  %3928 = vmatpush1.msra.mxu0 %v3799
  %3929 = vmatprep.subr.mxu0 0.0
  %3930 = vmatpush1.msra.mxu0 %v3800
  %3931 = vmatprep.subr.mxu0 0.0
  %3932 = vmatpush1.msra.mxu0 %v3801
  %3933 = vmatprep.subr.mxu0 0.0
  %3934 = vmatpush1.msra.mxu0 %v3802
  %3935 = vmatprep.subr.mxu0 0.0
  %3936 = vmatpush1.msra.mxu0 %v3803
  %3937 = vmatprep.subr.mxu0 0.0
  %3938 = vmatpush1.msra.mxu0 %v3804
  %3939 = vmatprep.subr.mxu0 0.0
  %3940 = vmatpush1.msra.mxu0 %v3805
  %3941 = vmatprep.subr.mxu0 0.0
  %3942 = vmatpush1.msra.mxu0 %v3806
  %3943 = vmatprep.subr.mxu0 0.0
  %3944 = vmatpush1.msra.mxu0 %v3807
  %3945 = vmatprep.subr.mxu0 0.0
  %3946 = vmatpush1.msra.mxu0 %v3808
  %3947 = vmatprep.subr.mxu0 0.0
  %3948 = vmatpush1.msra.mxu0 %v3809
  %3949 = vmatprep.subr.mxu0 0.0
  %3950 = vmatpush1.msra.mxu0 %v3810
  %3951 = vmatprep.subr.mxu0 0.0
  %3952 = vmatpush1.msra.mxu0 %v3811
  %3953 = vmatprep.subr.mxu0 0.0
  %3954 = vmatpush1.msra.mxu0 %v3812
  %3955 = vmatprep.subr.mxu0 0.0
  %3956 = vmatpush1.msra.mxu0 %v3813
  %3957 = vmatprep.subr.mxu0 0.0
  %3958 = vmatpush1.msra.mxu0 %v3814
  %3959 = vmatprep.subr.mxu0 0.0
  %3960 = vmatpush1.msra.mxu0 %v3815
  %3961 = vmatprep.subr.mxu0 0.0
  %3962 = vmatpush1.msra.mxu0 %v3816
  %3963 = vmatprep.subr.mxu0 0.0
  %3964 = vmatpush1.msra.mxu0 %v3817
  %3965 = vmatprep.subr.mxu0 0.0
  %3966 = vmatpush1.msra.mxu0 %v3818
  %3967 = vmatprep.subr.mxu0 0.0
  %3968 = vmatpush1.msra.mxu0 %v3819
  %3969 = vmatprep.subr.mxu0 0.0
  %3970 = vmatpush1.msra.mxu0 %v3820
  %3971 = vmatprep.subr.mxu0 0.0
  %3972 = vmatpush1.msra.mxu0 %v3821
  %3973 = vmatprep.subr.mxu0 0.0
  %3974 = vmatpush1.msra.mxu0 %v3822
  %3975 = vmatprep.subr.mxu0 0.0
  %3976 = vmatpush1.msra.mxu0 %v3823
  %3977 = vmatprep.subr.mxu0 0.0
  %3978 = vmatpush1.msra.mxu0 %v3824
  %3979 = vmatprep.mubr.f32.mxu0 %v3758
  %3980 = vmatmul.mubr.f32.gmra.mrb[0].mxu0 %v3757
  %v3981 = vpop.f32.mrb[0].mxu0
  %v3982 = vadd.f32 %v3912, %v3981
  %v3983 = vpop.f32.mrb[0].mxu0
  %3984 = vdwg.mxu0
  %3985 = vmatprep.subr.mxu0 0.0
  %3986 = vmatpush1.msra.mxu0 %v3825
  %3987 = vmatprep.subr.mxu0 0.0
  %3988 = vmatpush1.msra.mxu0 %v3826
  %3989 = vmatprep.subr.mxu0 0.0
  %3990 = vmatpush1.msra.mxu0 %v3827
  %3991 = vmatprep.subr.mxu0 0.0
  %3992 = vmatpush1.msra.mxu0 %v3828
  %3993 = vmatprep.subr.mxu0 0.0
  %3994 = vmatpush1.msra.mxu0 %v3829
  %3995 = vmatprep.subr.mxu0 0.0
  %3996 = vmatpush1.msra.mxu0 %v3830
  %3997 = vmatprep.subr.mxu0 0.0
  %3998 = vmatpush1.msra.mxu0 %v3831
  %3999 = vmatprep.subr.mxu0 0.0
  %4000 = vmatpush1.msra.mxu0 %v3832
  %4001 = vmatprep.subr.mxu0 0.0
  %4002 = vmatpush1.msra.mxu0 %v3833
  %4003 = vmatprep.subr.mxu0 0.0
  %4004 = vmatpush1.msra.mxu0 %v3834
  %4005 = vmatprep.subr.mxu0 0.0
  %4006 = vmatpush1.msra.mxu0 %v3835
  %4007 = vmatprep.subr.mxu0 0.0
  %4008 = vmatpush1.msra.mxu0 %v3836
  %4009 = vmatprep.subr.mxu0 0.0
  %4010 = vmatpush1.msra.mxu0 %v3837
  %4011 = vmatprep.subr.mxu0 0.0
  %4012 = vmatpush1.msra.mxu0 %v3838
  %4013 = vmatprep.subr.mxu0 0.0
  %4014 = vmatpush1.msra.mxu0 %v3839
  %4015 = vmatprep.subr.mxu0 0.0
  %4016 = vmatpush1.msra.mxu0 %v3840
  %4017 = vmatprep.subr.mxu0 0.0
  %4018 = vmatpush1.msra.mxu0 %v3841
  %4019 = vmatprep.subr.mxu0 0.0
  %4020 = vmatpush1.msra.mxu0 0.0
  %4021 = vmatprep.subr.mxu0 0.0
  %4022 = vmatpush1.msra.mxu0 0.0
  %4023 = vmatprep.subr.mxu0 0.0
  %4024 = vmatpush1.msra.mxu0 0.0
  %4025 = vmatprep.subr.mxu0 0.0
  %4026 = vmatpush1.msra.mxu0 0.0
  %4027 = vmatprep.subr.mxu0 0.0
  %4028 = vmatpush1.msra.mxu0 0.0
  %4029 = vmatprep.subr.mxu0 0.0
  %4030 = vmatpush1.msra.mxu0 0.0
  %4031 = vmatprep.subr.mxu0 0.0
  %4032 = vmatpush1.msra.mxu0 0.0
  %4033 = vmatprep.subr.mxu0 0.0
  %4034 = vmatpush1.msra.mxu0 0.0
  %4035 = vmatprep.subr.mxu0 0.0
  %4036 = vmatpush1.msra.mxu0 0.0
  %4037 = vmatprep.subr.mxu0 0.0
  %4038 = vmatpush1.msra.mxu0 0.0
  %4039 = vmatprep.subr.mxu0 0.0
  %4040 = vmatpush1.msra.mxu0 0.0
  %4041 = vmatprep.subr.mxu0 0.0
  %4042 = vmatpush1.msra.mxu0 0.0
  %4043 = vmatprep.subr.mxu0 0.0
  %4044 = vmatpush1.msra.mxu0 0.0
  %4045 = vmatprep.subr.mxu0 0.0
  %4046 = vmatpush1.msra.mxu0 0.0
  %4047 = vmatprep.subr.mxu0 0.0
  %4048 = vmatpush1.msra.mxu0 0.0
  %4049 = vmatprep.mubr.f32.mxu0 %v3843
  %4050 = vmatmul.mubr.f32.gmra.mrb[0].mxu0 %v3759
  %v4051 = vpop.f32.mrb[0].mxu0
  %v4052 = vadd.f32 %v3982, %v4051
  %v4053 = vpop.f32.mrb[0].mxu0
  %4054 = vdwg.mxu0
  %s4055 = scalar_lea.vmem %s6, 16
  %v4056 = vld [vmem:[%s4055] sm:$0xf]
  %v4057 = vld [vmem:[%s4055 + $0x4] sm:$0xf]
  %v4058 = vld [vmem:[%s4055 + $0x8] sm:$0xf]
  %v4059 = vld [vmem:[%s4055 + $0xc] sm:$0xf]
  %v4060 = vpack.c.bf16 %v4052, %v4052
  %s4061 = scalar_lea.vmem %s7, 32
  %v4062 = vld [vmem:[%s4061] sm:$0xff]
  %v4063 = vld [vmem:[%s4061 + $0x8] sm:$0xff]
  %v4064 = vld [vmem:[%s4061 + $0x10] sm:$0xff]
  %v4065 = vld [vmem:[%s4061 + $0x18] sm:$0xff]
  %4067 = vset.pattern.permute.xlu0 0
  %4068 = vperm.xlu0 %4067, %v4062
  %v4069 = vpop.permute.xlu0 %4068
  %4072 = vset.pattern.permute.xlu0 0
  %4073 = vperm.xlu0 %4072, %v4063
  %v4074 = vpop.permute.xlu0 %4073
  %4077 = vset.pattern.permute.xlu0 0
  %4078 = vperm.xlu0 %4077, %v4064
  %v4079 = vpop.permute.xlu0 %4078
  %4082 = vset.pattern.permute.xlu0 0
  %4083 = vperm.xlu0 %4082, %v4065
  %v4084 = vpop.permute.xlu0 %4083
  %v4090 = vunpack.c.l.b16 %v4056
  %v4091 = vunpack.c.l.b16 %v4057
  %v4092 = vunpack.c.l.b16 %v4058
  %v4093 = vunpack.c.l.b16 %v4059
  %v4094 = vpack.c.b16 %v4091, %v4090
  %v4095 = vpack.c.b16 %v4093, %v4092
  %v4097 = vsel %vm221, %v4094, 0
  %v4100 = vsel %vm221, %v4095, 0
  %v4103 = vsel %vm2042, %v4060, 0
  %4105 = vmatprep.subr.bf16.mxu0 0
  %4106 = vmatpush1.bf16.msra.mxu0 %v4103
  %4107 = vmatprep.subr.bf16.mxu0 0
  %4108 = vmatpush1.bf16.msra.mxu0 0
  %4109 = vmatprep.subr.bf16.mxu0 0
  %4110 = vmatpush1.bf16.msra.mxu0 0
  %4111 = vmatprep.subr.bf16.mxu0 0
  %4112 = vmatpush1.bf16.msra.mxu0 0
  %4113 = vmatprep.subr.bf16.mxu0 0
  %4114 = vmatpush1.bf16.msra.mxu0 0
  %4115 = vmatprep.subr.bf16.mxu0 0
  %4116 = vmatpush1.bf16.msra.mxu0 0
  %4117 = vmatprep.subr.bf16.mxu0 0
  %4118 = vmatpush1.bf16.msra.mxu0 0
  %4119 = vmatprep.subr.bf16.mxu0 0
  %4120 = vmatpush1.bf16.msra.mxu0 0
  %4121 = vmatprep.subr.bf16.mxu0 0
  %4122 = vmatpush1.bf16.msra.mxu0 0
  %4123 = vmatprep.subr.bf16.mxu0 0
  %4124 = vmatpush1.bf16.msra.mxu0 0
  %4125 = vmatprep.subr.bf16.mxu0 0
  %4126 = vmatpush1.bf16.msra.mxu0 0
  %4127 = vmatprep.subr.bf16.mxu0 0
  %4128 = vmatpush1.bf16.msra.mxu0 0
  %4129 = vmatprep.subr.bf16.mxu0 0
  %4130 = vmatpush1.bf16.msra.mxu0 0
  %4131 = vmatprep.subr.bf16.mxu0 0
  %4132 = vmatpush1.bf16.msra.mxu0 0
  %4133 = vmatprep.subr.bf16.mxu0 0
  %4134 = vmatpush1.bf16.msra.mxu0 0
  %4135 = vmatprep.subr.bf16.mxu0 0
  %4136 = vmatpush1.bf16.msra.mxu0 0
  %4137 = vmatprep.mubr.bf16.mxu0 0
  %4138 = vmatmul.mubr.bf16.gmra.mrb[0].mxu0 %v4097
  %v4139 = vpop.f32.mrb[0].mxu0
  %v4140 = vadd.f32 %v4069, %v4139
  %v4141 = vpop.f32.mrb[0].mxu0
  %v4142 = vpop.f32.mrb[0].mxu0
  %v4143 = vadd.f32 %v4074, %v4142
  %v4144 = vpop.f32.mrb[0].mxu0
  %4145 = vmatprep.mubr.bf16.mxu0 0
  %4146 = vmatmul.mubr.bf16.gmra.mrb[0].mxu0 %v4100
  %v4147 = vpop.f32.mrb[0].mxu0
  %v4148 = vadd.f32 %v4079, %v4147
  %v4149 = vpop.f32.mrb[0].mxu0
  %v4150 = vpop.f32.mrb[0].mxu0
  %v4151 = vadd.f32 %v4084, %v4150
  %v4152 = vpop.f32.mrb[0].mxu0
  %4153 = vdwg.mxu0
  %v4154 = vmax.f32 %v4140, 0.0
  %v4155 = vmax.f32 %v4143, 0.0
  %v4156 = vmax.f32 %v4148, 0.0
  %v4157 = vmax.f32 %v4151, 0.0
  %v4158 = vlaneseq
  %v4159 = vshrl.u32 %v4158, 7
  %v4160 = vsub.s32 1, %v4159
  %v4161 = vrot.slane %v39, %v4160
  %v4162 = vmul.f32 %v4154, %v4161
  %v4163 = vmul.f32 %v4155, %v4161
  %v4164 = vmul.f32 %v4156, %v4161
  %v4165 = vmul.f32 %v4157, %v4161
  %v4166 = vld [vmem:[%s8] sm:$0x3]
  %v4167 = vpack.c.bf16 %v2104, %v2103
  %v4168 = vpack.c.bf16 %v2106, %v2105
  %v4169 = vld [vmem:[%s9] sm:$0x3]
  %v4170 = vpack.c.bf16 %v4163, %v4162
  %v4171 = vpack.c.bf16 %v4165, %v4164
  %vm4172 = vcmask 261120
  %v4174 = vsel %vm4172, %v4169, 0
  %4176 = vmatprep.subr.bf16.mxu0 0
  %4177 = vmatpush1.bf16.msra.mxu0 %v4170
  %4178 = vmatprep.subr.bf16.mxu0 0
  %4179 = vmatpush1.bf16.msra.mxu0 %v4171
  %4180 = vmatprep.subr.bf16.mxu0 0
  %4181 = vmatpush1.bf16.msra.mxu0 0
  %4182 = vmatprep.subr.bf16.mxu0 0
  %4183 = vmatpush1.bf16.msra.mxu0 0
  %4184 = vmatprep.subr.bf16.mxu0 0
  %4185 = vmatpush1.bf16.msra.mxu0 0
  %4186 = vmatprep.subr.bf16.mxu0 0
  %4187 = vmatpush1.bf16.msra.mxu0 0
  %4188 = vmatprep.subr.bf16.mxu0 0
  %4189 = vmatpush1.bf16.msra.mxu0 0
  %4190 = vmatprep.subr.bf16.mxu0 0
  %4191 = vmatpush1.bf16.msra.mxu0 0
  %4192 = vmatprep.subr.bf16.mxu0 0
  %4193 = vmatpush1.bf16.msra.mxu0 0
  %4194 = vmatprep.subr.bf16.mxu0 0
  %4195 = vmatpush1.bf16.msra.mxu0 0
  %4196 = vmatprep.subr.bf16.mxu0 0
  %4197 = vmatpush1.bf16.msra.mxu0 0
  %4198 = vmatprep.subr.bf16.mxu0 0
  %4199 = vmatpush1.bf16.msra.mxu0 0
  %4200 = vmatprep.subr.bf16.mxu0 0
  %4201 = vmatpush1.bf16.msra.mxu0 0
  %4202 = vmatprep.subr.bf16.mxu0 0
  %4203 = vmatpush1.bf16.msra.mxu0 0
  %4204 = vmatprep.subr.bf16.mxu0 0
  %4205 = vmatpush1.bf16.msra.mxu0 0
  %4206 = vmatprep.subr.bf16.mxu0 0
  %4207 = vmatpush1.bf16.msra.mxu0 0
  %4208 = vmatprep.mubr.bf16.mxu0 0
  %4209 = vmatmul.mubr.bf16.gmra.mrb[0].mxu0 %v4174
  %v4210 = vpop.f32.mrb[0].mxu0
  %v4211 = vadd.f32 0.0, %v4210
  %v4212 = vpop.f32.mrb[0].mxu0
  %v4213 = vpop.f32.mrb[0].mxu0
  %v4214 = vpop.f32.mrb[0].mxu0
  %4215 = vdwg.mxu0
  %v4217 = vsel %vm4172, %v4166, 0
  %4219 = vmatprep.subr.bf16.mxu0 0
  %4220 = vmatpush1.bf16.msra.mxu0 %v4167
  %4221 = vmatprep.subr.bf16.mxu0 0
  %4222 = vmatpush1.bf16.msra.mxu0 %v4168
  %4223 = vmatprep.subr.bf16.mxu0 0
  %4224 = vmatpush1.bf16.msra.mxu0 0
  %4225 = vmatprep.subr.bf16.mxu0 0
  %4226 = vmatpush1.bf16.msra.mxu0 0
  %4227 = vmatprep.subr.bf16.mxu0 0
  %4228 = vmatpush1.bf16.msra.mxu0 0
  %4229 = vmatprep.subr.bf16.mxu0 0
  %4230 = vmatpush1.bf16.msra.mxu0 0
  %4231 = vmatprep.subr.bf16.mxu0 0
  %4232 = vmatpush1.bf16.msra.mxu0 0
  %4233 = vmatprep.subr.bf16.mxu0 0
  %4234 = vmatpush1.bf16.msra.mxu0 0
  %4235 = vmatprep.subr.bf16.mxu0 0
  %4236 = vmatpush1.bf16.msra.mxu0 0
  %4237 = vmatprep.subr.bf16.mxu0 0
  %4238 = vmatpush1.bf16.msra.mxu0 0
  %4239 = vmatprep.subr.bf16.mxu0 0
  %4240 = vmatpush1.bf16.msra.mxu0 0
  %4241 = vmatprep.subr.bf16.mxu0 0
  %4242 = vmatpush1.bf16.msra.mxu0 0
  %4243 = vmatprep.subr.bf16.mxu0 0
  %4244 = vmatpush1.bf16.msra.mxu0 0
  %4245 = vmatprep.subr.bf16.mxu0 0
  %4246 = vmatpush1.bf16.msra.mxu0 0
  %4247 = vmatprep.subr.bf16.mxu0 0
  %4248 = vmatpush1.bf16.msra.mxu0 0
  %4249 = vmatprep.subr.bf16.mxu0 0
  %4250 = vmatpush1.bf16.msra.mxu0 0
  %4251 = vmatprep.mubr.bf16.mxu0 0
  %4252 = vmatmul.mubr.bf16.gmra.mrb[0].mxu0 %v4217
  %v4253 = vpop.f32.mrb[0].mxu0
  %v4254 = vadd.f32 %v4211, %v4253
  %v4255 = vpop.f32.mrb[0].mxu0
  %v4256 = vpop.f32.mrb[0].mxu0
  %v4257 = vpop.f32.mrb[0].mxu0
  %4258 = vdwg.mxu0
  %v4259 = vld [vmem:[%s10] sm:$0x7]
  %4261 = vset.pattern.permute.xlu0 0
  %4262 = vperm.xlu0 %4261, %v4259
  %v4263 = vpop.permute.xlu0 %4262
  %v4265 = vadd.f32 %v4254, %v4263
  %vm4266 = vcmask 10240
  %4267 = vst.msk [vmem:[%s11] sm:$0x7] %vm4266, %v4265
  // Predicated region
  $region46: #{_lambda_.1} parent=0 // pred_check
    _
  $region47: #{_lambda_.1} parent=0 // pred_check_branch
    %4269 = sbr.rel (0) target = $region49
  $region48: #{_lambda_.1} parent=0 // pred_region
    _
  $region49: #{_lambda_.1} parent=0 // pred_fallthru
    _
  // Predicated region
  $region50: #{_lambda_.1} parent=0 // pred_check
    _
  $region51: #{_lambda_.1} parent=0 // pred_check_branch
    %4271 = sbr.rel (0) target = $region53
  $region52: #{_lambda_.1} parent=0 // pred_region
    _
  $region53: #{_lambda_.1} parent=0 // pred_fallthru
    _

</llo_original>
